<compile_context>
chip_gen: v7x
topology: tpu7x:2x2x1
jax: 0.10.0
libtpu: 0.0.40
codegen_flags: <defaults>
</compile_context>

<pallas_src>
import jax
import jax.numpy as jnp
from jax import lax
from jax.experimental import pallas as pl
from jax.experimental.pallas import tpu as pltpu


# ----------------------------- Pallas kernel --------------------------------

def bottleneck_kernel(x_ref, top_ref, bot_ref,
                      w1_ref, bv_ref, w2_ref, w3_ref, b3_ref,
                      o_ref, v_ref):
    """One (image, row-strip) step of the fused pre-act bottleneck.

    x_ref   : (1, TH, W, CP_in)    bf16  input strip (channels zero-padded)
    top_ref : (1, 1,  W, CP_in)    bf16  row above the strip (zeros at image top)
    bot_ref : (1, 1,  W, CP_in)    bf16  row below the strip (zeros at bottom)
    w1_ref  : (CP_in, CP_mid)      bf16  BN1+BN2-scale folded 1x1 conv weight
    bv_ref  : (1, CP_mid)          f32   BN2-path constant (added pre-padding)
    w2_ref  : (9, CP_mid, CP_mid)  bf16  3x3 conv weight, one tap per slice
    w3_ref  : (CP_mid, CP_in)      bf16  BN3-folded 1x1 conv weight
    b3_ref  : (1, CP_in)           f32   folded conv3 bias (incl. conv2 bias)
    o_ref   : (1, TH, W, CP_in)    f32   output strip (identity + bottleneck)
    v_ref   : (TH+2, W+16, CP_mid) bf16  scratch: zero-framed conv2 input
    """
    _, TH, W, CP_in = x_ref.shape
    THE, _, CP_mid = v_ref.shape

    r = pl.program_id(1)
    nr = pl.num_programs(1)

    # Zero the left/right column frame once per image (scratch persists across
    # grid steps; only columns 7 and W+8 are ever read as padding).  Rows axis
    # is "arbitrary", so every core hits r == 0 for each image it processes.
    @pl.when(r == 0)
    def _():
        v_ref[:, pl.ds(0, 8), :] = jnp.zeros((THE, 8, CP_mid), jnp.bfloat16)
        v_ref[:, pl.ds(W + 8, 8), :] = jnp.zeros((THE, 8, CP_mid), jnp.bfloat16)

    # ---- stage 1: v = BN2(conv1(BN1(x))) written straight into the scratch ----
    bv = bv_ref[...]                                   # (1, CP_mid) f32
    top_ok = (r > 0).astype(jnp.float32)               # halo row inside image?
    bot_ok = (r + 1 < nr).astype(jnp.float32)

    w1 = w1_ref[...]

    v_top = (jnp.dot(top_ref[0, 0], w1, preferred_element_type=jnp.float32)
             + bv) * top_ok
    v_ref[0, pl.ds(8, W), :] = v_top.astype(jnp.bfloat16)

    x_strip = x_ref[0]                                 # (TH, W, CP_in) bf16
    x_flat = x_strip.reshape(TH * W, CP_in)
    v_mid = jnp.dot(x_flat, w1, preferred_element_type=jnp.float32) + bv
    v_ref[pl.ds(1, TH), pl.ds(8, W), :] = (
        v_mid.reshape(TH, W, CP_mid).astype(jnp.bfloat16))

    v_bot = (jnp.dot(bot_ref[0, 0], w1, preferred_element_type=jnp.float32)
             + bv) * bot_ok
    v_ref[TH + 1, pl.ds(8, W), :] = v_bot.astype(jnp.bfloat16)

    # ---- stage 2: 3x3 conv (stride 1, pad 1) as 9 accumulating matmuls --------
    # (dx = 0 / 2 windows are sublane-misaligned by one column; that XLU work
    #  hides under the MXU and avoids materializing an im2col buffer.)
    acc = None
    for dy in range(3):
        for dx in range(3):
            win = v_ref[pl.ds(dy, TH), pl.ds(7 + dx, W), :]        # (TH, W, CP_mid)
            contrib = jnp.dot(win.reshape(TH * W, CP_mid),
                              w2_ref[dy * 3 + dx],
                              preferred_element_type=jnp.float32)
            acc = contrib if acc is None else acc + contrib

    # ---- stage 3: 1x1 conv (BN3 folded) + residual add -------------------------
    t3 = jnp.dot(acc.astype(jnp.bfloat16), w3_ref[...],
                 preferred_element_type=jnp.float32) + b3_ref[...]
    out = x_flat.astype(jnp.float32) + t3
    o_ref[0] = out.reshape(TH, W, CP_in)


# ------------------------- BN folding / channel padding ----------------------

def _round_up(x, m):
    return (x + m - 1) // m * m


def _fold_and_pad_params(p, CP_in, CP_mid):
    s1, b1 = p["s1"][0], p["b1"][0]
    s2, b2 = p["s2"][0], p["b2"][0]
    s3, b3 = p["s3"][0], p["b3"][0]
    w1, c1b = p["w1"], p["c1b"][0]
    w2, c2b = p["w2"], p["c2b"][0]
    w3, c3b = p["w3"], p["c3b"][0]
    Cin, P = w1.shape
    Cout = w3.shape[1]

    # conv2 input v = BN2(conv1(BN1(x))): fold BN1 and the BN2 scale into the
    # 1x1 weight, keep the BN2-path constant as a per-channel bias added BEFORE
    # the zero padding, so conv2's padding semantics stay exact.
    w1v = (s1[:, None] * w1) * s2[None, :]          # (Cin, P)
    bv = s2 * (b1 @ w1 + c1b) + b2                  # (P,)

    # BN3 + the conv2 bias fold into conv3.
    w3f = s3[:, None] * w3                          # (P, Cout)
    b3f = (s3 * c2b + b3) @ w3 + c3b                # (Cout,)

    w1p = (jnp.zeros((CP_in, CP_mid), jnp.float32)
           .at[:Cin, :P].set(w1v).astype(jnp.bfloat16))
    bvp = jnp.zeros((1, CP_mid), jnp.float32).at[0, :P].set(bv)
    w2p = (jnp.zeros((3, 3, CP_mid, CP_mid), jnp.float32)
           .at[:, :, :P, :P].set(w2)
           .reshape(9, CP_mid, CP_mid).astype(jnp.bfloat16))
    w3p = (jnp.zeros((CP_mid, CP_in), jnp.float32)
           .at[:P, :Cout].set(w3f).astype(jnp.bfloat16))
    b3p = jnp.zeros((1, CP_in), jnp.float32).at[0, :Cout].set(b3f)
    return w1p, bvp, w2p, w3p, b3p


# --------------------------------- wrapper -----------------------------------

def bottleneck_r(x_nchw, params, *, strip_rows=None):
    """Fused BottleneckR forward.  Accepts / returns NCHW like the PyTorch module."""
    x = jnp.transpose(x_nchw, (0, 2, 3, 1)).astype(jnp.bfloat16)   # NCHW -> NHWC
    N, H, W, Cin = x.shape
    P = params["w1"].shape[1]
    Cout = params["w3"].shape[1]
    assert Cin == Cout, "residual add requires in_planes == planes * expansion"
    assert W % 8 == 0, "W must be a multiple of 8 (sublane tiling)"

    # Row-strip height: default to the smallest divisor of H with TH*W >= 256
    # (fills the 256-wide MXU on v6e/v7x), else whole-image strips.
    if strip_rows is None:
        TH = H
        for cand in range(1, H + 1):
            if H % cand == 0 and cand * W >= 256:
                TH = cand
                break
    else:
        TH = strip_rows
    assert H % TH == 0, "H must be divisible by the row-strip height"
    NR = H // TH

    CP_in = _round_up(Cin, 128)     # conv1 input / conv3 output / residual lanes
    CP_mid = _round_up(P, 128)      # bottleneck lanes

    w1p, bvp, w2p, w3p, b3p = _fold_and_pad_params(params, CP_in, CP_mid)

    # Channel-padded bf16 activations plus per-strip halo rows (zeros at the
    # image top/bottom so the 3x3-conv zero padding comes out exactly right).
    xp = jnp.pad(x, ((0, 0), (0, 0), (0, 0), (0, CP_in - Cin)))
    top = jnp.pad(xp, ((0, 0), (1, 0), (0, 0), (0, 0)))[:, ::TH][:, :NR]
    bot = jnp.pad(xp, ((0, 0), (0, 1), (0, 0), (0, 0)))[:, TH::TH]

    flops = (2 * N * (H + 2 * NR) * W * CP_in * CP_mid     # conv1 (+ halo rows)
             + 2 * N * H * W * 9 * CP_mid * CP_mid         # conv2 (9 taps)
             + 2 * N * H * W * CP_mid * CP_in)             # conv3
    bytes_accessed = ((xp.size + top.size + bot.size) * 2  # bf16 activations
                      + N * H * W * CP_in * 4              # f32 output
                      + (w1p.size + w2p.size + w3p.size) * 2
                      + (bvp.size + b3p.size) * 4)

    out = pl.pallas_call(
        bottleneck_kernel,
        out_shape=jax.ShapeDtypeStruct((N, H, W, CP_in), jnp.float32),
        grid_spec=pltpu.PrefetchScalarGridSpec(
            num_scalar_prefetch=0,
            grid=(N, NR),
            in_specs=[
                pl.BlockSpec((1, TH, W, CP_in), lambda n, r: (n, r, 0, 0)),  # x strip
                pl.BlockSpec((1, 1, W, CP_in), lambda n, r: (n, r, 0, 0)),   # top halo
                pl.BlockSpec((1, 1, W, CP_in), lambda n, r: (n, r, 0, 0)),   # bottom halo
                pl.BlockSpec((CP_in, CP_mid), lambda n, r: (0, 0)),          # w1 (folded)
                pl.BlockSpec((1, CP_mid), lambda n, r: (0, 0)),              # bv constant
                pl.BlockSpec((9, CP_mid, CP_mid), lambda n, r: (0, 0, 0)),   # w2 taps
                pl.BlockSpec((CP_mid, CP_in), lambda n, r: (0, 0)),          # w3 (folded)
                pl.BlockSpec((1, CP_in), lambda n, r: (0, 0)),               # conv3 bias
            ],
            out_specs=pl.BlockSpec((1, TH, W, CP_in), lambda n, r: (n, r, 0, 0)),
            scratch_shapes=[pltpu.VMEM((TH + 2, W + 16, CP_mid), jnp.bfloat16)],
        ),
        compiler_params=pltpu.CompilerParams(
            dimension_semantics=("parallel", "arbitrary"),
            vmem_limit_bytes=32 * 1024 * 1024),
        cost_estimate=pl.CostEstimate(flops=flops, transcendentals=0,
                                      bytes_accessed=bytes_accessed),
    )(xp, top, bot, w1p, bvp, w2p, w3p, b3p)

    out = out[..., :Cout]                                    # drop channel padding
    return jnp.transpose(out, (0, 3, 1, 2))                  # NHWC -> NCHW


# ----------------------------- parameter setup -------------------------------

def fold_bn(gamma, beta, mean, var, eps=1e-5):
    scale = gamma / jnp.sqrt(var + eps)
    bias = beta - mean * scale
    return scale[None, :], bias[None, :]                     # (1, C)


def make_params(key, in_planes, planes):
    expansion = 4
    out_planes = planes * expansion
    ks = jax.random.split(key, 16)

    def bn(k, c):
        k1, k2, k3, k4 = jax.random.split(k, 4)
        gamma = 1.0 + 0.1 * jax.random.normal(k1, (c,), jnp.float32)
        beta = 0.1 * jax.random.normal(k2, (c,), jnp.float32)
        mean = 0.1 * jax.random.normal(k3, (c,), jnp.float32)
        var = jnp.abs(1.0 + 0.1 * jax.random.normal(k4, (c,), jnp.float32))
        return fold_bn(gamma, beta, mean, var)

    s1, b1 = bn(ks[0], in_planes)
    s2, b2 = bn(ks[1], planes)
    s3, b3 = bn(ks[2], planes)          # see TODO(synk) about bn3 size

    # conv weights stored matmul-friendly: 1x1 as (Cin, Cout); 3x3 as (kh, kw, Cin, Cout)
    w1 = 0.2 * jax.random.normal(ks[3], (in_planes, planes), jnp.float32)
    c1b = 0.05 * jax.random.normal(ks[4], (1, planes), jnp.float32)
    w2 = 0.2 * jax.random.normal(ks[5], (3, 3, planes, planes), jnp.float32)
    c2b = 0.05 * jax.random.normal(ks[6], (1, planes), jnp.float32)
    w3 = 0.2 * jax.random.normal(ks[7], (planes, out_planes), jnp.float32)
    c3b = 0.05 * jax.random.normal(ks[8], (1, out_planes), jnp.float32)

    return dict(s1=s1, b1=b1, w1=w1, c1b=c1b,
                s2=s2, b2=b2, w2=w2, c2b=c2b,
                s3=s3, b3=b3, w3=w3, c3b=c3b)


# ------------------------------ JAX reference --------------------------------

def reference_nhwc(x, p):
    Cin = x.shape[-1]
    P = p["w1"].shape[1]
    Cout = p["w3"].shape[1]
    dn = ("NHWC", "HWIO", "NHWC")

    t = x * p["s1"] + p["b1"]
    t = lax.conv_general_dilated(t, p["w1"].reshape(1, 1, Cin, P),
                                 (1, 1), "VALID", dimension_numbers=dn) + p["c1b"]
    t = t * p["s2"] + p["b2"]
    t = lax.conv_general_dilated(t, p["w2"], (1, 1), ((1, 1), (1, 1)),
                                 dimension_numbers=dn) + p["c2b"]
    t = t * p["s3"] + p["b3"]
    t = lax.conv_general_dilated(t, p["w3"].reshape(1, 1, P, Cout),
                                 (1, 1), "VALID", dimension_numbers=dn) + p["c3b"]
    return x + t


# ----------------------------------- main -------------------------------------

if __name__ == "__main__":
    planes = 4
    in_planes = planes * 4            # 16, so identity add is valid (stride=1)
    N, H, W = 2, 16, 16

    key = jax.random.PRNGKey(0)
    kx, kp = jax.random.split(key)
    x_nchw = jax.random.normal(kx, (N, in_planes, H, W), jnp.float32)
    params = make_params(kp, in_planes, planes)

    out = bottleneck_r(x_nchw, params)       # auto strip: whole image -> M = 256
    out = jax.block_until_ready(out)

    # correctness check against pure-JAX reference (bf16 streaming/matmuls -> loose tol)
    x_nhwc = jnp.transpose(x_nchw, (0, 2, 3, 1))
    ref = jnp.transpose(reference_nhwc(x_nhwc, params), (0, 3, 1, 2))
    assert out.shape == (N, in_planes, H, W)
    max_err = float(jnp.max(jnp.abs(out - ref)))
    assert jnp.allclose(out, ref, rtol=5e-2, atol=5e-2), max_err

    print("KERNEL_OK")
</pallas_src>

<mosaic_0001>
module attributes {stable_mosaic.version = 11 : i64} {
  func.func @bottleneck_kernel(%arg0: i32, %arg1: i32, %arg2: memref<1x16x16x128xbf16, #tpu.memory_space<vmem>>, %arg3: memref<1x1x16x128xbf16, #tpu.memory_space<vmem>>, %arg4: memref<1x1x16x128xbf16, #tpu.memory_space<vmem>>, %arg5: memref<128x128xbf16, #tpu.memory_space<vmem>>, %arg6: memref<1x128xf32, #tpu.memory_space<vmem>>, %arg7: memref<9x128x128xbf16, #tpu.memory_space<vmem>>, %arg8: memref<128x128xbf16, #tpu.memory_space<vmem>>, %arg9: memref<1x128xf32, #tpu.memory_space<vmem>>, %arg10: memref<1x16x16x128xf32, #tpu.memory_space<vmem>>, %arg11: memref<18x32x128xbf16, #tpu.memory_space<vmem>>) attributes {dimension_semantics = [#tpu.dimension_semantics<parallel>, #tpu.dimension_semantics<arbitrary>], iteration_bounds = array<i64: 2, 1>, scalar_prefetch = 0 : i64, scratch_operands = 1 : i64, tpu.core_type = #tpu.core_type<tc>, window_params = [{transform_indices = @transform_0, window_bounds = array<i64: 1, 16, 16, 128>}, {transform_indices = @transform_1, window_bounds = array<i64: 1, 1, 16, 128>}, {transform_indices = @transform_2, window_bounds = array<i64: 1, 1, 16, 128>}, {pipeline_mode = #tpu.pipeline_mode<synchronous>, transform_indices = @transform_3, window_bounds = array<i64: 128, 128>}, {pipeline_mode = #tpu.pipeline_mode<synchronous>, transform_indices = @transform_4, window_bounds = array<i64: 1, 128>}, {pipeline_mode = #tpu.pipeline_mode<synchronous>, transform_indices = @transform_5, window_bounds = array<i64: 9, 128, 128>}, {pipeline_mode = #tpu.pipeline_mode<synchronous>, transform_indices = @transform_6, window_bounds = array<i64: 128, 128>}, {pipeline_mode = #tpu.pipeline_mode<synchronous>, transform_indices = @transform_7, window_bounds = array<i64: 1, 128>}, {transform_indices = @transform_8, window_bounds = array<i64: 1, 16, 16, 128>}]} {
    %c0_i32 = arith.constant 0 : i32
    %0 = arith.cmpi eq, %arg1, %c0_i32 : i32
    %1 = arith.extui %0 : i1 to i32
    %c0_i32_0 = arith.constant 0 : i32
    %2 = arith.cmpi ne, %1, %c0_i32_0 : i32
    scf.if %2 {
      %cst_91 = arith.constant 0.000000e+00 : bf16
      %108 = vector.broadcast %cst_91 : bf16 to vector<18x8x128xbf16>
      %c0_92 = arith.constant 0 : index
      %c0_93 = arith.constant 0 : index
      %c0_94 = arith.constant 0 : index
      %109 = vector.load %arg11[%c0_92, %c0_93, %c0_94] : memref<18x32x128xbf16, #tpu.memory_space<vmem>>, vector<18x8x128xbf16>
      tpu.vector_store %arg11[%c0_92, %c0_93, %c0_94], %108 {strides = array<i32>} : memref<18x32x128xbf16, #tpu.memory_space<vmem>>, vector<18x8x128xbf16>,
      %cst_95 = arith.constant 0.000000e+00 : bf16
      %110 = vector.broadcast %cst_95 : bf16 to vector<18x8x128xbf16>
      %c0_96 = arith.constant 0 : index
      %c24 = arith.constant 24 : index
      %c0_97 = arith.constant 0 : index
      %111 = vector.load %arg11[%c0_96, %c24, %c0_97] : memref<18x32x128xbf16, #tpu.memory_space<vmem>>, vector<18x8x128xbf16>
      tpu.vector_store %arg11[%c0_96, %c24, %c0_97], %110 {strides = array<i32>} : memref<18x32x128xbf16, #tpu.memory_space<vmem>>, vector<18x8x128xbf16>,
    } else {
    }
    %c0 = arith.constant 0 : index
    %c0_1 = arith.constant 0 : index
    %3 = vector.load %arg6[%c0, %c0_1] : memref<1x128xf32, #tpu.memory_space<vmem>>, vector<1x128xf32>
    %c0_i32_2 = arith.constant 0 : i32
    %4 = arith.cmpi sgt, %arg1, %c0_i32_2 : i32
    %5 = arith.extui %4 : i1 to i32
    %6 = arith.sitofp %5 : i32 to f32
    %c1_i32 = arith.constant 1 : i32
    %7 = arith.addi %arg1, %c1_i32 : i32
    %c1_i32_3 = arith.constant 1 : i32
    %8 = arith.cmpi slt, %7, %c1_i32_3 : i32
    %9 = arith.extui %8 : i1 to i32
    %10 = arith.sitofp %9 : i32 to f32
    %c0_4 = arith.constant 0 : index
    %c0_5 = arith.constant 0 : index
    %11 = vector.load %arg5[%c0_4, %c0_5] : memref<128x128xbf16, #tpu.memory_space<vmem>>, vector<128x128xbf16>
    %c0_6 = arith.constant 0 : index
    %c0_7 = arith.constant 0 : index
    %c0_8 = arith.constant 0 : index
    %c0_9 = arith.constant 0 : index
    %12 = vector.load %arg3[%c0_6, %c0_7, %c0_8, %c0_9] : memref<1x1x16x128xbf16, #tpu.memory_space<vmem>>, vector<1x1x16x128xbf16>
    %13 = vector.shape_cast %12 : vector<1x1x16x128xbf16> to vector<16x128xbf16>
    %cst = arith.constant dense<0.000000e+00> : vector<16x128xf32>
    %14 = tpu.matmul %13, %11, %cst {dimension_numbers = #tpu.dot_dimension_numbers<[1], [0], [0], [1], [0, 0, 1, 1], [], []>} : vector<16x128xbf16>, vector<128x128xbf16>, vector<16x128xf32> -> vector<16x128xf32>
    %15 = vector.broadcast %3 : vector<1x128xf32> to vector<16x128xf32>
    %16 = arith.addf %14, %15 : vector<16x128xf32>
    %17 = vector.broadcast %6 : f32 to vector<16x128xf32>
    %18 = arith.mulf %16, %17 : vector<16x128xf32>
    %19 = arith.truncf %18 : vector<16x128xf32> to vector<16x128xbf16>
    %c0_10 = arith.constant 0 : index
    %c8 = arith.constant 8 : index
    %c0_11 = arith.constant 0 : index
    %20 = vector.load %arg11[%c0_10, %c8, %c0_11] : memref<18x32x128xbf16, #tpu.memory_space<vmem>>, vector<1x16x128xbf16>
    %21 = vector.shape_cast %20 : vector<1x16x128xbf16> to vector<16x128xbf16>
    %22 = vector.shape_cast %19 : vector<16x128xbf16> to vector<1x16x128xbf16>
    tpu.vector_store %arg11[%c0_10, %c8, %c0_11], %22 {strides = array<i32>} : memref<18x32x128xbf16, #tpu.memory_space<vmem>>, vector<1x16x128xbf16>,
    %c0_12 = arith.constant 0 : index
    %c0_13 = arith.constant 0 : index
    %c0_14 = arith.constant 0 : index
    %c0_15 = arith.constant 0 : index
    %23 = vector.load %arg2[%c0_12, %c0_13, %c0_14, %c0_15] : memref<1x16x16x128xbf16, #tpu.memory_space<vmem>>, vector<1x16x16x128xbf16>
    %24 = vector.shape_cast %23 : vector<1x16x16x128xbf16> to vector<16x16x128xbf16>
    %25 = vector.shape_cast %24 : vector<16x16x128xbf16> to vector<256x128xbf16>
    %cst_16 = arith.constant dense<0.000000e+00> : vector<256x128xf32>
    %26 = tpu.matmul %25, %11, %cst_16 {dimension_numbers = #tpu.dot_dimension_numbers<[1], [0], [0], [1], [0, 0, 1, 1], [], []>} : vector<256x128xbf16>, vector<128x128xbf16>, vector<256x128xf32> -> vector<256x128xf32>
    %27 = vector.broadcast %3 : vector<1x128xf32> to vector<256x128xf32>
    %28 = arith.addf %26, %27 : vector<256x128xf32>
    %29 = vector.shape_cast %28 : vector<256x128xf32> to vector<16x16x128xf32>
    %30 = arith.truncf %29 : vector<16x16x128xf32> to vector<16x16x128xbf16>
    %c1 = arith.constant 1 : index
    %c8_17 = arith.constant 8 : index
    %c0_18 = arith.constant 0 : index
    %31 = vector.load %arg11[%c1, %c8_17, %c0_18] : memref<18x32x128xbf16, #tpu.memory_space<vmem>>, vector<16x16x128xbf16>
    tpu.vector_store %arg11[%c1, %c8_17, %c0_18], %30 {strides = array<i32>} : memref<18x32x128xbf16, #tpu.memory_space<vmem>>, vector<16x16x128xbf16>,
    %c0_19 = arith.constant 0 : index
    %c0_20 = arith.constant 0 : index
    %c0_21 = arith.constant 0 : index
    %c0_22 = arith.constant 0 : index
    %32 = vector.load %arg4[%c0_19, %c0_20, %c0_21, %c0_22] : memref<1x1x16x128xbf16, #tpu.memory_space<vmem>>, vector<1x1x16x128xbf16>
    %33 = vector.shape_cast %32 : vector<1x1x16x128xbf16> to vector<16x128xbf16>
    %cst_23 = arith.constant dense<0.000000e+00> : vector<16x128xf32>
    %34 = tpu.matmul %33, %11, %cst_23 {dimension_numbers = #tpu.dot_dimension_numbers<[1], [0], [0], [1], [0, 0, 1, 1], [], []>} : vector<16x128xbf16>, vector<128x128xbf16>, vector<16x128xf32> -> vector<16x128xf32>
    %35 = vector.broadcast %3 : vector<1x128xf32> to vector<16x128xf32>
    %36 = arith.addf %34, %35 : vector<16x128xf32>
    %37 = vector.broadcast %10 : f32 to vector<16x128xf32>
    %38 = arith.mulf %36, %37 : vector<16x128xf32>
    %39 = arith.truncf %38 : vector<16x128xf32> to vector<16x128xbf16>
    %c17 = arith.constant 17 : index
    %c8_24 = arith.constant 8 : index
    %c0_25 = arith.constant 0 : index
    %40 = vector.load %arg11[%c17, %c8_24, %c0_25] : memref<18x32x128xbf16, #tpu.memory_space<vmem>>, vector<1x16x128xbf16>
    %41 = vector.shape_cast %40 : vector<1x16x128xbf16> to vector<16x128xbf16>
    %42 = vector.shape_cast %39 : vector<16x128xbf16> to vector<1x16x128xbf16>
    tpu.vector_store %arg11[%c17, %c8_24, %c0_25], %42 {strides = array<i32>} : memref<18x32x128xbf16, #tpu.memory_space<vmem>>, vector<1x16x128xbf16>,
    %c0_26 = arith.constant 0 : index
    %c7 = arith.constant 7 : index
    %c0_27 = arith.constant 0 : index
    %43 = vector.load %arg11[%c0_26, %c7, %c0_27] : memref<18x32x128xbf16, #tpu.memory_space<vmem>>, vector<16x16x128xbf16>
    %44 = vector.shape_cast %43 : vector<16x16x128xbf16> to vector<256x128xbf16>
    %c0_28 = arith.constant 0 : index
    %c0_29 = arith.constant 0 : index
    %c0_30 = arith.constant 0 : index
    %45 = vector.load %arg7[%c0_28, %c0_29, %c0_30] : memref<9x128x128xbf16, #tpu.memory_space<vmem>>, vector<1x128x128xbf16>
    %46 = vector.shape_cast %45 : vector<1x128x128xbf16> to vector<128x128xbf16>
    %cst_31 = arith.constant dense<0.000000e+00> : vector<256x128xf32>
    %47 = tpu.matmul %44, %46, %cst_31 {dimension_numbers = #tpu.dot_dimension_numbers<[1], [0], [0], [1], [0, 0, 1, 1], [], []>} : vector<256x128xbf16>, vector<128x128xbf16>, vector<256x128xf32> -> vector<256x128xf32>
    %c0_32 = arith.constant 0 : index
    %c8_33 = arith.constant 8 : index
    %c0_34 = arith.constant 0 : index
    %48 = vector.load %arg11[%c0_32, %c8_33, %c0_34] : memref<18x32x128xbf16, #tpu.memory_space<vmem>>, vector<16x16x128xbf16>
    %49 = vector.shape_cast %48 : vector<16x16x128xbf16> to vector<256x128xbf16>
    %c1_35 = arith.constant 1 : index
    %c0_36 = arith.constant 0 : index
    %c0_37 = arith.constant 0 : index
    %50 = vector.load %arg7[%c1_35, %c0_36, %c0_37] : memref<9x128x128xbf16, #tpu.memory_space<vmem>>, vector<1x128x128xbf16>
    %51 = vector.shape_cast %50 : vector<1x128x128xbf16> to vector<128x128xbf16>
    %cst_38 = arith.constant dense<0.000000e+00> : vector<256x128xf32>
    %52 = tpu.matmul %49, %51, %cst_38 {dimension_numbers = #tpu.dot_dimension_numbers<[1], [0], [0], [1], [0, 0, 1, 1], [], []>} : vector<256x128xbf16>, vector<128x128xbf16>, vector<256x128xf32> -> vector<256x128xf32>
    %53 = arith.addf %47, %52 : vector<256x128xf32>
    %c0_39 = arith.constant 0 : index
    %c9 = arith.constant 9 : index
    %c0_40 = arith.constant 0 : index
    %54 = vector.load %arg11[%c0_39, %c9, %c0_40] : memref<18x32x128xbf16, #tpu.memory_space<vmem>>, vector<16x16x128xbf16>
    %55 = vector.shape_cast %54 : vector<16x16x128xbf16> to vector<256x128xbf16>
    %c2 = arith.constant 2 : index
    %c0_41 = arith.constant 0 : index
    %c0_42 = arith.constant 0 : index
    %56 = vector.load %arg7[%c2, %c0_41, %c0_42] : memref<9x128x128xbf16, #tpu.memory_space<vmem>>, vector<1x128x128xbf16>
    %57 = vector.shape_cast %56 : vector<1x128x128xbf16> to vector<128x128xbf16>
    %cst_43 = arith.constant dense<0.000000e+00> : vector<256x128xf32>
    %58 = tpu.matmul %55, %57, %cst_43 {dimension_numbers = #tpu.dot_dimension_numbers<[1], [0], [0], [1], [0, 0, 1, 1], [], []>} : vector<256x128xbf16>, vector<128x128xbf16>, vector<256x128xf32> -> vector<256x128xf32>
    %59 = arith.addf %53, %58 : vector<256x128xf32>
    %c1_44 = arith.constant 1 : index
    %c7_45 = arith.constant 7 : index
    %c0_46 = arith.constant 0 : index
    %60 = vector.load %arg11[%c1_44, %c7_45, %c0_46] : memref<18x32x128xbf16, #tpu.memory_space<vmem>>, vector<16x16x128xbf16>
    %61 = vector.shape_cast %60 : vector<16x16x128xbf16> to vector<256x128xbf16>
    %c3 = arith.constant 3 : index
    %c0_47 = arith.constant 0 : index
    %c0_48 = arith.constant 0 : index
    %62 = vector.load %arg7[%c3, %c0_47, %c0_48] : memref<9x128x128xbf16, #tpu.memory_space<vmem>>, vector<1x128x128xbf16>
    %63 = vector.shape_cast %62 : vector<1x128x128xbf16> to vector<128x128xbf16>
    %cst_49 = arith.constant dense<0.000000e+00> : vector<256x128xf32>
    %64 = tpu.matmul %61, %63, %cst_49 {dimension_numbers = #tpu.dot_dimension_numbers<[1], [0], [0], [1], [0, 0, 1, 1], [], []>} : vector<256x128xbf16>, vector<128x128xbf16>, vector<256x128xf32> -> vector<256x128xf32>
    %65 = arith.addf %59, %64 : vector<256x128xf32>
    %c1_50 = arith.constant 1 : index
    %c8_51 = arith.constant 8 : index
    %c0_52 = arith.constant 0 : index
    %66 = vector.load %arg11[%c1_50, %c8_51, %c0_52] : memref<18x32x128xbf16, #tpu.memory_space<vmem>>, vector<16x16x128xbf16>
    %67 = vector.shape_cast %66 : vector<16x16x128xbf16> to vector<256x128xbf16>
    %c4 = arith.constant 4 : index
    %c0_53 = arith.constant 0 : index
    %c0_54 = arith.constant 0 : index
    %68 = vector.load %arg7[%c4, %c0_53, %c0_54] : memref<9x128x128xbf16, #tpu.memory_space<vmem>>, vector<1x128x128xbf16>
    %69 = vector.shape_cast %68 : vector<1x128x128xbf16> to vector<128x128xbf16>
    %cst_55 = arith.constant dense<0.000000e+00> : vector<256x128xf32>
    %70 = tpu.matmul %67, %69, %cst_55 {dimension_numbers = #tpu.dot_dimension_numbers<[1], [0], [0], [1], [0, 0, 1, 1], [], []>} : vector<256x128xbf16>, vector<128x128xbf16>, vector<256x128xf32> -> vector<256x128xf32>
    %71 = arith.addf %65, %70 : vector<256x128xf32>
    %c1_56 = arith.constant 1 : index
    %c9_57 = arith.constant 9 : index
    %c0_58 = arith.constant 0 : index
    %72 = vector.load %arg11[%c1_56, %c9_57, %c0_58] : memref<18x32x128xbf16, #tpu.memory_space<vmem>>, vector<16x16x128xbf16>
    %73 = vector.shape_cast %72 : vector<16x16x128xbf16> to vector<256x128xbf16>
    %c5 = arith.constant 5 : index
    %c0_59 = arith.constant 0 : index
    %c0_60 = arith.constant 0 : index
    %74 = vector.load %arg7[%c5, %c0_59, %c0_60] : memref<9x128x128xbf16, #tpu.memory_space<vmem>>, vector<1x128x128xbf16>
    %75 = vector.shape_cast %74 : vector<1x128x128xbf16> to vector<128x128xbf16>
    %cst_61 = arith.constant dense<0.000000e+00> : vector<256x128xf32>
    %76 = tpu.matmul %73, %75, %cst_61 {dimension_numbers = #tpu.dot_dimension_numbers<[1], [0], [0], [1], [0, 0, 1, 1], [], []>} : vector<256x128xbf16>, vector<128x128xbf16>, vector<256x128xf32> -> vector<256x128xf32>
    %77 = arith.addf %71, %76 : vector<256x128xf32>
    %c2_62 = arith.constant 2 : index
    %c7_63 = arith.constant 7 : index
    %c0_64 = arith.constant 0 : index
    %78 = vector.load %arg11[%c2_62, %c7_63, %c0_64] : memref<18x32x128xbf16, #tpu.memory_space<vmem>>, vector<16x16x128xbf16>
    %79 = vector.shape_cast %78 : vector<16x16x128xbf16> to vector<256x128xbf16>
    %c6 = arith.constant 6 : index
    %c0_65 = arith.constant 0 : index
    %c0_66 = arith.constant 0 : index
    %80 = vector.load %arg7[%c6, %c0_65, %c0_66] : memref<9x128x128xbf16, #tpu.memory_space<vmem>>, vector<1x128x128xbf16>
    %81 = vector.shape_cast %80 : vector<1x128x128xbf16> to vector<128x128xbf16>
    %cst_67 = arith.constant dense<0.000000e+00> : vector<256x128xf32>
    %82 = tpu.matmul %79, %81, %cst_67 {dimension_numbers = #tpu.dot_dimension_numbers<[1], [0], [0], [1], [0, 0, 1, 1], [], []>} : vector<256x128xbf16>, vector<128x128xbf16>, vector<256x128xf32> -> vector<256x128xf32>
    %83 = arith.addf %77, %82 : vector<256x128xf32>
    %c2_68 = arith.constant 2 : index
    %c8_69 = arith.constant 8 : index
    %c0_70 = arith.constant 0 : index
    %84 = vector.load %arg11[%c2_68, %c8_69, %c0_70] : memref<18x32x128xbf16, #tpu.memory_space<vmem>>, vector<16x16x128xbf16>
    %85 = vector.shape_cast %84 : vector<16x16x128xbf16> to vector<256x128xbf16>
    %c7_71 = arith.constant 7 : index
    %c0_72 = arith.constant 0 : index
    %c0_73 = arith.constant 0 : index
    %86 = vector.load %arg7[%c7_71, %c0_72, %c0_73] : memref<9x128x128xbf16, #tpu.memory_space<vmem>>, vector<1x128x128xbf16>
    %87 = vector.shape_cast %86 : vector<1x128x128xbf16> to vector<128x128xbf16>
    %cst_74 = arith.constant dense<0.000000e+00> : vector<256x128xf32>
    %88 = tpu.matmul %85, %87, %cst_74 {dimension_numbers = #tpu.dot_dimension_numbers<[1], [0], [0], [1], [0, 0, 1, 1], [], []>} : vector<256x128xbf16>, vector<128x128xbf16>, vector<256x128xf32> -> vector<256x128xf32>
    %89 = arith.addf %83, %88 : vector<256x128xf32>
    %c2_75 = arith.constant 2 : index
    %c9_76 = arith.constant 9 : index
    %c0_77 = arith.constant 0 : index
    %90 = vector.load %arg11[%c2_75, %c9_76, %c0_77] : memref<18x32x128xbf16, #tpu.memory_space<vmem>>, vector<16x16x128xbf16>
    %91 = vector.shape_cast %90 : vector<16x16x128xbf16> to vector<256x128xbf16>
    %c8_78 = arith.constant 8 : index
    %c0_79 = arith.constant 0 : index
    %c0_80 = arith.constant 0 : index
    %92 = vector.load %arg7[%c8_78, %c0_79, %c0_80] : memref<9x128x128xbf16, #tpu.memory_space<vmem>>, vector<1x128x128xbf16>
    %93 = vector.shape_cast %92 : vector<1x128x128xbf16> to vector<128x128xbf16>
    %cst_81 = arith.constant dense<0.000000e+00> : vector<256x128xf32>
    %94 = tpu.matmul %91, %93, %cst_81 {dimension_numbers = #tpu.dot_dimension_numbers<[1], [0], [0], [1], [0, 0, 1, 1], [], []>} : vector<256x128xbf16>, vector<128x128xbf16>, vector<256x128xf32> -> vector<256x128xf32>
    %95 = arith.addf %89, %94 : vector<256x128xf32>
    %96 = arith.truncf %95 : vector<256x128xf32> to vector<256x128xbf16>
    %c0_82 = arith.constant 0 : index
    %c0_83 = arith.constant 0 : index
    %97 = vector.load %arg8[%c0_82, %c0_83] : memref<128x128xbf16, #tpu.memory_space<vmem>>, vector<128x128xbf16>
    %cst_84 = arith.constant dense<0.000000e+00> : vector<256x128xf32>
    %98 = tpu.matmul %96, %97, %cst_84 {dimension_numbers = #tpu.dot_dimension_numbers<[1], [0], [0], [1], [0, 0, 1, 1], [], []>} : vector<256x128xbf16>, vector<128x128xbf16>, vector<256x128xf32> -> vector<256x128xf32>
    %c0_85 = arith.constant 0 : index
    %c0_86 = arith.constant 0 : index
    %99 = vector.load %arg9[%c0_85, %c0_86] : memref<1x128xf32, #tpu.memory_space<vmem>>, vector<1x128xf32>
    %100 = vector.broadcast %99 : vector<1x128xf32> to vector<256x128xf32>
    %101 = arith.addf %98, %100 : vector<256x128xf32>
    %102 = arith.extf %25 : vector<256x128xbf16> to vector<256x128xf32>
    %103 = arith.addf %102, %101 : vector<256x128xf32>
    %104 = vector.shape_cast %103 : vector<256x128xf32> to vector<16x16x128xf32>
    %c0_87 = arith.constant 0 : index
    %c0_88 = arith.constant 0 : index
    %c0_89 = arith.constant 0 : index
    %c0_90 = arith.constant 0 : index
    %105 = vector.load %arg10[%c0_87, %c0_88, %c0_89, %c0_90] : memref<1x16x16x128xf32, #tpu.memory_space<vmem>>, vector<1x16x16x128xf32>
    %106 = vector.shape_cast %105 : vector<1x16x16x128xf32> to vector<16x16x128xf32>
    %107 = vector.shape_cast %104 : vector<16x16x128xf32> to vector<1x16x16x128xf32>
    tpu.vector_store %arg10[%c0_87, %c0_88, %c0_89, %c0_90], %107 {strides = array<i32>} : memref<1x16x16x128xf32, #tpu.memory_space<vmem>>, vector<1x16x16x128xf32>,
    return
  }
  func.func @transform_0(%arg0: i32, %arg1: i32) -> (i32, i32, i32, i32) {
    %c0_i32 = arith.constant 0 : i32
    %c0_i32_0 = arith.constant 0 : i32
    %c0_i32_1 = arith.constant 0 : i32
    return %arg0, %arg1, %c0_i32, %c0_i32_0 : i32, i32, i32, i32
  }
  func.func @transform_1(%arg0: i32, %arg1: i32) -> (i32, i32, i32, i32) {
    %c0_i32 = arith.constant 0 : i32
    %c0_i32_0 = arith.constant 0 : i32
    %c0_i32_1 = arith.constant 0 : i32
    return %arg0, %arg1, %c0_i32, %c0_i32_0 : i32, i32, i32, i32
  }
  func.func @transform_2(%arg0: i32, %arg1: i32) -> (i32, i32, i32, i32) {
    %c0_i32 = arith.constant 0 : i32
    %c0_i32_0 = arith.constant 0 : i32
    %c0_i32_1 = arith.constant 0 : i32
    return %arg0, %arg1, %c0_i32, %c0_i32_0 : i32, i32, i32, i32
  }
  func.func @transform_3(%arg0: i32, %arg1: i32) -> (i32, i32) {
    %c0_i32 = arith.constant 0 : i32
    %c0_i32_0 = arith.constant 0 : i32
    %c0_i32_1 = arith.constant 0 : i32
    return %c0_i32, %c0_i32_0 : i32, i32
  }
  func.func @transform_4(%arg0: i32, %arg1: i32) -> (i32, i32) {
    %c0_i32 = arith.constant 0 : i32
    %c0_i32_0 = arith.constant 0 : i32
    %c0_i32_1 = arith.constant 0 : i32
    return %c0_i32, %c0_i32_0 : i32, i32
  }
  func.func @transform_5(%arg0: i32, %arg1: i32) -> (i32, i32, i32) {
    %c0_i32 = arith.constant 0 : i32
    %c0_i32_0 = arith.constant 0 : i32
    %c0_i32_1 = arith.constant 0 : i32
    %c0_i32_2 = arith.constant 0 : i32
    return %c0_i32, %c0_i32_0, %c0_i32_1 : i32, i32, i32
  }
  func.func @transform_6(%arg0: i32, %arg1: i32) -> (i32, i32) {
    %c0_i32 = arith.constant 0 : i32
    %c0_i32_0 = arith.constant 0 : i32
    %c0_i32_1 = arith.constant 0 : i32
    return %c0_i32, %c0_i32_0 : i32, i32
  }
  func.func @transform_7(%arg0: i32, %arg1: i32) -> (i32, i32) {
    %c0_i32 = arith.constant 0 : i32
    %c0_i32_0 = arith.constant 0 : i32
    %c0_i32_1 = arith.constant 0 : i32
    return %c0_i32, %c0_i32_0 : i32, i32
  }
  func.func @transform_8(%arg0: i32, %arg1: i32) -> (i32, i32, i32, i32) {
    %c0_i32 = arith.constant 0 : i32
    %c0_i32_0 = arith.constant 0 : i32
    %c0_i32_1 = arith.constant 0 : i32
    return %arg0, %arg1, %c0_i32, %c0_i32_0 : i32, i32, i32, i32
  }
}

</mosaic_0001>

<llo_original>
// kernel: tpu_custom_call.1
$region0: #{tpu_custom_call.1}
  #allocation0 [shape = 'u32[]', space=smem, size = 0x4, offset = 0x4, fixed_abs, tag = 'smem constant byte address 0x4 - core index']
  #allocation1 [shape = 'u32[144,128]{1,0:T(1,128)}', space=vmem, size = 0x12000, scoped, tag = 'internal scratch']
  #allocation2 [shape = 'bf16[18,32,128]{2,1,0:T(16,128)(2,1)}', space=vmem, size = 0x24000, scoped, tag = 'scratch operand']
  %s0 = inlined_call_operand.hbm [shape: bf16[2,16,16,128], index: 0, kind: input, shape index: {}]
  %s1 = inlined_call_operand.hbm [shape: bf16[2,1,16,128], index: 1, kind: input, shape index: {}]
  %s2 = inlined_call_operand.hbm [shape: bf16[2,1,16,128], index: 2, kind: input, shape index: {}]
  %s3 = inlined_call_operand.hbm [shape: bf16[128,128], index: 3, kind: input, shape index: {}]
  %s4 = inlined_call_operand.vmem [shape: f32[1,128], index: 4, kind: input, shape index: {}]
  %s5 = inlined_call_operand.hbm [shape: bf16[9,128,128], index: 5, kind: input, shape index: {}]
  %s6 = inlined_call_operand.hbm [shape: bf16[128,128], index: 6, kind: input, shape index: {}]
  %s7 = inlined_call_operand.vmem [shape: f32[1,128], index: 7, kind: input, shape index: {}]
  %s8 = inlined_call_operand.hbm [shape: f32[2,16,16,128], index: 8, kind: output, shape index: {}]
  %s9 = sld [smem:[#allocation0]]
  $region93: #{tpu_custom_call.1} parent=0
    _
  %s11 = ssub.s32 1, %s9
  %s12 = scalar_select 0, %s11, %s9
  $region1: #{tpu_custom_call.1} parent=0
    #allocation3 [shape = 'u8[131072]{0}', space=vmem, size = 0x20000, scoped, tag = 'input window, operand 0']
    #allocation4 [shape = 's32[2]{0}', space=sflag, size = 0x8, scoped, tag = 'scoped memory for tpu_custom_call.1']
    #allocation5 [shape = 's32[2]{0}', space=sflag, size = 0x8, scoped, tag = 'scoped memory for tpu_custom_call.1']
    #allocation6 [shape = 'u8[8192]{0}', space=vmem, size = 0x2000, scoped, tag = 'input window, operand 1']
    #allocation7 [shape = 's32[2]{0}', space=sflag, size = 0x8, scoped, tag = 'scoped memory for tpu_custom_call.1']
    #allocation8 [shape = 'u8[8192]{0}', space=vmem, size = 0x2000, scoped, tag = 'input window, operand 2']
    #allocation9 [shape = 'u8[32768]{0}', space=vmem, size = 0x8000, scoped, tag = 'input window, operand 3, single buffered']
    #allocation10 [shape = 's32[1]{0}', space=sflag, size = 0x4, scoped, tag = 'scoped memory for tpu_custom_call.1']
    #allocation11 [shape = 'u8[294912]{0}', space=vmem, size = 0x48000, scoped, tag = 'input window, operand 5, single buffered']
    #allocation12 [shape = 'u8[32768]{0}', space=vmem, size = 0x8000, scoped, tag = 'input window, operand 6, single buffered']
    #allocation13 [shape = 's32[1]{0}', space=sflag, size = 0x4, scoped, tag = 'scoped memory for tpu_custom_call.1']
    #allocation14 [shape = 'u8[262144]{0}', space=vmem, size = 0x40000, scoped, tag = 'output window, operand 0']
    %13 = vsyncpa [#allocation4], 0
    %s14 = scalar_lea.sflag [#allocation4], 1
    %15 = vsyncpa %s14, 0
    %16 = vsyncpa [#allocation7], 0
    %s17 = scalar_lea.sflag [#allocation7], 1
    %18 = vsyncpa %s17, 0
    %19 = vsyncpa [#allocation10], 0
    %20 = vsyncpa [#allocation13], 0
    %21 = vsyncpa [#allocation5], 0
    %s22 = scalar_lea.sflag [#allocation5], 1
    %23 = vsyncpa %s22, 0
    loop: start=0, step=1, limit=4
    $region2: #{tpu_custom_call.1} parent=1 // loop_pre_header
      _
    $region3: #{tpu_custom_call.1} parent=1 // loop_header
      %s25 = sphi 0, %s29
      %p26 = scmp.ge.s32.totalorder %s25, 4
      %s32 = sphi 0, %s44
      %s33 = sphi 0, %s40
      %s34 = sphi 0, %s32
      %s35 = sphi 0, %s33
      %s36 = sphi 0, %s34
      %s37 = sphi 0, %s35
      %s49 = sphi 0, %s51
      %s52 = sphi 0, %s49
      %s53 = sphi 0, %s52
      %s69 = sphi 0, %s53
      %s77 = sphi 0, %s79
      %s80 = sphi 0, %s77
      %s81 = sphi 0, %s80
      %s97 = sphi 0, %s81
      %s105 = sphi 0, %s107
      %s108 = sphi 0, %s105
      %s109 = sphi 0, %s108
      %s125 = sphi 0, %s109
      %s129 = sphi 0, %s129
      %s131 = sphi 0, %s129
      %s132 = sphi 0, %s131
      %s146 = sphi 0, %s132
      %s150 = sphi 0, %s150
      %s152 = sphi 0, %s150
      %s153 = sphi 0, %s152
      %s167 = sphi 0, %s153
      %s171 = sphi 0, %s171
      %s173 = sphi 0, %s171
      %s174 = sphi 0, %s173
      %s188 = sphi 0, %s174
      %s192 = sphi 0, %s192
      %s194 = sphi 0, %s192
      %s195 = sphi 0, %s194
      %s209 = sphi 0, %s195
      %s213 = sphi 0, %s213
      %s215 = sphi 0, %s213
      %s216 = sphi 0, %s215
      %s230 = sphi 0, %s216
      %s238 = sphi 0, %s240
      %s241 = sphi 0, %s238
      %s242 = sphi 0, %s241
      %s258 = sphi 0, %s242
    $region4: #{tpu_custom_call.1} parent=1 // loop_header_branch
      %28 = sbr.rel (%p26) target = $region8
    $region5: #{tpu_custom_call.1} parent=1 // loop_body
      %s30 = ssub.s32 %s25, 1
      %s31 = ssub.s32 %s25, 2
      %s38 = sadd.s32 1, %s33
      %p39 = scmp.ge.s32.totalorder %s38, 1
      %s40 = scalar_select %p39, 0, %s38
      %s41 = sadd.s32 1, %s32
      %s42 = scalar_select %p39, %s41, %s32
      %p43 = scmp.ge.s32.totalorder %s42, 2
      %s44 = scalar_select %p43, 0, %s42
      %s45 = ssub.s32 %s32, %s44
      %s46 = ssub.s32 %s33, %s40
      %s47 = sor.u32 %s45, %s46
      %p48 = scmp.eq.s32.totalorder %s47, 0
      %s50 = sadd.s32 %s49, 1
      %s51 = scalar_select %p48, %s49, %s50
      %p54 = pneg %p48
      %p55 = scmp.eq.s32.totalorder %s25, 1
      %p56 = por %p54, %p55
      %p57 = scmp.ne.s32.totalorder %s49, %s52
      %p58 = scmp.eq.s32.totalorder %s25, 0
      %p59 = por %p57, %p58
      %p60 = scmp.ne.s32.totalorder %s49, %s52
      %p61 = scmp.eq.s32.totalorder %s30, 1
      %p62 = por %p60, %p61
      %p63 = scmp.ne.s32.totalorder %s52, %s53
      %p64 = scmp.eq.s32.totalorder %s30, 0
      %p65 = por %p63, %p64
      %p66 = scmp.ne.s32.totalorder %s52, %s53
      %p67 = scmp.eq.s32.totalorder %s31, 1
      %p68 = por %p66, %p67
      %p70 = scmp.ne.s32.totalorder %s53, %s69
      %p71 = scmp.eq.s32.totalorder %s31, 0
      %p72 = por %p70, %p71
      %s73 = ssub.s32 %s32, %s44
      %s74 = ssub.s32 %s33, %s40
      %s75 = sor.u32 %s73, %s74
      %p76 = scmp.eq.s32.totalorder %s75, 0
      %s78 = sadd.s32 %s77, 1
      %s79 = scalar_select %p76, %s77, %s78
      %p82 = pneg %p76
      %p83 = scmp.eq.s32.totalorder %s25, 1
      %p84 = por %p82, %p83
      %p85 = scmp.ne.s32.totalorder %s77, %s80
      %p86 = scmp.eq.s32.totalorder %s25, 0
      %p87 = por %p85, %p86
      %p88 = scmp.ne.s32.totalorder %s77, %s80
      %p89 = scmp.eq.s32.totalorder %s30, 1
      %p90 = por %p88, %p89
      %p91 = scmp.ne.s32.totalorder %s80, %s81
      %p92 = scmp.eq.s32.totalorder %s30, 0
      %p93 = por %p91, %p92
      %p94 = scmp.ne.s32.totalorder %s80, %s81
      %p95 = scmp.eq.s32.totalorder %s31, 1
      %p96 = por %p94, %p95
      %p98 = scmp.ne.s32.totalorder %s81, %s97
      %p99 = scmp.eq.s32.totalorder %s31, 0
      %p100 = por %p98, %p99
      %s101 = ssub.s32 %s32, %s44
      %s102 = ssub.s32 %s33, %s40
      %s103 = sor.u32 %s101, %s102
      %p104 = scmp.eq.s32.totalorder %s103, 0
      %s106 = sadd.s32 %s105, 1
      %s107 = scalar_select %p104, %s105, %s106
      %p110 = pneg %p104
      %p111 = scmp.eq.s32.totalorder %s25, 1
      %p112 = por %p110, %p111
      %p113 = scmp.ne.s32.totalorder %s105, %s108
      %p114 = scmp.eq.s32.totalorder %s25, 0
      %p115 = por %p113, %p114
      %p116 = scmp.ne.s32.totalorder %s105, %s108
      %p117 = scmp.eq.s32.totalorder %s30, 1
      %p118 = por %p116, %p117
      %p119 = scmp.ne.s32.totalorder %s108, %s109
      %p120 = scmp.eq.s32.totalorder %s30, 0
      %p121 = por %p119, %p120
      %p122 = scmp.ne.s32.totalorder %s108, %s109
      %p123 = scmp.eq.s32.totalorder %s31, 1
      %p124 = por %p122, %p123
      %p126 = scmp.ne.s32.totalorder %s109, %s125
      %p127 = scmp.eq.s32.totalorder %s31, 0
      %p128 = por %p126, %p127
      %s130 = sadd.s32 %s129, 1
      %p133 = scmp.eq.s32.totalorder %s25, 1
      %p134 = scmp.ne.s32.totalorder %s129, %s131
      %p135 = scmp.eq.s32.totalorder %s25, 0
      %p136 = por %p134, %p135
      %p137 = scmp.ne.s32.totalorder %s129, %s131
      %p138 = scmp.eq.s32.totalorder %s30, 1
      %p139 = por %p137, %p138
      %p140 = scmp.ne.s32.totalorder %s131, %s132
      %p141 = scmp.eq.s32.totalorder %s30, 0
      %p142 = por %p140, %p141
      %p143 = scmp.ne.s32.totalorder %s131, %s132
      %p144 = scmp.eq.s32.totalorder %s31, 1
      %p145 = por %p143, %p144
      %p147 = scmp.ne.s32.totalorder %s132, %s146
      %p148 = scmp.eq.s32.totalorder %s31, 0
      %p149 = por %p147, %p148
      %s151 = sadd.s32 %s150, 1
      %p154 = scmp.eq.s32.totalorder %s25, 1
      %p155 = scmp.ne.s32.totalorder %s150, %s152
      %p156 = scmp.eq.s32.totalorder %s25, 0
      %p157 = por %p155, %p156
      %p158 = scmp.ne.s32.totalorder %s150, %s152
      %p159 = scmp.eq.s32.totalorder %s30, 1
      %p160 = por %p158, %p159
      %p161 = scmp.ne.s32.totalorder %s152, %s153
      %p162 = scmp.eq.s32.totalorder %s30, 0
      %p163 = por %p161, %p162
      %p164 = scmp.ne.s32.totalorder %s152, %s153
      %p165 = scmp.eq.s32.totalorder %s31, 1
      %p166 = por %p164, %p165
      %p168 = scmp.ne.s32.totalorder %s153, %s167
      %p169 = scmp.eq.s32.totalorder %s31, 0
      %p170 = por %p168, %p169
      %s172 = sadd.s32 %s171, 1
      %p175 = scmp.eq.s32.totalorder %s25, 1
      %p176 = scmp.ne.s32.totalorder %s171, %s173
      %p177 = scmp.eq.s32.totalorder %s25, 0
      %p178 = por %p176, %p177
      %p179 = scmp.ne.s32.totalorder %s171, %s173
      %p180 = scmp.eq.s32.totalorder %s30, 1
      %p181 = por %p179, %p180
      %p182 = scmp.ne.s32.totalorder %s173, %s174
      %p183 = scmp.eq.s32.totalorder %s30, 0
      %p184 = por %p182, %p183
      %p185 = scmp.ne.s32.totalorder %s173, %s174
      %p186 = scmp.eq.s32.totalorder %s31, 1
      %p187 = por %p185, %p186
      %p189 = scmp.ne.s32.totalorder %s174, %s188
      %p190 = scmp.eq.s32.totalorder %s31, 0
      %p191 = por %p189, %p190
      %s193 = sadd.s32 %s192, 1
      %p196 = scmp.eq.s32.totalorder %s25, 1
      %p197 = scmp.ne.s32.totalorder %s192, %s194
      %p198 = scmp.eq.s32.totalorder %s25, 0
      %p199 = por %p197, %p198
      %p200 = scmp.ne.s32.totalorder %s192, %s194
      %p201 = scmp.eq.s32.totalorder %s30, 1
      %p202 = por %p200, %p201
      %p203 = scmp.ne.s32.totalorder %s194, %s195
      %p204 = scmp.eq.s32.totalorder %s30, 0
      %p205 = por %p203, %p204
      %p206 = scmp.ne.s32.totalorder %s194, %s195
      %p207 = scmp.eq.s32.totalorder %s31, 1
      %p208 = por %p206, %p207
      %p210 = scmp.ne.s32.totalorder %s195, %s209
      %p211 = scmp.eq.s32.totalorder %s31, 0
      %p212 = por %p210, %p211
      %s214 = sadd.s32 %s213, 1
      %p217 = scmp.eq.s32.totalorder %s25, 1
      %p218 = scmp.ne.s32.totalorder %s213, %s215
      %p219 = scmp.eq.s32.totalorder %s25, 0
      %p220 = por %p218, %p219
      %p221 = scmp.ne.s32.totalorder %s213, %s215
      %p222 = scmp.eq.s32.totalorder %s30, 1
      %p223 = por %p221, %p222
      %p224 = scmp.ne.s32.totalorder %s215, %s216
      %p225 = scmp.eq.s32.totalorder %s30, 0
      %p226 = por %p224, %p225
      %p227 = scmp.ne.s32.totalorder %s215, %s216
      %p228 = scmp.eq.s32.totalorder %s31, 1
      %p229 = por %p227, %p228
      %p231 = scmp.ne.s32.totalorder %s216, %s230
      %p232 = scmp.eq.s32.totalorder %s31, 0
      %p233 = por %p231, %p232
      %s234 = ssub.s32 %s32, %s44
      %s235 = ssub.s32 %s33, %s40
      %s236 = sor.u32 %s234, %s235
      %p237 = scmp.eq.s32.totalorder %s236, 0
      %s239 = sadd.s32 %s238, 1
      %s240 = scalar_select %p237, %s238, %s239
      %p243 = pneg %p237
      %p244 = scmp.eq.s32.totalorder %s25, 1
      %p245 = por %p243, %p244
      %p246 = scmp.ne.s32.totalorder %s238, %s241
      %p247 = scmp.eq.s32.totalorder %s25, 0
      %p248 = por %p246, %p247
      %p249 = scmp.ne.s32.totalorder %s238, %s241
      %p250 = scmp.eq.s32.totalorder %s30, 1
      %p251 = por %p249, %p250
      %p252 = scmp.ne.s32.totalorder %s241, %s242
      %p253 = scmp.eq.s32.totalorder %s30, 0
      %p254 = por %p252, %p253
      %p255 = scmp.ne.s32.totalorder %s241, %s242
      %p256 = scmp.eq.s32.totalorder %s31, 1
      %p257 = por %p255, %p256
      %p259 = scmp.ne.s32.totalorder %s242, %s258
      %p260 = scmp.eq.s32.totalorder %s31, 0
      %p261 = por %p259, %p260
      %p262 = scmp.le.s32.totalorder 1, %s25
      %p263 = scmp.lt.s32.totalorder %s25, 3
      %p264 = pnand %p262, %p263
      %p265 = pneg %p264
      // Predicated region
      $region9: #{tpu_custom_call.1} parent=5 // pred_check
        _
      $region10: #{tpu_custom_call.1} parent=5 // pred_check_branch
        %267 = sbr.rel (%p264) target = $region12
      $region11: #{tpu_custom_call.1} parent=5 // pred_region
        %s268 = ssub.s32 %s25, 1
        // Predicated region
        $region13: #{tpu_custom_call.1} parent=11 // pred_check
          %p269 = pneg %p142
        $region14: #{tpu_custom_call.1} parent=11 // pred_check_branch
          %271 = sbr.rel (%p269) target = $region16
        $region15: #{tpu_custom_call.1} parent=11 // pred_region
          %s273 = ssub.s32 1024, 1024
          %274 = vsyncadd [#allocation10], %s273
          %s275 = sshll.u32 [#allocation9], 4
          %s276 = int_to_ptr.vmem [resolvable:$true] %s275
          %281 = dma.hbm_to_vmem [thread:$0]  %s3, 1024, %s276, [#allocation10], 64, 64, 4
        $region16: #{tpu_custom_call.1} parent=11 // pred_fallthru
          _
        // Predicated region
        $region17: #{tpu_custom_call.1} parent=11 // pred_check
          %p282 = pneg %p163
        $region18: #{tpu_custom_call.1} parent=11 // pred_check_branch
          %284 = sbr.rel (%p282) target = $region20
        $region19: #{tpu_custom_call.1} parent=11 // pred_region
          _
        $region20: #{tpu_custom_call.1} parent=11 // pred_fallthru
          _
        // Predicated region
        $region21: #{tpu_custom_call.1} parent=11 // pred_check
          %p285 = pneg %p184
        $region22: #{tpu_custom_call.1} parent=11 // pred_check_branch
          %287 = sbr.rel (%p285) target = $region24
        $region23: #{tpu_custom_call.1} parent=11 // pred_region
          %s289 = ssub.s32 9216, 9216
          %290 = vsyncadd [#allocation10], %s289
          %s291 = sshll.u32 [#allocation11], 4
          %s292 = int_to_ptr.vmem [resolvable:$true] %s291
          %297 = dma.hbm_to_vmem [thread:$0]  %s5, 9216, %s292, [#allocation10], 64, 64, 4
        $region24: #{tpu_custom_call.1} parent=11 // pred_fallthru
          _
        // Predicated region
        $region25: #{tpu_custom_call.1} parent=11 // pred_check
          %p298 = pneg %p205
        $region26: #{tpu_custom_call.1} parent=11 // pred_check_branch
          %300 = sbr.rel (%p298) target = $region28
        $region27: #{tpu_custom_call.1} parent=11 // pred_region
          %s302 = ssub.s32 1024, 1024
          %303 = vsyncadd [#allocation13], %s302
          %s304 = sshll.u32 [#allocation12], 4
          %s305 = int_to_ptr.vmem [resolvable:$true] %s304
          %310 = dma.hbm_to_vmem [thread:$0]  %s6, 1024, %s305, [#allocation13], 64, 64, 4
        $region28: #{tpu_custom_call.1} parent=11 // pred_fallthru
          _
        // Predicated region
        $region29: #{tpu_custom_call.1} parent=11 // pred_check
          %p311 = pneg %p226
        $region30: #{tpu_custom_call.1} parent=11 // pred_check_branch
          %313 = sbr.rel (%p311) target = $region32
        $region31: #{tpu_custom_call.1} parent=11 // pred_region
          _
        $region32: #{tpu_custom_call.1} parent=11 // pred_fallthru
          _
      $region12: #{tpu_custom_call.1} parent=5 // pred_fallthru
        _
      %p314 = scmp.lt.s32.totalorder %s25, 2
      // Predicated region
      $region33: #{tpu_custom_call.1} parent=5 // pred_check
        %p315 = pneg %p314
      $region34: #{tpu_custom_call.1} parent=5 // pred_check_branch
        %317 = sbr.rel (%p315) target = $region36
      $region35: #{tpu_custom_call.1} parent=5 // pred_region
        // Predicated region
        $region37: #{tpu_custom_call.1} parent=35 // pred_check
          %p318 = pneg %p59
        $region38: #{tpu_custom_call.1} parent=35 // pred_check_branch
          %320 = sbr.rel (%p318) target = $region40
        $region39: #{tpu_custom_call.1} parent=35 // pred_region
          %s321 = sand.u32 %s49, 1
          %s322 = scalar_lea.sflag [#allocation4], %s321
          %s323 = sand.u32 %s49, 1
          %s324 = smul.addr %s323, 128
          %s325 = scalar_lea.vmem [#allocation3], %s324
          %s326 = smul.u32 16, %s33
          %s328 = ssub.s32 2048, 2048
          %329 = vsyncadd %s322, %s328
          %s330 = smul.addr %s326, 2
          %s331 = smul.addr %s32, 32
          %s332 = sadd.s32 %s330, %s331
          %s333 = smul.addr %s332, 64
          %s334 = scalar_lea.hbm %s0, %s333
          %s335 = sshll.u32 %s325, 4
          %s336 = int_to_ptr.vmem [resolvable:$true] %s335
          %341 = dma.hbm_to_vmem [thread:$0]  %s334, 2048, %s336, %s322, 64, 64, 4
        $region40: #{tpu_custom_call.1} parent=35 // pred_fallthru
          _
        // Predicated region
        $region41: #{tpu_custom_call.1} parent=35 // pred_check
          %p342 = pneg %p87
        $region42: #{tpu_custom_call.1} parent=35 // pred_check_branch
          %344 = sbr.rel (%p342) target = $region44
        $region43: #{tpu_custom_call.1} parent=35 // pred_region
          %s345 = sand.u32 %s25, 1
          %s346 = scalar_lea.sflag [#allocation7], %s345
          %s347 = sand.u32 %s77, 1
          %s348 = smul.addr %s347, 8
          %s349 = scalar_lea.vmem [#allocation6], %s348
          %s351 = ssub.s32 128, 128
          %352 = vsyncadd %s346, %s351
          %s353 = smul.addr %s33, 2
          %s354 = smul.addr %s32, 2
          %s355 = sadd.s32 %s353, %s354
          %s356 = smul.addr %s355, 64
          %s357 = scalar_lea.hbm %s1, %s356
          %s358 = sshll.u32 %s349, 4
          %s359 = int_to_ptr.vmem [resolvable:$true] %s358
          %364 = dma.hbm_to_vmem [thread:$0]  %s357, 128, %s359, %s346, 64, 64, 4
        $region44: #{tpu_custom_call.1} parent=35 // pred_fallthru
          _
        // Predicated region
        $region45: #{tpu_custom_call.1} parent=35 // pred_check
          %p365 = pneg %p115
        $region46: #{tpu_custom_call.1} parent=35 // pred_check_branch
          %367 = sbr.rel (%p365) target = $region48
        $region47: #{tpu_custom_call.1} parent=35 // pred_region
          %s368 = sand.u32 %s25, 1
          %s369 = scalar_lea.sflag [#allocation7], %s368
          %s370 = sand.u32 %s105, 1
          %s371 = smul.addr %s370, 8
          %s372 = scalar_lea.vmem [#allocation8], %s371
          %s374 = ssub.s32 128, 128
          %375 = vsyncadd %s369, %s374
          %s376 = smul.addr %s33, 2
          %s377 = smul.addr %s32, 2
          %s378 = sadd.s32 %s376, %s377
          %s379 = smul.addr %s378, 64
          %s380 = scalar_lea.hbm %s2, %s379
          %s381 = sshll.u32 %s372, 4
          %s382 = int_to_ptr.vmem [resolvable:$true] %s381
          %387 = dma.hbm_to_vmem [thread:$0]  %s380, 128, %s382, %s369, 64, 64, 4
        $region48: #{tpu_custom_call.1} parent=35 // pred_fallthru
          _
      $region36: #{tpu_custom_call.1} parent=5 // pred_fallthru
        _
      %p388 = scmp.le.s32.totalorder 1, %s25
      %p389 = scmp.lt.s32.totalorder %s25, 3
      %p390 = pnand %p388, %p389
      %p391 = pneg %p390
      // Predicated region
      $region49: #{tpu_custom_call.1} parent=5 // pred_check
        _
      $region50: #{tpu_custom_call.1} parent=5 // pred_check_branch
        %393 = sbr.rel (%p390) target = $region52
      $region51: #{tpu_custom_call.1} parent=5 // pred_region
        %s394 = ssub.s32 %s25, 1
        %s395 = sand.u32 %s52, 1
        %s396 = scalar_lea.sflag [#allocation4], %s395
        %s397 = sand.u32 %s52, 1
        %s398 = smul.addr %s397, 128
        %s399 = scalar_lea.vmem [#allocation3], %s398
        // Predicated region
        $region53: #{tpu_custom_call.1} parent=51 // pred_check
          %p400 = pneg %p65
        $region54: #{tpu_custom_call.1} parent=51 // pred_check_branch
          %402 = sbr.rel (%p400) target = $region56
        $region55: #{tpu_custom_call.1} parent=51 // pred_region
          %403 = dma.done %s396, 2048
        $region56: #{tpu_custom_call.1} parent=51 // pred_fallthru
          _
        %s404 = sand.u32 %s30, 1
        %s405 = scalar_lea.sflag [#allocation7], %s404
        %s406 = sand.u32 %s80, 1
        %s407 = smul.addr %s406, 8
        %s408 = scalar_lea.vmem [#allocation6], %s407
        // Predicated region
        $region57: #{tpu_custom_call.1} parent=51 // pred_check
          %p409 = pneg %p93
        $region58: #{tpu_custom_call.1} parent=51 // pred_check_branch
          %411 = sbr.rel (%p409) target = $region60
        $region59: #{tpu_custom_call.1} parent=51 // pred_region
          %412 = dma.done %s405, 128
        $region60: #{tpu_custom_call.1} parent=51 // pred_fallthru
          _
        %s413 = sand.u32 %s30, 1
        %s414 = scalar_lea.sflag [#allocation7], %s413
        %s415 = sand.u32 %s108, 1
        %s416 = smul.addr %s415, 8
        %s417 = scalar_lea.vmem [#allocation8], %s416
        // Predicated region
        $region61: #{tpu_custom_call.1} parent=51 // pred_check
          %p418 = pneg %p121
        $region62: #{tpu_custom_call.1} parent=51 // pred_check_branch
          %420 = sbr.rel (%p418) target = $region64
        $region63: #{tpu_custom_call.1} parent=51 // pred_region
          %421 = dma.done %s414, 128
        $region64: #{tpu_custom_call.1} parent=51 // pred_fallthru
          _
        // Predicated region
        $region65: #{tpu_custom_call.1} parent=51 // pred_check
          %p422 = pneg %p142
        $region66: #{tpu_custom_call.1} parent=51 // pred_check_branch
          %424 = sbr.rel (%p422) target = $region68
        $region67: #{tpu_custom_call.1} parent=51 // pred_region
          %425 = dma.done [#allocation10], 1024
        $region68: #{tpu_custom_call.1} parent=51 // pred_fallthru
          _
        // Predicated region
        $region69: #{tpu_custom_call.1} parent=51 // pred_check
          %p426 = pneg %p184
        $region70: #{tpu_custom_call.1} parent=51 // pred_check_branch
          %428 = sbr.rel (%p426) target = $region72
        $region71: #{tpu_custom_call.1} parent=51 // pred_region
          %429 = dma.done [#allocation10], 9216
        $region72: #{tpu_custom_call.1} parent=51 // pred_fallthru
          _
        // Predicated region
        $region73: #{tpu_custom_call.1} parent=51 // pred_check
          %p430 = pneg %p205
        $region74: #{tpu_custom_call.1} parent=51 // pred_check_branch
          %432 = sbr.rel (%p430) target = $region76
        $region75: #{tpu_custom_call.1} parent=51 // pred_region
          %433 = dma.done [#allocation13], 1024
        $region76: #{tpu_custom_call.1} parent=51 // pred_fallthru
          _
        %s434 = sand.u32 %s52, 1
        %s435 = scalar_lea.sflag [#allocation4], %s434
        %s436 = sand.u32 %s52, 1
        %s437 = smul.addr %s436, 128
        %s438 = scalar_lea.vmem [#allocation3], %s437
        %p439 = pneg %p65
        %p440 = pneg %p62
        %s441 = sand.u32 %s30, 1
        %s442 = scalar_lea.sflag [#allocation7], %s441
        %s443 = sand.u32 %s80, 1
        %s444 = smul.addr %s443, 8
        %s445 = scalar_lea.vmem [#allocation6], %s444
        %p446 = pneg %p93
        %p447 = pneg %p90
        %s448 = sand.u32 %s30, 1
        %s449 = scalar_lea.sflag [#allocation7], %s448
        %s450 = sand.u32 %s108, 1
        %s451 = smul.addr %s450, 8
        %s452 = scalar_lea.vmem [#allocation8], %s451
        %p453 = pneg %p121
        %p454 = pneg %p118
        %p455 = pneg %p142
        %p456 = pneg %p139
        %p457 = pneg %p163
        %p458 = pneg %p160
        %p459 = pneg %p184
        %p460 = pneg %p181
        %p461 = pneg %p205
        %p462 = pneg %p202
        %p463 = pneg %p226
        %p464 = pneg %p223
        %p465 = pneg %p254
        %p466 = pneg %p251
        %s467 = sand.u32 %s241, 1
        %s468 = scalar_lea.sflag [#allocation5], %s467
        %s469 = sand.u32 %s241, 1
        %s470 = smul.addr %s469, 256
        %s471 = scalar_lea.vmem [#allocation14], %s470
        %s472 = smul.u32 16, %s35
        %s473 = smul.u32 16, %s35
        %p475 = scmp.eq.s32.totalorder %s35, 0
        // Predicated region
        $region77: #{tpu_custom_call.1} parent=51 // pred_check
          %p476 = pneg %p475
        $region78: #{tpu_custom_call.1} parent=51 // pred_check_branch
          %478 = sbr.rel (%p476) target = $region80
        $region79: #{tpu_custom_call.1} parent=51 // pred_region
          %479 = vst [vmem:[#allocation2] sm:$0xf] 0
          %480 = vst [vmem:[#allocation2 + $0x10] sm:$0xf] 0
          %481 = vst [vmem:[#allocation2 + $0x20] sm:$0xf] 0
          %482 = vst [vmem:[#allocation2 + $0x30] sm:$0xf] 0
          %483 = vst [vmem:[#allocation2 + $0x40] sm:$0xf] 0
          %484 = vst [vmem:[#allocation2 + $0x50] sm:$0xf] 0
          %485 = vst [vmem:[#allocation2 + $0x60] sm:$0xf] 0
          %486 = vst [vmem:[#allocation2 + $0x70] sm:$0xf] 0
          %487 = vst [vmem:[#allocation2 + $0x80] sm:$0xf] 0
          %488 = vst [vmem:[#allocation2 + $0x90] sm:$0xf] 0
          %489 = vst [vmem:[#allocation2 + $0xa0] sm:$0xf] 0
          %490 = vst [vmem:[#allocation2 + $0xb0] sm:$0xf] 0
          %491 = vst [vmem:[#allocation2 + $0xc0] sm:$0xf] 0
          %492 = vst [vmem:[#allocation2 + $0xd0] sm:$0xf] 0
          %493 = vst [vmem:[#allocation2 + $0xe0] sm:$0xf] 0
          %494 = vst [vmem:[#allocation2 + $0xf0] sm:$0xf] 0
          %495 = vst [vmem:[#allocation2 + $0x100] sm:$0xf] 0
          %496 = vst [vmem:[#allocation2 + $0x110] sm:$0xf] 0
          %497 = vst [vmem:[#allocation2 + $0x8] sm:$0xf0] 0
          %498 = vst [vmem:[#allocation2 + $0x18] sm:$0xf0] 0
          %499 = vst [vmem:[#allocation2 + $0x28] sm:$0xf0] 0
          %500 = vst [vmem:[#allocation2 + $0x38] sm:$0xf0] 0
          %501 = vst [vmem:[#allocation2 + $0x48] sm:$0xf0] 0
          %502 = vst [vmem:[#allocation2 + $0x58] sm:$0xf0] 0
          %503 = vst [vmem:[#allocation2 + $0x68] sm:$0xf0] 0
          %504 = vst [vmem:[#allocation2 + $0x78] sm:$0xf0] 0
          %505 = vst [vmem:[#allocation2 + $0x88] sm:$0xf0] 0
          %506 = vst [vmem:[#allocation2 + $0x98] sm:$0xf0] 0
          %507 = vst [vmem:[#allocation2 + $0xa8] sm:$0xf0] 0
          %508 = vst [vmem:[#allocation2 + $0xb8] sm:$0xf0] 0
          %509 = vst [vmem:[#allocation2 + $0xc8] sm:$0xf0] 0
          %510 = vst [vmem:[#allocation2 + $0xd8] sm:$0xf0] 0
          %511 = vst [vmem:[#allocation2 + $0xe8] sm:$0xf0] 0
          %512 = vst [vmem:[#allocation2 + $0xf8] sm:$0xf0] 0
          %513 = vst [vmem:[#allocation2 + $0x108] sm:$0xf0] 0
          %514 = vst [vmem:[#allocation2 + $0x118] sm:$0xf0] 0
        $region80: #{tpu_custom_call.1} parent=51 // pred_fallthru
          _
        %v515 = vld [vmem:[%s4] sm:$0x1]
        %p516 = scmp.gt.s32.totalorder %s35, 0
        %s517 = scalar_select %p516, 1, 0
        %s518 = scvt.s32.f32 %s517
        %s519 = sadd.s32 %s35, 1
        %p520 = scmp.lt.s32.totalorder %s519, 1
        %s521 = scalar_select %p520, 1, 0
        %s522 = scvt.s32.f32 %s521
        %v523 = vld [vmem:[#allocation9] sm:$0xf]
        %v524 = vld [vmem:[#allocation9 + $0x4] sm:$0xf]
        %v525 = vld [vmem:[#allocation9 + $0x8] sm:$0xf]
        %v526 = vld [vmem:[#allocation9 + $0xc] sm:$0xf]
        %v527 = vld [vmem:[#allocation9 + $0x10] sm:$0xf]
        %v528 = vld [vmem:[#allocation9 + $0x14] sm:$0xf]
        %v529 = vld [vmem:[#allocation9 + $0x18] sm:$0xf]
        %v530 = vld [vmem:[#allocation9 + $0x1c] sm:$0xf]
        %v531 = vld [vmem:[#allocation9 + $0x20] sm:$0xf]
        %v532 = vld [vmem:[#allocation9 + $0x24] sm:$0xf]
        %v533 = vld [vmem:[#allocation9 + $0x28] sm:$0xf]
        %v534 = vld [vmem:[#allocation9 + $0x2c] sm:$0xf]
        %v535 = vld [vmem:[#allocation9 + $0x30] sm:$0xf]
        %v536 = vld [vmem:[#allocation9 + $0x34] sm:$0xf]
        %v537 = vld [vmem:[#allocation9 + $0x38] sm:$0xf]
        %v538 = vld [vmem:[#allocation9 + $0x3c] sm:$0xf]
        %v539 = vld [vmem:[%s408] sm:$0xf]
        %v540 = vld [vmem:[%s408 + $0x4] sm:$0xf]
        %v542 = vlaneseq
        %v543 = vshrl.u32 %v542, 7
        %v544 = vsub.s32 0, %v543
        %v545 = vrot.slane %v515, %v544
        %v549 = vunpack.c.l.b16 %v539
        %v550 = vunpack.c.l.b16 %v540
        %v551 = vpack.c.b16 %v550, %v549
        %v569 = vunpack.c.l.b16 %v523
        %v570 = vunpack.c.l.b16 %v524
        %v571 = vunpack.c.l.b16 %v525
        %v572 = vunpack.c.l.b16 %v526
        %v573 = vunpack.c.l.b16 %v527
        %v574 = vunpack.c.l.b16 %v528
        %v575 = vunpack.c.l.b16 %v529
        %v576 = vunpack.c.l.b16 %v530
        %v577 = vunpack.c.l.b16 %v531
        %v578 = vunpack.c.l.b16 %v532
        %v579 = vunpack.c.l.b16 %v533
        %v580 = vunpack.c.l.b16 %v534
        %v581 = vunpack.c.l.b16 %v535
        %v582 = vunpack.c.l.b16 %v536
        %v583 = vunpack.c.l.b16 %v537
        %v584 = vunpack.c.l.b16 %v538
        %v585 = vpack.c.b16 %v570, %v569
        %v586 = vpack.c.b16 %v572, %v571
        %v587 = vpack.c.b16 %v574, %v573
        %v588 = vpack.c.b16 %v576, %v575
        %v589 = vpack.c.b16 %v578, %v577
        %v590 = vpack.c.b16 %v580, %v579
        %v591 = vpack.c.b16 %v582, %v581
        %v592 = vpack.c.b16 %v584, %v583
        %601 = vmatprep.subr.bf16.mxu0 0
        %602 = vmatpush1.bf16.msra.mxu0 %v585
        %603 = vmatprep.subr.bf16.mxu0 0
        %604 = vmatpush1.bf16.msra.mxu0 %v586
        %605 = vmatprep.subr.bf16.mxu0 0
        %606 = vmatpush1.bf16.msra.mxu0 %v587
        %607 = vmatprep.subr.bf16.mxu0 0
        %608 = vmatpush1.bf16.msra.mxu0 %v588
        %609 = vmatprep.subr.bf16.mxu0 0
        %610 = vmatpush1.bf16.msra.mxu0 %v589
        %611 = vmatprep.subr.bf16.mxu0 0
        %612 = vmatpush1.bf16.msra.mxu0 %v590
        %613 = vmatprep.subr.bf16.mxu0 0
        %614 = vmatpush1.bf16.msra.mxu0 %v591
        %615 = vmatprep.subr.bf16.mxu0 0
        %616 = vmatpush1.bf16.msra.mxu0 %v592
        %617 = vmatprep.subr.bf16.mxu0 0
        %618 = vmatpush1.bf16.msra.mxu0 0
        %619 = vmatprep.subr.bf16.mxu0 0
        %620 = vmatpush1.bf16.msra.mxu0 0
        %621 = vmatprep.subr.bf16.mxu0 0
        %622 = vmatpush1.bf16.msra.mxu0 0
        %623 = vmatprep.subr.bf16.mxu0 0
        %624 = vmatpush1.bf16.msra.mxu0 0
        %625 = vmatprep.subr.bf16.mxu0 0
        %626 = vmatpush1.bf16.msra.mxu0 0
        %627 = vmatprep.subr.bf16.mxu0 0
        %628 = vmatpush1.bf16.msra.mxu0 0
        %629 = vmatprep.subr.bf16.mxu0 0
        %630 = vmatpush1.bf16.msra.mxu0 0
        %631 = vmatprep.subr.bf16.mxu0 0
        %632 = vmatpush1.bf16.msra.mxu0 0
        %633 = vmatprep.mubr.bf16.mxu0 0
        %634 = vmatmul.mubr.bf16.gmra.mrb[0].mxu0 %v551
        %v635 = vpop.f32.mrb[0].mxu0
        %v636 = vadd.f32 %v545, %v635
        %v637 = vpop.f32.mrb[0].mxu0
        %v638 = vpop.f32.mrb[0].mxu0
        %v639 = vadd.f32 %v545, %v638
        %v640 = vpop.f32.mrb[0].mxu0
        %641 = vdwg.mxu0
        %v642 = vstv %s518
        %v643 = vmul.f32 %v636, %v642
        %v644 = vmul.f32 %v639, %v642
        %v645 = vpack.c.bf16 %v644, %v643
        %v647 = vrot.slane %v645, 4
        %649 = vst [vmem:[#allocation2] sm:$0xf0] %v647
        %650 = vst [vmem:[#allocation2 + $0x8] sm:$0xf] %v647
        %v651 = vld [vmem:[%s399] sm:$0xf]
        %v652 = vld [vmem:[%s399 + $0x4] sm:$0xf]
        %v653 = vld [vmem:[%s399 + $0x8] sm:$0xf]
        %v654 = vld [vmem:[%s399 + $0xc] sm:$0xf]
        %v655 = vld [vmem:[%s399 + $0x10] sm:$0xf]
        %v656 = vld [vmem:[%s399 + $0x14] sm:$0xf]
        %v657 = vld [vmem:[%s399 + $0x18] sm:$0xf]
        %v658 = vld [vmem:[%s399 + $0x1c] sm:$0xf]
        %v659 = vld [vmem:[%s399 + $0x20] sm:$0xf]
        %v660 = vld [vmem:[%s399 + $0x24] sm:$0xf]
        %v661 = vld [vmem:[%s399 + $0x28] sm:$0xf]
        %v662 = vld [vmem:[%s399 + $0x2c] sm:$0xf]
        %v663 = vld [vmem:[%s399 + $0x30] sm:$0xf]
        %v664 = vld [vmem:[%s399 + $0x34] sm:$0xf]
        %v665 = vld [vmem:[%s399 + $0x38] sm:$0xf]
        %v666 = vld [vmem:[%s399 + $0x3c] sm:$0xf]
        %v667 = vld [vmem:[%s399 + $0x40] sm:$0xf]
        %v668 = vld [vmem:[%s399 + $0x44] sm:$0xf]
        %v669 = vld [vmem:[%s399 + $0x48] sm:$0xf]
        %v670 = vld [vmem:[%s399 + $0x4c] sm:$0xf]
        %v671 = vld [vmem:[%s399 + $0x50] sm:$0xf]
        %v672 = vld [vmem:[%s399 + $0x54] sm:$0xf]
        %v673 = vld [vmem:[%s399 + $0x58] sm:$0xf]
        %v674 = vld [vmem:[%s399 + $0x5c] sm:$0xf]
        %v675 = vld [vmem:[%s399 + $0x60] sm:$0xf]
        %v676 = vld [vmem:[%s399 + $0x64] sm:$0xf]
        %v677 = vld [vmem:[%s399 + $0x68] sm:$0xf]
        %v678 = vld [vmem:[%s399 + $0x6c] sm:$0xf]
        %v679 = vld [vmem:[%s399 + $0x70] sm:$0xf]
        %v680 = vld [vmem:[%s399 + $0x74] sm:$0xf]
        %v681 = vld [vmem:[%s399 + $0x78] sm:$0xf]
        %v682 = vld [vmem:[%s399 + $0x7c] sm:$0xf]
        %v715 = vunpack.c.l.b16 %v651
        %v716 = vunpack.c.l.b16 %v652
        %v717 = vunpack.c.l.b16 %v653
        %v718 = vunpack.c.l.b16 %v654
        %v719 = vunpack.c.l.b16 %v655
        %v720 = vunpack.c.l.b16 %v656
        %v721 = vunpack.c.l.b16 %v657
        %v722 = vunpack.c.l.b16 %v658
        %v723 = vunpack.c.l.b16 %v659
        %v724 = vunpack.c.l.b16 %v660
        %v725 = vunpack.c.l.b16 %v661
        %v726 = vunpack.c.l.b16 %v662
        %v727 = vunpack.c.l.b16 %v663
        %v728 = vunpack.c.l.b16 %v664
        %v729 = vunpack.c.l.b16 %v665
        %v730 = vunpack.c.l.b16 %v666
        %v731 = vunpack.c.l.b16 %v667
        %v732 = vunpack.c.l.b16 %v668
        %v733 = vunpack.c.l.b16 %v669
        %v734 = vunpack.c.l.b16 %v670
        %v735 = vunpack.c.l.b16 %v671
        %v736 = vunpack.c.l.b16 %v672
        %v737 = vunpack.c.l.b16 %v673
        %v738 = vunpack.c.l.b16 %v674
        %v739 = vunpack.c.l.b16 %v675
        %v740 = vunpack.c.l.b16 %v676
        %v741 = vunpack.c.l.b16 %v677
        %v742 = vunpack.c.l.b16 %v678
        %v743 = vunpack.c.l.b16 %v679
        %v744 = vunpack.c.l.b16 %v680
        %v745 = vunpack.c.l.b16 %v681
        %v746 = vunpack.c.l.b16 %v682
        %v747 = vpack.c.b16 %v716, %v715
        %v748 = vpack.c.b16 %v718, %v717
        %v749 = vpack.c.b16 %v720, %v719
        %v750 = vpack.c.b16 %v722, %v721
        %v751 = vpack.c.b16 %v724, %v723
        %v752 = vpack.c.b16 %v726, %v725
        %v753 = vpack.c.b16 %v728, %v727
        %v754 = vpack.c.b16 %v730, %v729
        %v755 = vpack.c.b16 %v732, %v731
        %v756 = vpack.c.b16 %v734, %v733
        %v757 = vpack.c.b16 %v736, %v735
        %v758 = vpack.c.b16 %v738, %v737
        %v759 = vpack.c.b16 %v740, %v739
        %v760 = vpack.c.b16 %v742, %v741
        %v761 = vpack.c.b16 %v744, %v743
        %v762 = vpack.c.b16 %v746, %v745
        %779 = vmatprep.subr.bf16.mxu0 0
        %780 = vmatpush1.bf16.msra.mxu0 %v585
        %781 = vmatprep.subr.bf16.mxu0 0
        %782 = vmatpush1.bf16.msra.mxu0 %v586
        %783 = vmatprep.subr.bf16.mxu0 0
        %784 = vmatpush1.bf16.msra.mxu0 %v587
        %785 = vmatprep.subr.bf16.mxu0 0
        %786 = vmatpush1.bf16.msra.mxu0 %v588
        %787 = vmatprep.subr.bf16.mxu0 0
        %788 = vmatpush1.bf16.msra.mxu0 %v589
        %789 = vmatprep.subr.bf16.mxu0 0
        %790 = vmatpush1.bf16.msra.mxu0 %v590
        %791 = vmatprep.subr.bf16.mxu0 0
        %792 = vmatpush1.bf16.msra.mxu0 %v591
        %793 = vmatprep.subr.bf16.mxu0 0
        %794 = vmatpush1.bf16.msra.mxu0 %v592
        %795 = vmatprep.subr.bf16.mxu0 0
        %796 = vmatpush1.bf16.msra.mxu0 0
        %797 = vmatprep.subr.bf16.mxu0 0
        %798 = vmatpush1.bf16.msra.mxu0 0
        %799 = vmatprep.subr.bf16.mxu0 0
        %800 = vmatpush1.bf16.msra.mxu0 0
        %801 = vmatprep.subr.bf16.mxu0 0
        %802 = vmatpush1.bf16.msra.mxu0 0
        %803 = vmatprep.subr.bf16.mxu0 0
        %804 = vmatpush1.bf16.msra.mxu0 0
        %805 = vmatprep.subr.bf16.mxu0 0
        %806 = vmatpush1.bf16.msra.mxu0 0
        %807 = vmatprep.subr.bf16.mxu0 0
        %808 = vmatpush1.bf16.msra.mxu0 0
        %809 = vmatprep.subr.bf16.mxu0 0
        %810 = vmatpush1.bf16.msra.mxu0 0
        %811 = vmatprep.mubr.bf16.mxu0 0
        %812 = vmatmul.mubr.bf16.gmra.mrb[0].mxu0 %v747
        %v813 = vpop.f32.mrb[0].mxu0
        %v814 = vadd.f32 %v545, %v813
        %v815 = vpop.f32.mrb[0].mxu0
        %v816 = vpop.f32.mrb[0].mxu0
        %v817 = vadd.f32 %v545, %v816
        %v818 = vpop.f32.mrb[0].mxu0
        %819 = vmatprep.mubr.bf16.mxu0 0
        %820 = vmatmul.mubr.bf16.gmra.mrb[0].mxu0 %v748
        %v821 = vpop.f32.mrb[0].mxu0
        %v822 = vadd.f32 %v545, %v821
        %v823 = vpop.f32.mrb[0].mxu0
        %v824 = vpop.f32.mrb[0].mxu0
        %v825 = vadd.f32 %v545, %v824
        %v826 = vpop.f32.mrb[0].mxu0
        %827 = vmatprep.mubr.bf16.mxu0 0
        %828 = vmatmul.mubr.bf16.gmra.mrb[0].mxu0 %v749
        %v829 = vpop.f32.mrb[0].mxu0
        %v830 = vadd.f32 %v545, %v829
        %v831 = vpop.f32.mrb[0].mxu0
        %v832 = vpop.f32.mrb[0].mxu0
        %v833 = vadd.f32 %v545, %v832
        %v834 = vpop.f32.mrb[0].mxu0
        %835 = vmatprep.mubr.bf16.mxu0 0
        %836 = vmatmul.mubr.bf16.gmra.mrb[0].mxu0 %v750
        %v837 = vpop.f32.mrb[0].mxu0
        %v838 = vadd.f32 %v545, %v837
        %v839 = vpop.f32.mrb[0].mxu0
        %v840 = vpop.f32.mrb[0].mxu0
        %v841 = vadd.f32 %v545, %v840
        %v842 = vpop.f32.mrb[0].mxu0
        %843 = vmatprep.mubr.bf16.mxu0 0
        %844 = vmatmul.mubr.bf16.gmra.mrb[0].mxu0 %v751
        %v845 = vpop.f32.mrb[0].mxu0
        %v846 = vadd.f32 %v545, %v845
        %v847 = vpop.f32.mrb[0].mxu0
        %v848 = vpop.f32.mrb[0].mxu0
        %v849 = vadd.f32 %v545, %v848
        %v850 = vpop.f32.mrb[0].mxu0
        %851 = vmatprep.mubr.bf16.mxu0 0
        %852 = vmatmul.mubr.bf16.gmra.mrb[0].mxu0 %v752
        %v853 = vpop.f32.mrb[0].mxu0
        %v854 = vadd.f32 %v545, %v853
        %v855 = vpop.f32.mrb[0].mxu0
        %v856 = vpop.f32.mrb[0].mxu0
        %v857 = vadd.f32 %v545, %v856
        %v858 = vpop.f32.mrb[0].mxu0
        %859 = vmatprep.mubr.bf16.mxu0 0
        %860 = vmatmul.mubr.bf16.gmra.mrb[0].mxu0 %v753
        %v861 = vpop.f32.mrb[0].mxu0
        %v862 = vadd.f32 %v545, %v861
        %v863 = vpop.f32.mrb[0].mxu0
        %v864 = vpop.f32.mrb[0].mxu0
        %v865 = vadd.f32 %v545, %v864
        %v866 = vpop.f32.mrb[0].mxu0
        %867 = vmatprep.mubr.bf16.mxu0 0
        %868 = vmatmul.mubr.bf16.gmra.mrb[0].mxu0 %v754
        %v869 = vpop.f32.mrb[0].mxu0
        %v870 = vadd.f32 %v545, %v869
        %v871 = vpop.f32.mrb[0].mxu0
        %v872 = vpop.f32.mrb[0].mxu0
        %v873 = vadd.f32 %v545, %v872
        %v874 = vpop.f32.mrb[0].mxu0
        %875 = vmatprep.mubr.bf16.mxu0 0
        %876 = vmatmul.mubr.bf16.gmra.mrb[0].mxu0 %v755
        %v877 = vpop.f32.mrb[0].mxu0
        %v878 = vadd.f32 %v545, %v877
        %v879 = vpop.f32.mrb[0].mxu0
        %v880 = vpop.f32.mrb[0].mxu0
        %v881 = vadd.f32 %v545, %v880
        %v882 = vpop.f32.mrb[0].mxu0
        %883 = vmatprep.mubr.bf16.mxu0 0
        %884 = vmatmul.mubr.bf16.gmra.mrb[0].mxu0 %v756
        %v885 = vpop.f32.mrb[0].mxu0
        %v886 = vadd.f32 %v545, %v885
        %v887 = vpop.f32.mrb[0].mxu0
        %v888 = vpop.f32.mrb[0].mxu0
        %v889 = vadd.f32 %v545, %v888
        %v890 = vpop.f32.mrb[0].mxu0
        %891 = vmatprep.mubr.bf16.mxu0 0
        %892 = vmatmul.mubr.bf16.gmra.mrb[0].mxu0 %v757
        %v893 = vpop.f32.mrb[0].mxu0
        %v894 = vadd.f32 %v545, %v893
        %v895 = vpop.f32.mrb[0].mxu0
        %v896 = vpop.f32.mrb[0].mxu0
        %v897 = vadd.f32 %v545, %v896
        %v898 = vpop.f32.mrb[0].mxu0
        %899 = vmatprep.mubr.bf16.mxu0 0
        %900 = vmatmul.mubr.bf16.gmra.mrb[0].mxu0 %v758
        %v901 = vpop.f32.mrb[0].mxu0
        %v902 = vadd.f32 %v545, %v901
        %v903 = vpop.f32.mrb[0].mxu0
        %v904 = vpop.f32.mrb[0].mxu0
        %v905 = vadd.f32 %v545, %v904
        %v906 = vpop.f32.mrb[0].mxu0
        %907 = vmatprep.mubr.bf16.mxu0 0
        %908 = vmatmul.mubr.bf16.gmra.mrb[0].mxu0 %v759
        %v909 = vpop.f32.mrb[0].mxu0
        %v910 = vadd.f32 %v545, %v909
        %v911 = vpop.f32.mrb[0].mxu0
        %v912 = vpop.f32.mrb[0].mxu0
        %v913 = vadd.f32 %v545, %v912
        %v914 = vpop.f32.mrb[0].mxu0
        %915 = vmatprep.mubr.bf16.mxu0 0
        %916 = vmatmul.mubr.bf16.gmra.mrb[0].mxu0 %v760
        %v917 = vpop.f32.mrb[0].mxu0
        %v918 = vadd.f32 %v545, %v917
        %v919 = vpop.f32.mrb[0].mxu0
        %v920 = vpop.f32.mrb[0].mxu0
        %v921 = vadd.f32 %v545, %v920
        %v922 = vpop.f32.mrb[0].mxu0
        %923 = vmatprep.mubr.bf16.mxu0 0
        %924 = vmatmul.mubr.bf16.gmra.mrb[0].mxu0 %v761
        %v925 = vpop.f32.mrb[0].mxu0
        %v926 = vadd.f32 %v545, %v925
        %v927 = vpop.f32.mrb[0].mxu0
        %v928 = vpop.f32.mrb[0].mxu0
        %v929 = vadd.f32 %v545, %v928
        %v930 = vpop.f32.mrb[0].mxu0
        %931 = vmatprep.mubr.bf16.mxu0 0
        %932 = vmatmul.mubr.bf16.gmra.mrb[0].mxu0 %v762
        %v933 = vpop.f32.mrb[0].mxu0
        %v934 = vadd.f32 %v545, %v933
        %v935 = vpop.f32.mrb[0].mxu0
        %v936 = vpop.f32.mrb[0].mxu0
        %v937 = vadd.f32 %v545, %v936
        %v938 = vpop.f32.mrb[0].mxu0
        %939 = vdwg.mxu0
        %v940 = vpack.c.bf16 %v817, %v814
        %v941 = vpack.c.bf16 %v825, %v822
        %v942 = vpack.c.bf16 %v833, %v830
        %v943 = vpack.c.bf16 %v841, %v838
        %v944 = vpack.c.bf16 %v849, %v846
        %v945 = vpack.c.bf16 %v857, %v854
        %v946 = vpack.c.bf16 %v865, %v862
        %v947 = vpack.c.bf16 %v873, %v870
        %v948 = vpack.c.bf16 %v881, %v878
        %v949 = vpack.c.bf16 %v889, %v886
        %v950 = vpack.c.bf16 %v897, %v894
        %v951 = vpack.c.bf16 %v905, %v902
        %v952 = vpack.c.bf16 %v913, %v910
        %v953 = vpack.c.bf16 %v921, %v918
        %v954 = vpack.c.bf16 %v929, %v926
        %v955 = vpack.c.bf16 %v937, %v934
        %v972 = vrot.slane %v940, 4
        %v973 = vrot.slane %v941, 4
        %v974 = vrot.slane %v942, 4
        %v975 = vrot.slane %v943, 4
        %v976 = vrot.slane %v944, 4
        %v977 = vrot.slane %v945, 4
        %v978 = vrot.slane %v946, 4
        %v979 = vrot.slane %v947, 4
        %v980 = vrot.slane %v948, 4
        %v981 = vrot.slane %v949, 4
        %v982 = vrot.slane %v950, 4
        %v983 = vrot.slane %v951, 4
        %v984 = vrot.slane %v952, 4
        %v985 = vrot.slane %v953, 4
        %v986 = vrot.slane %v954, 4
        %v987 = vrot.slane %v955, 4
        %s1004 = scalar_lea.vmem [#allocation2], 16
        %1005 = vst [vmem:[%s1004] sm:$0xf0] %v972
        %1006 = vst [vmem:[%s1004 + $0x8] sm:$0xf] %v972
        %1007 = vst [vmem:[%s1004 + $0x10] sm:$0xf0] %v973
        %1008 = vst [vmem:[%s1004 + $0x18] sm:$0xf] %v973
        %1009 = vst [vmem:[%s1004 + $0x20] sm:$0xf0] %v974
        %1010 = vst [vmem:[%s1004 + $0x28] sm:$0xf] %v974
        %1011 = vst [vmem:[%s1004 + $0x30] sm:$0xf0] %v975
        %1012 = vst [vmem:[%s1004 + $0x38] sm:$0xf] %v975
        %1013 = vst [vmem:[%s1004 + $0x40] sm:$0xf0] %v976
        %1014 = vst [vmem:[%s1004 + $0x48] sm:$0xf] %v976
        %1015 = vst [vmem:[%s1004 + $0x50] sm:$0xf0] %v977
        %1016 = vst [vmem:[%s1004 + $0x58] sm:$0xf] %v977
        %1017 = vst [vmem:[%s1004 + $0x60] sm:$0xf0] %v978
        %1018 = vst [vmem:[%s1004 + $0x68] sm:$0xf] %v978
        %1019 = vst [vmem:[%s1004 + $0x70] sm:$0xf0] %v979
        %1020 = vst [vmem:[%s1004 + $0x78] sm:$0xf] %v979
        %1021 = vst [vmem:[%s1004 + $0x80] sm:$0xf0] %v980
        %1022 = vst [vmem:[%s1004 + $0x88] sm:$0xf] %v980
        %1023 = vst [vmem:[%s1004 + $0x90] sm:$0xf0] %v981
        %1024 = vst [vmem:[%s1004 + $0x98] sm:$0xf] %v981
        %1025 = vst [vmem:[%s1004 + $0xa0] sm:$0xf0] %v982
        %1026 = vst [vmem:[%s1004 + $0xa8] sm:$0xf] %v982
        %1027 = vst [vmem:[%s1004 + $0xb0] sm:$0xf0] %v983
        %1028 = vst [vmem:[%s1004 + $0xb8] sm:$0xf] %v983
        %1029 = vst [vmem:[%s1004 + $0xc0] sm:$0xf0] %v984
        %1030 = vst [vmem:[%s1004 + $0xc8] sm:$0xf] %v984
        %1031 = vst [vmem:[%s1004 + $0xd0] sm:$0xf0] %v985
        %1032 = vst [vmem:[%s1004 + $0xd8] sm:$0xf] %v985
        %1033 = vst [vmem:[%s1004 + $0xe0] sm:$0xf0] %v986
        %1034 = vst [vmem:[%s1004 + $0xe8] sm:$0xf] %v986
        %1035 = vst [vmem:[%s1004 + $0xf0] sm:$0xf0] %v987
        %1036 = vst [vmem:[%s1004 + $0xf8] sm:$0xf] %v987
        %v1037 = vld [vmem:[%s417] sm:$0xf]
        %v1038 = vld [vmem:[%s417 + $0x4] sm:$0xf]
        %v1041 = vunpack.c.l.b16 %v1037
        %v1042 = vunpack.c.l.b16 %v1038
        %v1043 = vpack.c.b16 %v1042, %v1041
        %1045 = vmatprep.subr.bf16.mxu0 0
        %1046 = vmatpush1.bf16.msra.mxu0 %v585
        %1047 = vmatprep.subr.bf16.mxu0 0
        %1048 = vmatpush1.bf16.msra.mxu0 %v586
        %1049 = vmatprep.subr.bf16.mxu0 0
        %1050 = vmatpush1.bf16.msra.mxu0 %v587
        %1051 = vmatprep.subr.bf16.mxu0 0
        %1052 = vmatpush1.bf16.msra.mxu0 %v588
        %1053 = vmatprep.subr.bf16.mxu0 0
        %1054 = vmatpush1.bf16.msra.mxu0 %v589
        %1055 = vmatprep.subr.bf16.mxu0 0
        %1056 = vmatpush1.bf16.msra.mxu0 %v590
        %1057 = vmatprep.subr.bf16.mxu0 0
        %1058 = vmatpush1.bf16.msra.mxu0 %v591
        %1059 = vmatprep.subr.bf16.mxu0 0
        %1060 = vmatpush1.bf16.msra.mxu0 %v592
        %1061 = vmatprep.subr.bf16.mxu0 0
        %1062 = vmatpush1.bf16.msra.mxu0 0
        %1063 = vmatprep.subr.bf16.mxu0 0
        %1064 = vmatpush1.bf16.msra.mxu0 0
        %1065 = vmatprep.subr.bf16.mxu0 0
        %1066 = vmatpush1.bf16.msra.mxu0 0
        %1067 = vmatprep.subr.bf16.mxu0 0
        %1068 = vmatpush1.bf16.msra.mxu0 0
        %1069 = vmatprep.subr.bf16.mxu0 0
        %1070 = vmatpush1.bf16.msra.mxu0 0
        %1071 = vmatprep.subr.bf16.mxu0 0
        %1072 = vmatpush1.bf16.msra.mxu0 0
        %1073 = vmatprep.subr.bf16.mxu0 0
        %1074 = vmatpush1.bf16.msra.mxu0 0
        %1075 = vmatprep.subr.bf16.mxu0 0
        %1076 = vmatpush1.bf16.msra.mxu0 0
        %1077 = vmatprep.mubr.bf16.mxu0 0
        %1078 = vmatmul.mubr.bf16.gmra.mrb[0].mxu0 %v1043
        %v1079 = vpop.f32.mrb[0].mxu0
        %v1080 = vadd.f32 %v545, %v1079
        %v1081 = vpop.f32.mrb[0].mxu0
        %v1082 = vpop.f32.mrb[0].mxu0
        %v1083 = vadd.f32 %v545, %v1082
        %v1084 = vpop.f32.mrb[0].mxu0
        %1085 = vdwg.mxu0
        %v1086 = vstv %s522
        %v1087 = vmul.f32 %v1080, %v1086
        %v1088 = vmul.f32 %v1083, %v1086
        %v1089 = vpack.c.bf16 %v1088, %v1087
        %v1091 = vrot.slane %v1089, 4
        %s1093 = scalar_lea.vmem [#allocation2], 272
        %1094 = vst [vmem:[%s1093] sm:$0xf0] %v1091
        %1095 = vst [vmem:[%s1093 + $0x8] sm:$0xf] %v1091
        %v1096 = vld [vmem:[#allocation2] sm:$0xf8]
        %v1097 = vld [vmem:[#allocation2 + $0x8] sm:$0xf]
        %v1098 = vld [vmem:[#allocation2 + $0x10] sm:$0xf8]
        %v1099 = vld [vmem:[#allocation2 + $0x18] sm:$0xf]
        %v1100 = vld [vmem:[#allocation2 + $0x20] sm:$0xf8]
        %v1101 = vld [vmem:[#allocation2 + $0x28] sm:$0xf]
        %v1102 = vld [vmem:[#allocation2 + $0x30] sm:$0xf8]
        %v1103 = vld [vmem:[#allocation2 + $0x38] sm:$0xf]
        %v1104 = vld [vmem:[#allocation2 + $0x40] sm:$0xf8]
        %v1105 = vld [vmem:[#allocation2 + $0x48] sm:$0xf]
        %v1106 = vld [vmem:[#allocation2 + $0x50] sm:$0xf8]
        %v1107 = vld [vmem:[#allocation2 + $0x58] sm:$0xf]
        %v1108 = vld [vmem:[#allocation2 + $0x60] sm:$0xf8]
        %v1109 = vld [vmem:[#allocation2 + $0x68] sm:$0xf]
        %v1110 = vld [vmem:[#allocation2 + $0x70] sm:$0xf8]
        %v1111 = vld [vmem:[#allocation2 + $0x78] sm:$0xf]
        %v1112 = vld [vmem:[#allocation2 + $0x80] sm:$0xf8]
        %v1113 = vld [vmem:[#allocation2 + $0x88] sm:$0xf]
        %v1114 = vld [vmem:[#allocation2 + $0x90] sm:$0xf8]
        %v1115 = vld [vmem:[#allocation2 + $0x98] sm:$0xf]
        %v1116 = vld [vmem:[#allocation2 + $0xa0] sm:$0xf8]
        %v1117 = vld [vmem:[#allocation2 + $0xa8] sm:$0xf]
        %v1118 = vld [vmem:[#allocation2 + $0xb0] sm:$0xf8]
        %v1119 = vld [vmem:[#allocation2 + $0xb8] sm:$0xf]
        %v1120 = vld [vmem:[#allocation2 + $0xc0] sm:$0xf8]
        %v1121 = vld [vmem:[#allocation2 + $0xc8] sm:$0xf]
        %v1122 = vld [vmem:[#allocation2 + $0xd0] sm:$0xf8]
        %v1123 = vld [vmem:[#allocation2 + $0xd8] sm:$0xf]
        %v1124 = vld [vmem:[#allocation2 + $0xe0] sm:$0xf8]
        %v1125 = vld [vmem:[#allocation2 + $0xe8] sm:$0xf]
        %v1126 = vld [vmem:[#allocation2 + $0xf0] sm:$0xf8]
        %v1127 = vld [vmem:[#allocation2 + $0xf8] sm:$0xf]
        %vm1128 = vsmask.f32 4352
        %v1130 = vshrl.u32 %v1096, 16
        %v1132 = vrot.slane %v1130, 3
        %v1133 = vshll.u32 %v1096, 16
        %v1135 = vrot.slane %v1133, 4
        %v1136 = vor.u32 %v1132, %v1135
        %v1138 = vshrl.u32 %v1097, 16
        %v1140 = vrot.slane %v1138, 3
        %v1141 = vshll.u32 %v1097, 16
        %v1143 = vrot.slane %v1141, 4
        %v1144 = vor.u32 %v1140, %v1143
        %v1145 = vsel %vm1128, %v1136, %v1144
        %v1147 = vshrl.u32 %v1098, 16
        %v1149 = vrot.slane %v1147, 3
        %v1150 = vshll.u32 %v1098, 16
        %v1152 = vrot.slane %v1150, 4
        %v1153 = vor.u32 %v1149, %v1152
        %v1155 = vshrl.u32 %v1099, 16
        %v1157 = vrot.slane %v1155, 3
        %v1158 = vshll.u32 %v1099, 16
        %v1160 = vrot.slane %v1158, 4
        %v1161 = vor.u32 %v1157, %v1160
        %v1162 = vsel %vm1128, %v1153, %v1161
        %v1164 = vshrl.u32 %v1100, 16
        %v1166 = vrot.slane %v1164, 3
        %v1167 = vshll.u32 %v1100, 16
        %v1169 = vrot.slane %v1167, 4
        %v1170 = vor.u32 %v1166, %v1169
        %v1172 = vshrl.u32 %v1101, 16
        %v1174 = vrot.slane %v1172, 3
        %v1175 = vshll.u32 %v1101, 16
        %v1177 = vrot.slane %v1175, 4
        %v1178 = vor.u32 %v1174, %v1177
        %v1179 = vsel %vm1128, %v1170, %v1178
        %v1181 = vshrl.u32 %v1102, 16
        %v1183 = vrot.slane %v1181, 3
        %v1184 = vshll.u32 %v1102, 16
        %v1186 = vrot.slane %v1184, 4
        %v1187 = vor.u32 %v1183, %v1186
        %v1189 = vshrl.u32 %v1103, 16
        %v1191 = vrot.slane %v1189, 3
        %v1192 = vshll.u32 %v1103, 16
        %v1194 = vrot.slane %v1192, 4
        %v1195 = vor.u32 %v1191, %v1194
        %v1196 = vsel %vm1128, %v1187, %v1195
        %v1198 = vshrl.u32 %v1104, 16
        %v1200 = vrot.slane %v1198, 3
        %v1201 = vshll.u32 %v1104, 16
        %v1203 = vrot.slane %v1201, 4
        %v1204 = vor.u32 %v1200, %v1203
        %v1206 = vshrl.u32 %v1105, 16
        %v1208 = vrot.slane %v1206, 3
        %v1209 = vshll.u32 %v1105, 16
        %v1211 = vrot.slane %v1209, 4
        %v1212 = vor.u32 %v1208, %v1211
        %v1213 = vsel %vm1128, %v1204, %v1212
        %v1215 = vshrl.u32 %v1106, 16
        %v1217 = vrot.slane %v1215, 3
        %v1218 = vshll.u32 %v1106, 16
        %v1220 = vrot.slane %v1218, 4
        %v1221 = vor.u32 %v1217, %v1220
        %v1223 = vshrl.u32 %v1107, 16
        %v1225 = vrot.slane %v1223, 3
        %v1226 = vshll.u32 %v1107, 16
        %v1228 = vrot.slane %v1226, 4
        %v1229 = vor.u32 %v1225, %v1228
        %v1230 = vsel %vm1128, %v1221, %v1229
        %v1232 = vshrl.u32 %v1108, 16
        %v1234 = vrot.slane %v1232, 3
        %v1235 = vshll.u32 %v1108, 16
        %v1237 = vrot.slane %v1235, 4
        %v1238 = vor.u32 %v1234, %v1237
        %v1240 = vshrl.u32 %v1109, 16
        %v1242 = vrot.slane %v1240, 3
        %v1243 = vshll.u32 %v1109, 16
        %v1245 = vrot.slane %v1243, 4
        %v1246 = vor.u32 %v1242, %v1245
        %v1247 = vsel %vm1128, %v1238, %v1246
        %v1249 = vshrl.u32 %v1110, 16
        %v1251 = vrot.slane %v1249, 3
        %v1252 = vshll.u32 %v1110, 16
        %v1254 = vrot.slane %v1252, 4
        %v1255 = vor.u32 %v1251, %v1254
        %v1257 = vshrl.u32 %v1111, 16
        %v1259 = vrot.slane %v1257, 3
        %v1260 = vshll.u32 %v1111, 16
        %v1262 = vrot.slane %v1260, 4
        %v1263 = vor.u32 %v1259, %v1262
        %v1264 = vsel %vm1128, %v1255, %v1263
        %v1266 = vshrl.u32 %v1112, 16
        %v1268 = vrot.slane %v1266, 3
        %v1269 = vshll.u32 %v1112, 16
        %v1271 = vrot.slane %v1269, 4
        %v1272 = vor.u32 %v1268, %v1271
        %v1274 = vshrl.u32 %v1113, 16
        %v1276 = vrot.slane %v1274, 3
        %v1277 = vshll.u32 %v1113, 16
        %v1279 = vrot.slane %v1277, 4
        %v1280 = vor.u32 %v1276, %v1279
        %v1281 = vsel %vm1128, %v1272, %v1280
        %v1283 = vshrl.u32 %v1114, 16
        %v1285 = vrot.slane %v1283, 3
        %v1286 = vshll.u32 %v1114, 16
        %v1288 = vrot.slane %v1286, 4
        %v1289 = vor.u32 %v1285, %v1288
        %v1291 = vshrl.u32 %v1115, 16
        %v1293 = vrot.slane %v1291, 3
        %v1294 = vshll.u32 %v1115, 16
        %v1296 = vrot.slane %v1294, 4
        %v1297 = vor.u32 %v1293, %v1296
        %v1298 = vsel %vm1128, %v1289, %v1297
        %v1300 = vshrl.u32 %v1116, 16
        %v1302 = vrot.slane %v1300, 3
        %v1303 = vshll.u32 %v1116, 16
        %v1305 = vrot.slane %v1303, 4
        %v1306 = vor.u32 %v1302, %v1305
        %v1308 = vshrl.u32 %v1117, 16
        %v1310 = vrot.slane %v1308, 3
        %v1311 = vshll.u32 %v1117, 16
        %v1313 = vrot.slane %v1311, 4
        %v1314 = vor.u32 %v1310, %v1313
        %v1315 = vsel %vm1128, %v1306, %v1314
        %v1317 = vshrl.u32 %v1118, 16
        %v1319 = vrot.slane %v1317, 3
        %v1320 = vshll.u32 %v1118, 16
        %v1322 = vrot.slane %v1320, 4
        %v1323 = vor.u32 %v1319, %v1322
        %v1325 = vshrl.u32 %v1119, 16
        %v1327 = vrot.slane %v1325, 3
        %v1328 = vshll.u32 %v1119, 16
        %v1330 = vrot.slane %v1328, 4
        %v1331 = vor.u32 %v1327, %v1330
        %v1332 = vsel %vm1128, %v1323, %v1331
        %v1334 = vshrl.u32 %v1120, 16
        %v1336 = vrot.slane %v1334, 3
        %v1337 = vshll.u32 %v1120, 16
        %v1339 = vrot.slane %v1337, 4
        %v1340 = vor.u32 %v1336, %v1339
        %v1342 = vshrl.u32 %v1121, 16
        %v1344 = vrot.slane %v1342, 3
        %v1345 = vshll.u32 %v1121, 16
        %v1347 = vrot.slane %v1345, 4
        %v1348 = vor.u32 %v1344, %v1347
        %v1349 = vsel %vm1128, %v1340, %v1348
        %v1351 = vshrl.u32 %v1122, 16
        %v1353 = vrot.slane %v1351, 3
        %v1354 = vshll.u32 %v1122, 16
        %v1356 = vrot.slane %v1354, 4
        %v1357 = vor.u32 %v1353, %v1356
        %v1359 = vshrl.u32 %v1123, 16
        %v1361 = vrot.slane %v1359, 3
        %v1362 = vshll.u32 %v1123, 16
        %v1364 = vrot.slane %v1362, 4
        %v1365 = vor.u32 %v1361, %v1364
        %v1366 = vsel %vm1128, %v1357, %v1365
        %v1368 = vshrl.u32 %v1124, 16
        %v1370 = vrot.slane %v1368, 3
        %v1371 = vshll.u32 %v1124, 16
        %v1373 = vrot.slane %v1371, 4
        %v1374 = vor.u32 %v1370, %v1373
        %v1376 = vshrl.u32 %v1125, 16
        %v1378 = vrot.slane %v1376, 3
        %v1379 = vshll.u32 %v1125, 16
        %v1381 = vrot.slane %v1379, 4
        %v1382 = vor.u32 %v1378, %v1381
        %v1383 = vsel %vm1128, %v1374, %v1382
        %v1385 = vshrl.u32 %v1126, 16
        %v1387 = vrot.slane %v1385, 3
        %v1388 = vshll.u32 %v1126, 16
        %v1390 = vrot.slane %v1388, 4
        %v1391 = vor.u32 %v1387, %v1390
        %v1393 = vshrl.u32 %v1127, 16
        %v1395 = vrot.slane %v1393, 3
        %v1396 = vshll.u32 %v1127, 16
        %v1398 = vrot.slane %v1396, 4
        %v1399 = vor.u32 %v1395, %v1398
        %v1400 = vsel %vm1128, %v1391, %v1399
        %v1417 = vld [vmem:[#allocation11] sm:$0xf]
        %v1418 = vld [vmem:[#allocation11 + $0x4] sm:$0xf]
        %v1419 = vld [vmem:[#allocation11 + $0x8] sm:$0xf]
        %v1420 = vld [vmem:[#allocation11 + $0xc] sm:$0xf]
        %v1421 = vld [vmem:[#allocation11 + $0x10] sm:$0xf]
        %v1422 = vld [vmem:[#allocation11 + $0x14] sm:$0xf]
        %v1423 = vld [vmem:[#allocation11 + $0x18] sm:$0xf]
        %v1424 = vld [vmem:[#allocation11 + $0x1c] sm:$0xf]
        %v1425 = vld [vmem:[#allocation11 + $0x20] sm:$0xf]
        %v1426 = vld [vmem:[#allocation11 + $0x24] sm:$0xf]
        %v1427 = vld [vmem:[#allocation11 + $0x28] sm:$0xf]
        %v1428 = vld [vmem:[#allocation11 + $0x2c] sm:$0xf]
        %v1429 = vld [vmem:[#allocation11 + $0x30] sm:$0xf]
        %v1430 = vld [vmem:[#allocation11 + $0x34] sm:$0xf]
        %v1431 = vld [vmem:[#allocation11 + $0x38] sm:$0xf]
        %v1432 = vld [vmem:[#allocation11 + $0x3c] sm:$0xf]
        %v1433 = vld [vmem:[#allocation2] sm:$0xf0]
        %v1434 = vld [vmem:[#allocation2 + $0x10] sm:$0xf0]
        %v1435 = vld [vmem:[#allocation2 + $0x20] sm:$0xf0]
        %v1436 = vld [vmem:[#allocation2 + $0x30] sm:$0xf0]
        %v1437 = vld [vmem:[#allocation2 + $0x40] sm:$0xf0]
        %v1438 = vld [vmem:[#allocation2 + $0x50] sm:$0xf0]
        %v1439 = vld [vmem:[#allocation2 + $0x60] sm:$0xf0]
        %v1440 = vld [vmem:[#allocation2 + $0x70] sm:$0xf0]
        %v1441 = vld [vmem:[#allocation2 + $0x80] sm:$0xf0]
        %v1442 = vld [vmem:[#allocation2 + $0x90] sm:$0xf0]
        %v1443 = vld [vmem:[#allocation2 + $0xa0] sm:$0xf0]
        %v1444 = vld [vmem:[#allocation2 + $0xb0] sm:$0xf0]
        %v1445 = vld [vmem:[#allocation2 + $0xc0] sm:$0xf0]
        %v1446 = vld [vmem:[#allocation2 + $0xd0] sm:$0xf0]
        %v1447 = vld [vmem:[#allocation2 + $0xe0] sm:$0xf0]
        %v1448 = vld [vmem:[#allocation2 + $0xf0] sm:$0xf0]
        %vm1481 = vcmask 1043456
        %v1482 = vrot.slane %v1433, 4
        %v1483 = vrot.slane %v1097, 4
        %v1484 = vsel %vm1481, %v1482, %v1483
        %v1485 = vrot.slane %v1434, 4
        %v1486 = vrot.slane %v1099, 4
        %v1487 = vsel %vm1481, %v1485, %v1486
        %v1488 = vrot.slane %v1435, 4
        %v1489 = vrot.slane %v1101, 4
        %v1490 = vsel %vm1481, %v1488, %v1489
        %v1491 = vrot.slane %v1436, 4
        %v1492 = vrot.slane %v1103, 4
        %v1493 = vsel %vm1481, %v1491, %v1492
        %v1494 = vrot.slane %v1437, 4
        %v1495 = vrot.slane %v1105, 4
        %v1496 = vsel %vm1481, %v1494, %v1495
        %v1497 = vrot.slane %v1438, 4
        %v1498 = vrot.slane %v1107, 4
        %v1499 = vsel %vm1481, %v1497, %v1498
        %v1500 = vrot.slane %v1439, 4
        %v1501 = vrot.slane %v1109, 4
        %v1502 = vsel %vm1481, %v1500, %v1501
        %v1503 = vrot.slane %v1440, 4
        %v1504 = vrot.slane %v1111, 4
        %v1505 = vsel %vm1481, %v1503, %v1504
        %v1506 = vrot.slane %v1441, 4
        %v1507 = vrot.slane %v1113, 4
        %v1508 = vsel %vm1481, %v1506, %v1507
        %v1509 = vrot.slane %v1442, 4
        %v1510 = vrot.slane %v1115, 4
        %v1511 = vsel %vm1481, %v1509, %v1510
        %v1512 = vrot.slane %v1443, 4
        %v1513 = vrot.slane %v1117, 4
        %v1514 = vsel %vm1481, %v1512, %v1513
        %v1515 = vrot.slane %v1444, 4
        %v1516 = vrot.slane %v1119, 4
        %v1517 = vsel %vm1481, %v1515, %v1516
        %v1518 = vrot.slane %v1445, 4
        %v1519 = vrot.slane %v1121, 4
        %v1520 = vsel %vm1481, %v1518, %v1519
        %v1521 = vrot.slane %v1446, 4
        %v1522 = vrot.slane %v1123, 4
        %v1523 = vsel %vm1481, %v1521, %v1522
        %v1524 = vrot.slane %v1447, 4
        %v1525 = vrot.slane %v1125, 4
        %v1526 = vsel %vm1481, %v1524, %v1525
        %v1527 = vrot.slane %v1448, 4
        %v1528 = vrot.slane %v1127, 4
        %v1529 = vsel %vm1481, %v1527, %v1528
        %s1546 = scalar_lea.vmem [#allocation11], 64
        %v1547 = vld [vmem:[%s1546] sm:$0xf]
        %v1548 = vld [vmem:[%s1546 + $0x4] sm:$0xf]
        %v1549 = vld [vmem:[%s1546 + $0x8] sm:$0xf]
        %v1550 = vld [vmem:[%s1546 + $0xc] sm:$0xf]
        %v1551 = vld [vmem:[%s1546 + $0x10] sm:$0xf]
        %v1552 = vld [vmem:[%s1546 + $0x14] sm:$0xf]
        %v1553 = vld [vmem:[%s1546 + $0x18] sm:$0xf]
        %v1554 = vld [vmem:[%s1546 + $0x1c] sm:$0xf]
        %v1555 = vld [vmem:[%s1546 + $0x20] sm:$0xf]
        %v1556 = vld [vmem:[%s1546 + $0x24] sm:$0xf]
        %v1557 = vld [vmem:[%s1546 + $0x28] sm:$0xf]
        %v1558 = vld [vmem:[%s1546 + $0x2c] sm:$0xf]
        %v1559 = vld [vmem:[%s1546 + $0x30] sm:$0xf]
        %v1560 = vld [vmem:[%s1546 + $0x34] sm:$0xf]
        %v1561 = vld [vmem:[%s1546 + $0x38] sm:$0xf]
        %v1562 = vld [vmem:[%s1546 + $0x3c] sm:$0xf]
        %v1579 = vunpack.c.l.b16 %v1547
        %v1580 = vunpack.c.l.b16 %v1548
        %v1581 = vunpack.c.l.b16 %v1549
        %v1582 = vunpack.c.l.b16 %v1550
        %v1583 = vunpack.c.l.b16 %v1551
        %v1584 = vunpack.c.l.b16 %v1552
        %v1585 = vunpack.c.l.b16 %v1553
        %v1586 = vunpack.c.l.b16 %v1554
        %v1587 = vunpack.c.l.b16 %v1555
        %v1588 = vunpack.c.l.b16 %v1556
        %v1589 = vunpack.c.l.b16 %v1557
        %v1590 = vunpack.c.l.b16 %v1558
        %v1591 = vunpack.c.l.b16 %v1559
        %v1592 = vunpack.c.l.b16 %v1560
        %v1593 = vunpack.c.l.b16 %v1561
        %v1594 = vunpack.c.l.b16 %v1562
        %v1595 = vpack.c.b16 %v1580, %v1579
        %v1596 = vpack.c.b16 %v1582, %v1581
        %v1597 = vpack.c.b16 %v1584, %v1583
        %v1598 = vpack.c.b16 %v1586, %v1585
        %v1599 = vpack.c.b16 %v1588, %v1587
        %v1600 = vpack.c.b16 %v1590, %v1589
        %v1601 = vpack.c.b16 %v1592, %v1591
        %v1602 = vpack.c.b16 %v1594, %v1593
        %1611 = vmatprep.subr.bf16.mxu0 0
        %1612 = vmatpush1.bf16.msra.mxu0 %v1595
        %1613 = vmatprep.subr.bf16.mxu0 0
        %1614 = vmatpush1.bf16.msra.mxu0 %v1596
        %1615 = vmatprep.subr.bf16.mxu0 0
        %1616 = vmatpush1.bf16.msra.mxu0 %v1597
        %1617 = vmatprep.subr.bf16.mxu0 0
        %1618 = vmatpush1.bf16.msra.mxu0 %v1598
        %1619 = vmatprep.subr.bf16.mxu0 0
        %1620 = vmatpush1.bf16.msra.mxu0 %v1599
        %1621 = vmatprep.subr.bf16.mxu0 0
        %1622 = vmatpush1.bf16.msra.mxu0 %v1600
        %1623 = vmatprep.subr.bf16.mxu0 0
        %1624 = vmatpush1.bf16.msra.mxu0 %v1601
        %1625 = vmatprep.subr.bf16.mxu0 0
        %1626 = vmatpush1.bf16.msra.mxu0 %v1602
        %1627 = vmatprep.subr.bf16.mxu0 0
        %1628 = vmatpush1.bf16.msra.mxu0 0
        %1629 = vmatprep.subr.bf16.mxu0 0
        %1630 = vmatpush1.bf16.msra.mxu0 0
        %1631 = vmatprep.subr.bf16.mxu0 0
        %1632 = vmatpush1.bf16.msra.mxu0 0
        %1633 = vmatprep.subr.bf16.mxu0 0
        %1634 = vmatpush1.bf16.msra.mxu0 0
        %1635 = vmatprep.subr.bf16.mxu0 0
        %1636 = vmatpush1.bf16.msra.mxu0 0
        %1637 = vmatprep.subr.bf16.mxu0 0
        %1638 = vmatpush1.bf16.msra.mxu0 0
        %1639 = vmatprep.subr.bf16.mxu0 0
        %1640 = vmatpush1.bf16.msra.mxu0 0
        %1641 = vmatprep.subr.bf16.mxu0 0
        %1642 = vmatpush1.bf16.msra.mxu0 0
        %1643 = vmatprep.mubr.bf16.mxu0 0
        %1644 = vmatmul.mubr.bf16.gmra.mrb[0].mxu0 %v1484
        %v1645 = vpop.f32.mrb[0].mxu0
        %v1646 = vadd.f32 0.0, %v1645
        %v1647 = vpop.f32.mrb[0].mxu0
        %v1648 = vpop.f32.mrb[0].mxu0
        %v1649 = vadd.f32 0.0, %v1648
        %v1650 = vpop.f32.mrb[0].mxu0
        %1651 = vmatprep.mubr.bf16.mxu0 0
        %1652 = vmatmul.mubr.bf16.gmra.mrb[0].mxu0 %v1487
        %v1653 = vpop.f32.mrb[0].mxu0
        %v1654 = vadd.f32 0.0, %v1653
        %v1655 = vpop.f32.mrb[0].mxu0
        %v1656 = vpop.f32.mrb[0].mxu0
        %v1657 = vadd.f32 0.0, %v1656
        %v1658 = vpop.f32.mrb[0].mxu0
        %1659 = vmatprep.mubr.bf16.mxu0 0
        %1660 = vmatmul.mubr.bf16.gmra.mrb[0].mxu0 %v1490
        %v1661 = vpop.f32.mrb[0].mxu0
        %v1662 = vadd.f32 0.0, %v1661
        %v1663 = vpop.f32.mrb[0].mxu0
        %v1664 = vpop.f32.mrb[0].mxu0
        %v1665 = vadd.f32 0.0, %v1664
        %v1666 = vpop.f32.mrb[0].mxu0
        %1667 = vmatprep.mubr.bf16.mxu0 0
        %1668 = vmatmul.mubr.bf16.gmra.mrb[0].mxu0 %v1493
        %v1669 = vpop.f32.mrb[0].mxu0
        %v1670 = vadd.f32 0.0, %v1669
        %v1671 = vpop.f32.mrb[0].mxu0
        %v1672 = vpop.f32.mrb[0].mxu0
        %v1673 = vadd.f32 0.0, %v1672
        %v1674 = vpop.f32.mrb[0].mxu0
        %1675 = vmatprep.mubr.bf16.mxu0 0
        %1676 = vmatmul.mubr.bf16.gmra.mrb[0].mxu0 %v1496
        %v1677 = vpop.f32.mrb[0].mxu0
        %v1678 = vadd.f32 0.0, %v1677
        %v1679 = vpop.f32.mrb[0].mxu0
        %v1680 = vpop.f32.mrb[0].mxu0
        %v1681 = vadd.f32 0.0, %v1680
        %v1682 = vpop.f32.mrb[0].mxu0
        %1683 = vmatprep.mubr.bf16.mxu0 0
        %1684 = vmatmul.mubr.bf16.gmra.mrb[0].mxu0 %v1499
        %v1685 = vpop.f32.mrb[0].mxu0
        %v1686 = vadd.f32 0.0, %v1685
        %v1687 = vpop.f32.mrb[0].mxu0
        %v1688 = vpop.f32.mrb[0].mxu0
        %v1689 = vadd.f32 0.0, %v1688
        %v1690 = vpop.f32.mrb[0].mxu0
        %1691 = vmatprep.mubr.bf16.mxu0 0
        %1692 = vmatmul.mubr.bf16.gmra.mrb[0].mxu0 %v1502
        %v1693 = vpop.f32.mrb[0].mxu0
        %v1694 = vadd.f32 0.0, %v1693
        %v1695 = vpop.f32.mrb[0].mxu0
        %v1696 = vpop.f32.mrb[0].mxu0
        %v1697 = vadd.f32 0.0, %v1696
        %v1698 = vpop.f32.mrb[0].mxu0
        %1699 = vmatprep.mubr.bf16.mxu0 0
        %1700 = vmatmul.mubr.bf16.gmra.mrb[0].mxu0 %v1505
        %v1701 = vpop.f32.mrb[0].mxu0
        %v1702 = vadd.f32 0.0, %v1701
        %v1703 = vpop.f32.mrb[0].mxu0
        %v1704 = vpop.f32.mrb[0].mxu0
        %v1705 = vadd.f32 0.0, %v1704
        %v1706 = vpop.f32.mrb[0].mxu0
        %1707 = vmatprep.mubr.bf16.mxu0 0
        %1708 = vmatmul.mubr.bf16.gmra.mrb[0].mxu0 %v1508
        %v1709 = vpop.f32.mrb[0].mxu0
        %v1710 = vadd.f32 0.0, %v1709
        %v1711 = vpop.f32.mrb[0].mxu0
        %v1712 = vpop.f32.mrb[0].mxu0
        %v1713 = vadd.f32 0.0, %v1712
        %v1714 = vpop.f32.mrb[0].mxu0
        %1715 = vmatprep.mubr.bf16.mxu0 0
        %1716 = vmatmul.mubr.bf16.gmra.mrb[0].mxu0 %v1511
        %v1717 = vpop.f32.mrb[0].mxu0
        %v1718 = vadd.f32 0.0, %v1717
        %v1719 = vpop.f32.mrb[0].mxu0
        %v1720 = vpop.f32.mrb[0].mxu0
        %v1721 = vadd.f32 0.0, %v1720
        %v1722 = vpop.f32.mrb[0].mxu0
        %1723 = vmatprep.mubr.bf16.mxu0 0
        %1724 = vmatmul.mubr.bf16.gmra.mrb[0].mxu0 %v1514
        %v1725 = vpop.f32.mrb[0].mxu0
        %v1726 = vadd.f32 0.0, %v1725
        %v1727 = vpop.f32.mrb[0].mxu0
        %v1728 = vpop.f32.mrb[0].mxu0
        %v1729 = vadd.f32 0.0, %v1728
        %v1730 = vpop.f32.mrb[0].mxu0
        %1731 = vmatprep.mubr.bf16.mxu0 0
        %1732 = vmatmul.mubr.bf16.gmra.mrb[0].mxu0 %v1517
        %v1733 = vpop.f32.mrb[0].mxu0
        %v1734 = vadd.f32 0.0, %v1733
        %v1735 = vpop.f32.mrb[0].mxu0
        %v1736 = vpop.f32.mrb[0].mxu0
        %v1737 = vadd.f32 0.0, %v1736
        %v1738 = vpop.f32.mrb[0].mxu0
        %1739 = vmatprep.mubr.bf16.mxu0 0
        %1740 = vmatmul.mubr.bf16.gmra.mrb[0].mxu0 %v1520
        %v1741 = vpop.f32.mrb[0].mxu0
        %v1742 = vadd.f32 0.0, %v1741
        %v1743 = vpop.f32.mrb[0].mxu0
        %v1744 = vpop.f32.mrb[0].mxu0
        %v1745 = vadd.f32 0.0, %v1744
        %v1746 = vpop.f32.mrb[0].mxu0
        %1747 = vmatprep.mubr.bf16.mxu0 0
        %1748 = vmatmul.mubr.bf16.gmra.mrb[0].mxu0 %v1523
        %v1749 = vpop.f32.mrb[0].mxu0
        %v1750 = vadd.f32 0.0, %v1749
        %v1751 = vpop.f32.mrb[0].mxu0
        %v1752 = vpop.f32.mrb[0].mxu0
        %v1753 = vadd.f32 0.0, %v1752
        %v1754 = vpop.f32.mrb[0].mxu0
        %1755 = vmatprep.mubr.bf16.mxu0 0
        %1756 = vmatmul.mubr.bf16.gmra.mrb[0].mxu0 %v1526
        %v1757 = vpop.f32.mrb[0].mxu0
        %v1758 = vadd.f32 0.0, %v1757
        %v1759 = vpop.f32.mrb[0].mxu0
        %v1760 = vpop.f32.mrb[0].mxu0
        %v1761 = vadd.f32 0.0, %v1760
        %v1762 = vpop.f32.mrb[0].mxu0
        %1763 = vmatprep.mubr.bf16.mxu0 0
        %1764 = vmatmul.mubr.bf16.gmra.mrb[0].mxu0 %v1529
        %v1765 = vpop.f32.mrb[0].mxu0
        %v1766 = vadd.f32 0.0, %v1765
        %v1767 = vpop.f32.mrb[0].mxu0
        %v1768 = vpop.f32.mrb[0].mxu0
        %v1769 = vadd.f32 0.0, %v1768
        %v1770 = vpop.f32.mrb[0].mxu0
        %1771 = vdwg.mxu0
        %v1788 = vunpack.c.l.b16 %v1417
        %v1789 = vunpack.c.l.b16 %v1418
        %v1790 = vunpack.c.l.b16 %v1419
        %v1791 = vunpack.c.l.b16 %v1420
        %v1792 = vunpack.c.l.b16 %v1421
        %v1793 = vunpack.c.l.b16 %v1422
        %v1794 = vunpack.c.l.b16 %v1423
        %v1795 = vunpack.c.l.b16 %v1424
        %v1796 = vunpack.c.l.b16 %v1425
        %v1797 = vunpack.c.l.b16 %v1426
        %v1798 = vunpack.c.l.b16 %v1427
        %v1799 = vunpack.c.l.b16 %v1428
        %v1800 = vunpack.c.l.b16 %v1429
        %v1801 = vunpack.c.l.b16 %v1430
        %v1802 = vunpack.c.l.b16 %v1431
        %v1803 = vunpack.c.l.b16 %v1432
        %v1804 = vpack.c.b16 %v1789, %v1788
        %v1805 = vpack.c.b16 %v1791, %v1790
        %v1806 = vpack.c.b16 %v1793, %v1792
        %v1807 = vpack.c.b16 %v1795, %v1794
        %v1808 = vpack.c.b16 %v1797, %v1796
        %v1809 = vpack.c.b16 %v1799, %v1798
        %v1810 = vpack.c.b16 %v1801, %v1800
        %v1811 = vpack.c.b16 %v1803, %v1802
        %1820 = vmatprep.subr.bf16.mxu0 0
        %1821 = vmatpush1.bf16.msra.mxu0 %v1804
        %1822 = vmatprep.subr.bf16.mxu0 0
        %1823 = vmatpush1.bf16.msra.mxu0 %v1805
        %1824 = vmatprep.subr.bf16.mxu0 0
        %1825 = vmatpush1.bf16.msra.mxu0 %v1806
        %1826 = vmatprep.subr.bf16.mxu0 0
        %1827 = vmatpush1.bf16.msra.mxu0 %v1807
        %1828 = vmatprep.subr.bf16.mxu0 0
        %1829 = vmatpush1.bf16.msra.mxu0 %v1808
        %1830 = vmatprep.subr.bf16.mxu0 0
        %1831 = vmatpush1.bf16.msra.mxu0 %v1809
        %1832 = vmatprep.subr.bf16.mxu0 0
        %1833 = vmatpush1.bf16.msra.mxu0 %v1810
        %1834 = vmatprep.subr.bf16.mxu0 0
        %1835 = vmatpush1.bf16.msra.mxu0 %v1811
        %1836 = vmatprep.subr.bf16.mxu0 0
        %1837 = vmatpush1.bf16.msra.mxu0 0
        %1838 = vmatprep.subr.bf16.mxu0 0
        %1839 = vmatpush1.bf16.msra.mxu0 0
        %1840 = vmatprep.subr.bf16.mxu0 0
        %1841 = vmatpush1.bf16.msra.mxu0 0
        %1842 = vmatprep.subr.bf16.mxu0 0
        %1843 = vmatpush1.bf16.msra.mxu0 0
        %1844 = vmatprep.subr.bf16.mxu0 0
        %1845 = vmatpush1.bf16.msra.mxu0 0
        %1846 = vmatprep.subr.bf16.mxu0 0
        %1847 = vmatpush1.bf16.msra.mxu0 0
        %1848 = vmatprep.subr.bf16.mxu0 0
        %1849 = vmatpush1.bf16.msra.mxu0 0
        %1850 = vmatprep.subr.bf16.mxu0 0
        %1851 = vmatpush1.bf16.msra.mxu0 0
        %1852 = vmatprep.mubr.bf16.mxu0 0
        %1853 = vmatmul.mubr.bf16.gmra.mrb[0].mxu0 %v1145
        %v1854 = vpop.f32.mrb[0].mxu0
        %v1855 = vadd.f32 %v1646, %v1854
        %v1856 = vpop.f32.mrb[0].mxu0
        %v1857 = vpop.f32.mrb[0].mxu0
        %v1858 = vadd.f32 %v1649, %v1857
        %v1859 = vpop.f32.mrb[0].mxu0
        %1860 = vmatprep.mubr.bf16.mxu0 0
        %1861 = vmatmul.mubr.bf16.gmra.mrb[0].mxu0 %v1162
        %v1862 = vpop.f32.mrb[0].mxu0
        %v1863 = vadd.f32 %v1654, %v1862
        %v1864 = vpop.f32.mrb[0].mxu0
        %v1865 = vpop.f32.mrb[0].mxu0
        %v1866 = vadd.f32 %v1657, %v1865
        %v1867 = vpop.f32.mrb[0].mxu0
        %1868 = vmatprep.mubr.bf16.mxu0 0
        %1869 = vmatmul.mubr.bf16.gmra.mrb[0].mxu0 %v1179
        %v1870 = vpop.f32.mrb[0].mxu0
        %v1871 = vadd.f32 %v1662, %v1870
        %v1872 = vpop.f32.mrb[0].mxu0
        %v1873 = vpop.f32.mrb[0].mxu0
        %v1874 = vadd.f32 %v1665, %v1873
        %v1875 = vpop.f32.mrb[0].mxu0
        %1876 = vmatprep.mubr.bf16.mxu0 0
        %1877 = vmatmul.mubr.bf16.gmra.mrb[0].mxu0 %v1196
        %v1878 = vpop.f32.mrb[0].mxu0
        %v1879 = vadd.f32 %v1670, %v1878
        %v1880 = vpop.f32.mrb[0].mxu0
        %v1881 = vpop.f32.mrb[0].mxu0
        %v1882 = vadd.f32 %v1673, %v1881
        %v1883 = vpop.f32.mrb[0].mxu0
        %1884 = vmatprep.mubr.bf16.mxu0 0
        %1885 = vmatmul.mubr.bf16.gmra.mrb[0].mxu0 %v1213
        %v1886 = vpop.f32.mrb[0].mxu0
        %v1887 = vadd.f32 %v1678, %v1886
        %v1888 = vpop.f32.mrb[0].mxu0
        %v1889 = vpop.f32.mrb[0].mxu0
        %v1890 = vadd.f32 %v1681, %v1889
        %v1891 = vpop.f32.mrb[0].mxu0
        %1892 = vmatprep.mubr.bf16.mxu0 0
        %1893 = vmatmul.mubr.bf16.gmra.mrb[0].mxu0 %v1230
        %v1894 = vpop.f32.mrb[0].mxu0
        %v1895 = vadd.f32 %v1686, %v1894
        %v1896 = vpop.f32.mrb[0].mxu0
        %v1897 = vpop.f32.mrb[0].mxu0
        %v1898 = vadd.f32 %v1689, %v1897
        %v1899 = vpop.f32.mrb[0].mxu0
        %1900 = vmatprep.mubr.bf16.mxu0 0
        %1901 = vmatmul.mubr.bf16.gmra.mrb[0].mxu0 %v1247
        %v1902 = vpop.f32.mrb[0].mxu0
        %v1903 = vadd.f32 %v1694, %v1902
        %v1904 = vpop.f32.mrb[0].mxu0
        %v1905 = vpop.f32.mrb[0].mxu0
        %v1906 = vadd.f32 %v1697, %v1905
        %v1907 = vpop.f32.mrb[0].mxu0
        %1908 = vmatprep.mubr.bf16.mxu0 0
        %1909 = vmatmul.mubr.bf16.gmra.mrb[0].mxu0 %v1264
        %v1910 = vpop.f32.mrb[0].mxu0
        %v1911 = vadd.f32 %v1702, %v1910
        %v1912 = vpop.f32.mrb[0].mxu0
        %v1913 = vpop.f32.mrb[0].mxu0
        %v1914 = vadd.f32 %v1705, %v1913
        %v1915 = vpop.f32.mrb[0].mxu0
        %1916 = vmatprep.mubr.bf16.mxu0 0
        %1917 = vmatmul.mubr.bf16.gmra.mrb[0].mxu0 %v1281
        %v1918 = vpop.f32.mrb[0].mxu0
        %v1919 = vadd.f32 %v1710, %v1918
        %v1920 = vpop.f32.mrb[0].mxu0
        %v1921 = vpop.f32.mrb[0].mxu0
        %v1922 = vadd.f32 %v1713, %v1921
        %v1923 = vpop.f32.mrb[0].mxu0
        %1924 = vmatprep.mubr.bf16.mxu0 0
        %1925 = vmatmul.mubr.bf16.gmra.mrb[0].mxu0 %v1298
        %v1926 = vpop.f32.mrb[0].mxu0
        %v1927 = vadd.f32 %v1718, %v1926
        %v1928 = vpop.f32.mrb[0].mxu0
        %v1929 = vpop.f32.mrb[0].mxu0
        %v1930 = vadd.f32 %v1721, %v1929
        %v1931 = vpop.f32.mrb[0].mxu0
        %1932 = vmatprep.mubr.bf16.mxu0 0
        %1933 = vmatmul.mubr.bf16.gmra.mrb[0].mxu0 %v1315
        %v1934 = vpop.f32.mrb[0].mxu0
        %v1935 = vadd.f32 %v1726, %v1934
        %v1936 = vpop.f32.mrb[0].mxu0
        %v1937 = vpop.f32.mrb[0].mxu0
        %v1938 = vadd.f32 %v1729, %v1937
        %v1939 = vpop.f32.mrb[0].mxu0
        %1940 = vmatprep.mubr.bf16.mxu0 0
        %1941 = vmatmul.mubr.bf16.gmra.mrb[0].mxu0 %v1332
        %v1942 = vpop.f32.mrb[0].mxu0
        %v1943 = vadd.f32 %v1734, %v1942
        %v1944 = vpop.f32.mrb[0].mxu0
        %v1945 = vpop.f32.mrb[0].mxu0
        %v1946 = vadd.f32 %v1737, %v1945
        %v1947 = vpop.f32.mrb[0].mxu0
        %1948 = vmatprep.mubr.bf16.mxu0 0
        %1949 = vmatmul.mubr.bf16.gmra.mrb[0].mxu0 %v1349
        %v1950 = vpop.f32.mrb[0].mxu0
        %v1951 = vadd.f32 %v1742, %v1950
        %v1952 = vpop.f32.mrb[0].mxu0
        %v1953 = vpop.f32.mrb[0].mxu0
        %v1954 = vadd.f32 %v1745, %v1953
        %v1955 = vpop.f32.mrb[0].mxu0
        %1956 = vmatprep.mubr.bf16.mxu0 0
        %1957 = vmatmul.mubr.bf16.gmra.mrb[0].mxu0 %v1366
        %v1958 = vpop.f32.mrb[0].mxu0
        %v1959 = vadd.f32 %v1750, %v1958
        %v1960 = vpop.f32.mrb[0].mxu0
        %v1961 = vpop.f32.mrb[0].mxu0
        %v1962 = vadd.f32 %v1753, %v1961
        %v1963 = vpop.f32.mrb[0].mxu0
        %1964 = vmatprep.mubr.bf16.mxu0 0
        %1965 = vmatmul.mubr.bf16.gmra.mrb[0].mxu0 %v1383
        %v1966 = vpop.f32.mrb[0].mxu0
        %v1967 = vadd.f32 %v1758, %v1966
        %v1968 = vpop.f32.mrb[0].mxu0
        %v1969 = vpop.f32.mrb[0].mxu0
        %v1970 = vadd.f32 %v1761, %v1969
        %v1971 = vpop.f32.mrb[0].mxu0
        %1972 = vmatprep.mubr.bf16.mxu0 0
        %1973 = vmatmul.mubr.bf16.gmra.mrb[0].mxu0 %v1400
        %v1974 = vpop.f32.mrb[0].mxu0
        %v1975 = vadd.f32 %v1766, %v1974
        %v1976 = vpop.f32.mrb[0].mxu0
        %v1977 = vpop.f32.mrb[0].mxu0
        %v1978 = vadd.f32 %v1769, %v1977
        %v1979 = vpop.f32.mrb[0].mxu0
        %1980 = vdwg.mxu0
        %v1981 = vld [vmem:[#allocation2 + $0x8] sm:$0x1f]
        %v1982 = vld [vmem:[#allocation2 + $0x18] sm:$0x1f]
        %v1983 = vld [vmem:[#allocation2 + $0x28] sm:$0x1f]
        %v1984 = vld [vmem:[#allocation2 + $0x38] sm:$0x1f]
        %v1985 = vld [vmem:[#allocation2 + $0x48] sm:$0x1f]
        %v1986 = vld [vmem:[#allocation2 + $0x58] sm:$0x1f]
        %v1987 = vld [vmem:[#allocation2 + $0x68] sm:$0x1f]
        %v1988 = vld [vmem:[#allocation2 + $0x78] sm:$0x1f]
        %v1989 = vld [vmem:[#allocation2 + $0x88] sm:$0x1f]
        %v1990 = vld [vmem:[#allocation2 + $0x98] sm:$0x1f]
        %v1991 = vld [vmem:[#allocation2 + $0xa8] sm:$0x1f]
        %v1992 = vld [vmem:[#allocation2 + $0xb8] sm:$0x1f]
        %v1993 = vld [vmem:[#allocation2 + $0xc8] sm:$0x1f]
        %v1994 = vld [vmem:[#allocation2 + $0xd8] sm:$0x1f]
        %v1995 = vld [vmem:[#allocation2 + $0xe8] sm:$0x1f]
        %v1996 = vld [vmem:[#allocation2 + $0xf8] sm:$0x1f]
        %vm1997 = vsmask.f32 3328
        %v1999 = vshrl.u32 %v1433, 16
        %v2001 = vrot.slane %v1999, 4
        %v2002 = vshll.u32 %v1433, 16
        %v2004 = vrot.slane %v2002, 5
        %v2005 = vor.u32 %v2001, %v2004
        %v2007 = vshrl.u32 %v1981, 16
        %v2009 = vrot.slane %v2007, 4
        %v2010 = vshll.u32 %v1981, 16
        %v2012 = vrot.slane %v2010, 5
        %v2013 = vor.u32 %v2009, %v2012
        %v2014 = vsel %vm1997, %v2005, %v2013
        %v2016 = vshrl.u32 %v1434, 16
        %v2018 = vrot.slane %v2016, 4
        %v2019 = vshll.u32 %v1434, 16
        %v2021 = vrot.slane %v2019, 5
        %v2022 = vor.u32 %v2018, %v2021
        %v2024 = vshrl.u32 %v1982, 16
        %v2026 = vrot.slane %v2024, 4
        %v2027 = vshll.u32 %v1982, 16
        %v2029 = vrot.slane %v2027, 5
        %v2030 = vor.u32 %v2026, %v2029
        %v2031 = vsel %vm1997, %v2022, %v2030
        %v2033 = vshrl.u32 %v1435, 16
        %v2035 = vrot.slane %v2033, 4
        %v2036 = vshll.u32 %v1435, 16
        %v2038 = vrot.slane %v2036, 5
        %v2039 = vor.u32 %v2035, %v2038
        %v2041 = vshrl.u32 %v1983, 16
        %v2043 = vrot.slane %v2041, 4
        %v2044 = vshll.u32 %v1983, 16
        %v2046 = vrot.slane %v2044, 5
        %v2047 = vor.u32 %v2043, %v2046
        %v2048 = vsel %vm1997, %v2039, %v2047
        %v2050 = vshrl.u32 %v1436, 16
        %v2052 = vrot.slane %v2050, 4
        %v2053 = vshll.u32 %v1436, 16
        %v2055 = vrot.slane %v2053, 5
        %v2056 = vor.u32 %v2052, %v2055
        %v2058 = vshrl.u32 %v1984, 16
        %v2060 = vrot.slane %v2058, 4
        %v2061 = vshll.u32 %v1984, 16
        %v2063 = vrot.slane %v2061, 5
        %v2064 = vor.u32 %v2060, %v2063
        %v2065 = vsel %vm1997, %v2056, %v2064
        %v2067 = vshrl.u32 %v1437, 16
        %v2069 = vrot.slane %v2067, 4
        %v2070 = vshll.u32 %v1437, 16
        %v2072 = vrot.slane %v2070, 5
        %v2073 = vor.u32 %v2069, %v2072
        %v2075 = vshrl.u32 %v1985, 16
        %v2077 = vrot.slane %v2075, 4
        %v2078 = vshll.u32 %v1985, 16
        %v2080 = vrot.slane %v2078, 5
        %v2081 = vor.u32 %v2077, %v2080
        %v2082 = vsel %vm1997, %v2073, %v2081
        %v2084 = vshrl.u32 %v1438, 16
        %v2086 = vrot.slane %v2084, 4
        %v2087 = vshll.u32 %v1438, 16
        %v2089 = vrot.slane %v2087, 5
        %v2090 = vor.u32 %v2086, %v2089
        %v2092 = vshrl.u32 %v1986, 16
        %v2094 = vrot.slane %v2092, 4
        %v2095 = vshll.u32 %v1986, 16
        %v2097 = vrot.slane %v2095, 5
        %v2098 = vor.u32 %v2094, %v2097
        %v2099 = vsel %vm1997, %v2090, %v2098
        %v2101 = vshrl.u32 %v1439, 16
        %v2103 = vrot.slane %v2101, 4
        %v2104 = vshll.u32 %v1439, 16
        %v2106 = vrot.slane %v2104, 5
        %v2107 = vor.u32 %v2103, %v2106
        %v2109 = vshrl.u32 %v1987, 16
        %v2111 = vrot.slane %v2109, 4
        %v2112 = vshll.u32 %v1987, 16
        %v2114 = vrot.slane %v2112, 5
        %v2115 = vor.u32 %v2111, %v2114
        %v2116 = vsel %vm1997, %v2107, %v2115
        %v2118 = vshrl.u32 %v1440, 16
        %v2120 = vrot.slane %v2118, 4
        %v2121 = vshll.u32 %v1440, 16
        %v2123 = vrot.slane %v2121, 5
        %v2124 = vor.u32 %v2120, %v2123
        %v2126 = vshrl.u32 %v1988, 16
        %v2128 = vrot.slane %v2126, 4
        %v2129 = vshll.u32 %v1988, 16
        %v2131 = vrot.slane %v2129, 5
        %v2132 = vor.u32 %v2128, %v2131
        %v2133 = vsel %vm1997, %v2124, %v2132
        %v2135 = vshrl.u32 %v1441, 16
        %v2137 = vrot.slane %v2135, 4
        %v2138 = vshll.u32 %v1441, 16
        %v2140 = vrot.slane %v2138, 5
        %v2141 = vor.u32 %v2137, %v2140
        %v2143 = vshrl.u32 %v1989, 16
        %v2145 = vrot.slane %v2143, 4
        %v2146 = vshll.u32 %v1989, 16
        %v2148 = vrot.slane %v2146, 5
        %v2149 = vor.u32 %v2145, %v2148
        %v2150 = vsel %vm1997, %v2141, %v2149
        %v2152 = vshrl.u32 %v1442, 16
        %v2154 = vrot.slane %v2152, 4
        %v2155 = vshll.u32 %v1442, 16
        %v2157 = vrot.slane %v2155, 5
        %v2158 = vor.u32 %v2154, %v2157
        %v2160 = vshrl.u32 %v1990, 16
        %v2162 = vrot.slane %v2160, 4
        %v2163 = vshll.u32 %v1990, 16
        %v2165 = vrot.slane %v2163, 5
        %v2166 = vor.u32 %v2162, %v2165
        %v2167 = vsel %vm1997, %v2158, %v2166
        %v2169 = vshrl.u32 %v1443, 16
        %v2171 = vrot.slane %v2169, 4
        %v2172 = vshll.u32 %v1443, 16
        %v2174 = vrot.slane %v2172, 5
        %v2175 = vor.u32 %v2171, %v2174
        %v2177 = vshrl.u32 %v1991, 16
        %v2179 = vrot.slane %v2177, 4
        %v2180 = vshll.u32 %v1991, 16
        %v2182 = vrot.slane %v2180, 5
        %v2183 = vor.u32 %v2179, %v2182
        %v2184 = vsel %vm1997, %v2175, %v2183
        %v2186 = vshrl.u32 %v1444, 16
        %v2188 = vrot.slane %v2186, 4
        %v2189 = vshll.u32 %v1444, 16
        %v2191 = vrot.slane %v2189, 5
        %v2192 = vor.u32 %v2188, %v2191
        %v2194 = vshrl.u32 %v1992, 16
        %v2196 = vrot.slane %v2194, 4
        %v2197 = vshll.u32 %v1992, 16
        %v2199 = vrot.slane %v2197, 5
        %v2200 = vor.u32 %v2196, %v2199
        %v2201 = vsel %vm1997, %v2192, %v2200
        %v2203 = vshrl.u32 %v1445, 16
        %v2205 = vrot.slane %v2203, 4
        %v2206 = vshll.u32 %v1445, 16
        %v2208 = vrot.slane %v2206, 5
        %v2209 = vor.u32 %v2205, %v2208
        %v2211 = vshrl.u32 %v1993, 16
        %v2213 = vrot.slane %v2211, 4
        %v2214 = vshll.u32 %v1993, 16
        %v2216 = vrot.slane %v2214, 5
        %v2217 = vor.u32 %v2213, %v2216
        %v2218 = vsel %vm1997, %v2209, %v2217
        %v2220 = vshrl.u32 %v1446, 16
        %v2222 = vrot.slane %v2220, 4
        %v2223 = vshll.u32 %v1446, 16
        %v2225 = vrot.slane %v2223, 5
        %v2226 = vor.u32 %v2222, %v2225
        %v2228 = vshrl.u32 %v1994, 16
        %v2230 = vrot.slane %v2228, 4
        %v2231 = vshll.u32 %v1994, 16
        %v2233 = vrot.slane %v2231, 5
        %v2234 = vor.u32 %v2230, %v2233
        %v2235 = vsel %vm1997, %v2226, %v2234
        %v2237 = vshrl.u32 %v1447, 16
        %v2239 = vrot.slane %v2237, 4
        %v2240 = vshll.u32 %v1447, 16
        %v2242 = vrot.slane %v2240, 5
        %v2243 = vor.u32 %v2239, %v2242
        %v2245 = vshrl.u32 %v1995, 16
        %v2247 = vrot.slane %v2245, 4
        %v2248 = vshll.u32 %v1995, 16
        %v2250 = vrot.slane %v2248, 5
        %v2251 = vor.u32 %v2247, %v2250
        %v2252 = vsel %vm1997, %v2243, %v2251
        %v2254 = vshrl.u32 %v1448, 16
        %v2256 = vrot.slane %v2254, 4
        %v2257 = vshll.u32 %v1448, 16
        %v2259 = vrot.slane %v2257, 5
        %v2260 = vor.u32 %v2256, %v2259
        %v2262 = vshrl.u32 %v1996, 16
        %v2264 = vrot.slane %v2262, 4
        %v2265 = vshll.u32 %v1996, 16
        %v2267 = vrot.slane %v2265, 5
        %v2268 = vor.u32 %v2264, %v2267
        %v2269 = vsel %vm1997, %v2260, %v2268
        %s2286 = scalar_lea.vmem [#allocation11], 128
        %v2287 = vld [vmem:[%s2286] sm:$0xf]
        %v2288 = vld [vmem:[%s2286 + $0x4] sm:$0xf]
        %v2289 = vld [vmem:[%s2286 + $0x8] sm:$0xf]
        %v2290 = vld [vmem:[%s2286 + $0xc] sm:$0xf]
        %v2291 = vld [vmem:[%s2286 + $0x10] sm:$0xf]
        %v2292 = vld [vmem:[%s2286 + $0x14] sm:$0xf]
        %v2293 = vld [vmem:[%s2286 + $0x18] sm:$0xf]
        %v2294 = vld [vmem:[%s2286 + $0x1c] sm:$0xf]
        %v2295 = vld [vmem:[%s2286 + $0x20] sm:$0xf]
        %v2296 = vld [vmem:[%s2286 + $0x24] sm:$0xf]
        %v2297 = vld [vmem:[%s2286 + $0x28] sm:$0xf]
        %v2298 = vld [vmem:[%s2286 + $0x2c] sm:$0xf]
        %v2299 = vld [vmem:[%s2286 + $0x30] sm:$0xf]
        %v2300 = vld [vmem:[%s2286 + $0x34] sm:$0xf]
        %v2301 = vld [vmem:[%s2286 + $0x38] sm:$0xf]
        %v2302 = vld [vmem:[%s2286 + $0x3c] sm:$0xf]
        %v2319 = vunpack.c.l.b16 %v2287
        %v2320 = vunpack.c.l.b16 %v2288
        %v2321 = vunpack.c.l.b16 %v2289
        %v2322 = vunpack.c.l.b16 %v2290
        %v2323 = vunpack.c.l.b16 %v2291
        %v2324 = vunpack.c.l.b16 %v2292
        %v2325 = vunpack.c.l.b16 %v2293
        %v2326 = vunpack.c.l.b16 %v2294
        %v2327 = vunpack.c.l.b16 %v2295
        %v2328 = vunpack.c.l.b16 %v2296
        %v2329 = vunpack.c.l.b16 %v2297
        %v2330 = vunpack.c.l.b16 %v2298
        %v2331 = vunpack.c.l.b16 %v2299
        %v2332 = vunpack.c.l.b16 %v2300
        %v2333 = vunpack.c.l.b16 %v2301
        %v2334 = vunpack.c.l.b16 %v2302
        %v2335 = vpack.c.b16 %v2320, %v2319
        %v2336 = vpack.c.b16 %v2322, %v2321
        %v2337 = vpack.c.b16 %v2324, %v2323
        %v2338 = vpack.c.b16 %v2326, %v2325
        %v2339 = vpack.c.b16 %v2328, %v2327
        %v2340 = vpack.c.b16 %v2330, %v2329
        %v2341 = vpack.c.b16 %v2332, %v2331
        %v2342 = vpack.c.b16 %v2334, %v2333
        %2351 = vmatprep.subr.bf16.mxu0 0
        %2352 = vmatpush1.bf16.msra.mxu0 %v2335
        %2353 = vmatprep.subr.bf16.mxu0 0
        %2354 = vmatpush1.bf16.msra.mxu0 %v2336
        %2355 = vmatprep.subr.bf16.mxu0 0
        %2356 = vmatpush1.bf16.msra.mxu0 %v2337
        %2357 = vmatprep.subr.bf16.mxu0 0
        %2358 = vmatpush1.bf16.msra.mxu0 %v2338
        %2359 = vmatprep.subr.bf16.mxu0 0
        %2360 = vmatpush1.bf16.msra.mxu0 %v2339
        %2361 = vmatprep.subr.bf16.mxu0 0
        %2362 = vmatpush1.bf16.msra.mxu0 %v2340
        %2363 = vmatprep.subr.bf16.mxu0 0
        %2364 = vmatpush1.bf16.msra.mxu0 %v2341
        %2365 = vmatprep.subr.bf16.mxu0 0
        %2366 = vmatpush1.bf16.msra.mxu0 %v2342
        %2367 = vmatprep.subr.bf16.mxu0 0
        %2368 = vmatpush1.bf16.msra.mxu0 0
        %2369 = vmatprep.subr.bf16.mxu0 0
        %2370 = vmatpush1.bf16.msra.mxu0 0
        %2371 = vmatprep.subr.bf16.mxu0 0
        %2372 = vmatpush1.bf16.msra.mxu0 0
        %2373 = vmatprep.subr.bf16.mxu0 0
        %2374 = vmatpush1.bf16.msra.mxu0 0
        %2375 = vmatprep.subr.bf16.mxu0 0
        %2376 = vmatpush1.bf16.msra.mxu0 0
        %2377 = vmatprep.subr.bf16.mxu0 0
        %2378 = vmatpush1.bf16.msra.mxu0 0
        %2379 = vmatprep.subr.bf16.mxu0 0
        %2380 = vmatpush1.bf16.msra.mxu0 0
        %2381 = vmatprep.subr.bf16.mxu0 0
        %2382 = vmatpush1.bf16.msra.mxu0 0
        %2383 = vmatprep.mubr.bf16.mxu0 0
        %2384 = vmatmul.mubr.bf16.gmra.mrb[0].mxu0 %v2014
        %v2385 = vpop.f32.mrb[0].mxu0
        %v2386 = vadd.f32 0.0, %v2385
        %v2387 = vpop.f32.mrb[0].mxu0
        %v2388 = vpop.f32.mrb[0].mxu0
        %v2389 = vadd.f32 0.0, %v2388
        %v2390 = vpop.f32.mrb[0].mxu0
        %2391 = vmatprep.mubr.bf16.mxu0 0
        %2392 = vmatmul.mubr.bf16.gmra.mrb[0].mxu0 %v2031
        %v2393 = vpop.f32.mrb[0].mxu0
        %v2394 = vadd.f32 0.0, %v2393
        %v2395 = vpop.f32.mrb[0].mxu0
        %v2396 = vpop.f32.mrb[0].mxu0
        %v2397 = vadd.f32 0.0, %v2396
        %v2398 = vpop.f32.mrb[0].mxu0
        %2399 = vmatprep.mubr.bf16.mxu0 0
        %2400 = vmatmul.mubr.bf16.gmra.mrb[0].mxu0 %v2048
        %v2401 = vpop.f32.mrb[0].mxu0
        %v2402 = vadd.f32 0.0, %v2401
        %v2403 = vpop.f32.mrb[0].mxu0
        %v2404 = vpop.f32.mrb[0].mxu0
        %v2405 = vadd.f32 0.0, %v2404
        %v2406 = vpop.f32.mrb[0].mxu0
        %2407 = vmatprep.mubr.bf16.mxu0 0
        %2408 = vmatmul.mubr.bf16.gmra.mrb[0].mxu0 %v2065
        %v2409 = vpop.f32.mrb[0].mxu0
        %v2410 = vadd.f32 0.0, %v2409
        %v2411 = vpop.f32.mrb[0].mxu0
        %v2412 = vpop.f32.mrb[0].mxu0
        %v2413 = vadd.f32 0.0, %v2412
        %v2414 = vpop.f32.mrb[0].mxu0
        %2415 = vmatprep.mubr.bf16.mxu0 0
        %2416 = vmatmul.mubr.bf16.gmra.mrb[0].mxu0 %v2082
        %v2417 = vpop.f32.mrb[0].mxu0
        %v2418 = vadd.f32 0.0, %v2417
        %v2419 = vpop.f32.mrb[0].mxu0
        %v2420 = vpop.f32.mrb[0].mxu0
        %v2421 = vadd.f32 0.0, %v2420
        %v2422 = vpop.f32.mrb[0].mxu0
        %2423 = vmatprep.mubr.bf16.mxu0 0
        %2424 = vmatmul.mubr.bf16.gmra.mrb[0].mxu0 %v2099
        %v2425 = vpop.f32.mrb[0].mxu0
        %v2426 = vadd.f32 0.0, %v2425
        %v2427 = vpop.f32.mrb[0].mxu0
        %v2428 = vpop.f32.mrb[0].mxu0
        %v2429 = vadd.f32 0.0, %v2428
        %v2430 = vpop.f32.mrb[0].mxu0
        %2431 = vmatprep.mubr.bf16.mxu0 0
        %2432 = vmatmul.mubr.bf16.gmra.mrb[0].mxu0 %v2116
        %v2433 = vpop.f32.mrb[0].mxu0
        %v2434 = vadd.f32 0.0, %v2433
        %v2435 = vpop.f32.mrb[0].mxu0
        %v2436 = vpop.f32.mrb[0].mxu0
        %v2437 = vadd.f32 0.0, %v2436
        %v2438 = vpop.f32.mrb[0].mxu0
        %2439 = vmatprep.mubr.bf16.mxu0 0
        %2440 = vmatmul.mubr.bf16.gmra.mrb[0].mxu0 %v2133
        %v2441 = vpop.f32.mrb[0].mxu0
        %v2442 = vadd.f32 0.0, %v2441
        %v2443 = vpop.f32.mrb[0].mxu0
        %v2444 = vpop.f32.mrb[0].mxu0
        %v2445 = vadd.f32 0.0, %v2444
        %v2446 = vpop.f32.mrb[0].mxu0
        %2447 = vmatprep.mubr.bf16.mxu0 0
        %2448 = vmatmul.mubr.bf16.gmra.mrb[0].mxu0 %v2150
        %v2449 = vpop.f32.mrb[0].mxu0
        %v2450 = vadd.f32 0.0, %v2449
        %v2451 = vpop.f32.mrb[0].mxu0
        %v2452 = vpop.f32.mrb[0].mxu0
        %v2453 = vadd.f32 0.0, %v2452
        %v2454 = vpop.f32.mrb[0].mxu0
        %2455 = vmatprep.mubr.bf16.mxu0 0
        %2456 = vmatmul.mubr.bf16.gmra.mrb[0].mxu0 %v2167
        %v2457 = vpop.f32.mrb[0].mxu0
        %v2458 = vadd.f32 0.0, %v2457
        %v2459 = vpop.f32.mrb[0].mxu0
        %v2460 = vpop.f32.mrb[0].mxu0
        %v2461 = vadd.f32 0.0, %v2460
        %v2462 = vpop.f32.mrb[0].mxu0
        %2463 = vmatprep.mubr.bf16.mxu0 0
        %2464 = vmatmul.mubr.bf16.gmra.mrb[0].mxu0 %v2184
        %v2465 = vpop.f32.mrb[0].mxu0
        %v2466 = vadd.f32 0.0, %v2465
        %v2467 = vpop.f32.mrb[0].mxu0
        %v2468 = vpop.f32.mrb[0].mxu0
        %v2469 = vadd.f32 0.0, %v2468
        %v2470 = vpop.f32.mrb[0].mxu0
        %2471 = vmatprep.mubr.bf16.mxu0 0
        %2472 = vmatmul.mubr.bf16.gmra.mrb[0].mxu0 %v2201
        %v2473 = vpop.f32.mrb[0].mxu0
        %v2474 = vadd.f32 0.0, %v2473
        %v2475 = vpop.f32.mrb[0].mxu0
        %v2476 = vpop.f32.mrb[0].mxu0
        %v2477 = vadd.f32 0.0, %v2476
        %v2478 = vpop.f32.mrb[0].mxu0
        %2479 = vmatprep.mubr.bf16.mxu0 0
        %2480 = vmatmul.mubr.bf16.gmra.mrb[0].mxu0 %v2218
        %v2481 = vpop.f32.mrb[0].mxu0
        %v2482 = vadd.f32 0.0, %v2481
        %v2483 = vpop.f32.mrb[0].mxu0
        %v2484 = vpop.f32.mrb[0].mxu0
        %v2485 = vadd.f32 0.0, %v2484
        %v2486 = vpop.f32.mrb[0].mxu0
        %2487 = vmatprep.mubr.bf16.mxu0 0
        %2488 = vmatmul.mubr.bf16.gmra.mrb[0].mxu0 %v2235
        %v2489 = vpop.f32.mrb[0].mxu0
        %v2490 = vadd.f32 0.0, %v2489
        %v2491 = vpop.f32.mrb[0].mxu0
        %v2492 = vpop.f32.mrb[0].mxu0
        %v2493 = vadd.f32 0.0, %v2492
        %v2494 = vpop.f32.mrb[0].mxu0
        %2495 = vmatprep.mubr.bf16.mxu0 0
        %2496 = vmatmul.mubr.bf16.gmra.mrb[0].mxu0 %v2252
        %v2497 = vpop.f32.mrb[0].mxu0
        %v2498 = vadd.f32 0.0, %v2497
        %v2499 = vpop.f32.mrb[0].mxu0
        %v2500 = vpop.f32.mrb[0].mxu0
        %v2501 = vadd.f32 0.0, %v2500
        %v2502 = vpop.f32.mrb[0].mxu0
        %2503 = vmatprep.mubr.bf16.mxu0 0
        %2504 = vmatmul.mubr.bf16.gmra.mrb[0].mxu0 %v2269
        %v2505 = vpop.f32.mrb[0].mxu0
        %v2506 = vadd.f32 0.0, %v2505
        %v2507 = vpop.f32.mrb[0].mxu0
        %v2508 = vpop.f32.mrb[0].mxu0
        %v2509 = vadd.f32 0.0, %v2508
        %v2510 = vpop.f32.mrb[0].mxu0
        %2511 = vdwg.mxu0
        %v2512 = vadd.f32 %v1855, %v2386
        %v2513 = vadd.f32 %v1858, %v2389
        %v2514 = vadd.f32 %v1863, %v2394
        %v2515 = vadd.f32 %v1866, %v2397
        %v2516 = vadd.f32 %v1871, %v2402
        %v2517 = vadd.f32 %v1874, %v2405
        %v2518 = vadd.f32 %v1879, %v2410
        %v2519 = vadd.f32 %v1882, %v2413
        %v2520 = vadd.f32 %v1887, %v2418
        %v2521 = vadd.f32 %v1890, %v2421
        %v2522 = vadd.f32 %v1895, %v2426
        %v2523 = vadd.f32 %v1898, %v2429
        %v2524 = vadd.f32 %v1903, %v2434
        %v2525 = vadd.f32 %v1906, %v2437
        %v2526 = vadd.f32 %v1911, %v2442
        %v2527 = vadd.f32 %v1914, %v2445
        %v2528 = vadd.f32 %v1919, %v2450
        %v2529 = vadd.f32 %v1922, %v2453
        %v2530 = vadd.f32 %v1927, %v2458
        %v2531 = vadd.f32 %v1930, %v2461
        %v2532 = vadd.f32 %v1935, %v2466
        %v2533 = vadd.f32 %v1938, %v2469
        %v2534 = vadd.f32 %v1943, %v2474
        %v2535 = vadd.f32 %v1946, %v2477
        %v2536 = vadd.f32 %v1951, %v2482
        %v2537 = vadd.f32 %v1954, %v2485
        %v2538 = vadd.f32 %v1959, %v2490
        %v2539 = vadd.f32 %v1962, %v2493
        %v2540 = vadd.f32 %v1967, %v2498
        %v2541 = vadd.f32 %v1970, %v2501
        %v2542 = vadd.f32 %v1975, %v2506
        %v2543 = vadd.f32 %v1978, %v2509
        %v2544 = vld [vmem:[%s1004] sm:$0xf8]
        %v2545 = vld [vmem:[%s1004 + $0x8] sm:$0xf]
        %v2546 = vld [vmem:[%s1004 + $0x10] sm:$0xf8]
        %v2547 = vld [vmem:[%s1004 + $0x18] sm:$0xf]
        %v2548 = vld [vmem:[%s1004 + $0x20] sm:$0xf8]
        %v2549 = vld [vmem:[%s1004 + $0x28] sm:$0xf]
        %v2550 = vld [vmem:[%s1004 + $0x30] sm:$0xf8]
        %v2551 = vld [vmem:[%s1004 + $0x38] sm:$0xf]
        %v2552 = vld [vmem:[%s1004 + $0x40] sm:$0xf8]
        %v2553 = vld [vmem:[%s1004 + $0x48] sm:$0xf]
        %v2554 = vld [vmem:[%s1004 + $0x50] sm:$0xf8]
        %v2555 = vld [vmem:[%s1004 + $0x58] sm:$0xf]
        %v2556 = vld [vmem:[%s1004 + $0x60] sm:$0xf8]
        %v2557 = vld [vmem:[%s1004 + $0x68] sm:$0xf]
        %v2558 = vld [vmem:[%s1004 + $0x70] sm:$0xf8]
        %v2559 = vld [vmem:[%s1004 + $0x78] sm:$0xf]
        %v2560 = vld [vmem:[%s1004 + $0x80] sm:$0xf8]
        %v2561 = vld [vmem:[%s1004 + $0x88] sm:$0xf]
        %v2562 = vld [vmem:[%s1004 + $0x90] sm:$0xf8]
        %v2563 = vld [vmem:[%s1004 + $0x98] sm:$0xf]
        %v2564 = vld [vmem:[%s1004 + $0xa0] sm:$0xf8]
        %v2565 = vld [vmem:[%s1004 + $0xa8] sm:$0xf]
        %v2566 = vld [vmem:[%s1004 + $0xb0] sm:$0xf8]
        %v2567 = vld [vmem:[%s1004 + $0xb8] sm:$0xf]
        %v2568 = vld [vmem:[%s1004 + $0xc0] sm:$0xf8]
        %v2569 = vld [vmem:[%s1004 + $0xc8] sm:$0xf]
        %v2570 = vld [vmem:[%s1004 + $0xd0] sm:$0xf8]
        %v2571 = vld [vmem:[%s1004 + $0xd8] sm:$0xf]
        %v2572 = vld [vmem:[%s1004 + $0xe0] sm:$0xf8]
        %v2573 = vld [vmem:[%s1004 + $0xe8] sm:$0xf]
        %v2574 = vld [vmem:[%s1004 + $0xf0] sm:$0xf8]
        %v2575 = vld [vmem:[%s1004 + $0xf8] sm:$0xf]
        %v2577 = vshrl.u32 %v2544, 16
        %v2579 = vrot.slane %v2577, 3
        %v2580 = vshll.u32 %v2544, 16
        %v2582 = vrot.slane %v2580, 4
        %v2583 = vor.u32 %v2579, %v2582
        %v2585 = vshrl.u32 %v2545, 16
        %v2587 = vrot.slane %v2585, 3
        %v2588 = vshll.u32 %v2545, 16
        %v2590 = vrot.slane %v2588, 4
        %v2591 = vor.u32 %v2587, %v2590
        %v2592 = vsel %vm1128, %v2583, %v2591
        %v2594 = vshrl.u32 %v2546, 16
        %v2596 = vrot.slane %v2594, 3
        %v2597 = vshll.u32 %v2546, 16
        %v2599 = vrot.slane %v2597, 4
        %v2600 = vor.u32 %v2596, %v2599
        %v2602 = vshrl.u32 %v2547, 16
        %v2604 = vrot.slane %v2602, 3
        %v2605 = vshll.u32 %v2547, 16
        %v2607 = vrot.slane %v2605, 4
        %v2608 = vor.u32 %v2604, %v2607
        %v2609 = vsel %vm1128, %v2600, %v2608
        %v2611 = vshrl.u32 %v2548, 16
        %v2613 = vrot.slane %v2611, 3
        %v2614 = vshll.u32 %v2548, 16
        %v2616 = vrot.slane %v2614, 4
        %v2617 = vor.u32 %v2613, %v2616
        %v2619 = vshrl.u32 %v2549, 16
        %v2621 = vrot.slane %v2619, 3
        %v2622 = vshll.u32 %v2549, 16
        %v2624 = vrot.slane %v2622, 4
        %v2625 = vor.u32 %v2621, %v2624
        %v2626 = vsel %vm1128, %v2617, %v2625
        %v2628 = vshrl.u32 %v2550, 16
        %v2630 = vrot.slane %v2628, 3
        %v2631 = vshll.u32 %v2550, 16
        %v2633 = vrot.slane %v2631, 4
        %v2634 = vor.u32 %v2630, %v2633
        %v2636 = vshrl.u32 %v2551, 16
        %v2638 = vrot.slane %v2636, 3
        %v2639 = vshll.u32 %v2551, 16
        %v2641 = vrot.slane %v2639, 4
        %v2642 = vor.u32 %v2638, %v2641
        %v2643 = vsel %vm1128, %v2634, %v2642
        %v2645 = vshrl.u32 %v2552, 16
        %v2647 = vrot.slane %v2645, 3
        %v2648 = vshll.u32 %v2552, 16
        %v2650 = vrot.slane %v2648, 4
        %v2651 = vor.u32 %v2647, %v2650
        %v2653 = vshrl.u32 %v2553, 16
        %v2655 = vrot.slane %v2653, 3
        %v2656 = vshll.u32 %v2553, 16
        %v2658 = vrot.slane %v2656, 4
        %v2659 = vor.u32 %v2655, %v2658
        %v2660 = vsel %vm1128, %v2651, %v2659
        %v2662 = vshrl.u32 %v2554, 16
        %v2664 = vrot.slane %v2662, 3
        %v2665 = vshll.u32 %v2554, 16
        %v2667 = vrot.slane %v2665, 4
        %v2668 = vor.u32 %v2664, %v2667
        %v2670 = vshrl.u32 %v2555, 16
        %v2672 = vrot.slane %v2670, 3
        %v2673 = vshll.u32 %v2555, 16
        %v2675 = vrot.slane %v2673, 4
        %v2676 = vor.u32 %v2672, %v2675
        %v2677 = vsel %vm1128, %v2668, %v2676
        %v2679 = vshrl.u32 %v2556, 16
        %v2681 = vrot.slane %v2679, 3
        %v2682 = vshll.u32 %v2556, 16
        %v2684 = vrot.slane %v2682, 4
        %v2685 = vor.u32 %v2681, %v2684
        %v2687 = vshrl.u32 %v2557, 16
        %v2689 = vrot.slane %v2687, 3
        %v2690 = vshll.u32 %v2557, 16
        %v2692 = vrot.slane %v2690, 4
        %v2693 = vor.u32 %v2689, %v2692
        %v2694 = vsel %vm1128, %v2685, %v2693
        %v2696 = vshrl.u32 %v2558, 16
        %v2698 = vrot.slane %v2696, 3
        %v2699 = vshll.u32 %v2558, 16
        %v2701 = vrot.slane %v2699, 4
        %v2702 = vor.u32 %v2698, %v2701
        %v2704 = vshrl.u32 %v2559, 16
        %v2706 = vrot.slane %v2704, 3
        %v2707 = vshll.u32 %v2559, 16
        %v2709 = vrot.slane %v2707, 4
        %v2710 = vor.u32 %v2706, %v2709
        %v2711 = vsel %vm1128, %v2702, %v2710
        %v2713 = vshrl.u32 %v2560, 16
        %v2715 = vrot.slane %v2713, 3
        %v2716 = vshll.u32 %v2560, 16
        %v2718 = vrot.slane %v2716, 4
        %v2719 = vor.u32 %v2715, %v2718
        %v2721 = vshrl.u32 %v2561, 16
        %v2723 = vrot.slane %v2721, 3
        %v2724 = vshll.u32 %v2561, 16
        %v2726 = vrot.slane %v2724, 4
        %v2727 = vor.u32 %v2723, %v2726
        %v2728 = vsel %vm1128, %v2719, %v2727
        %v2730 = vshrl.u32 %v2562, 16
        %v2732 = vrot.slane %v2730, 3
        %v2733 = vshll.u32 %v2562, 16
        %v2735 = vrot.slane %v2733, 4
        %v2736 = vor.u32 %v2732, %v2735
        %v2738 = vshrl.u32 %v2563, 16
        %v2740 = vrot.slane %v2738, 3
        %v2741 = vshll.u32 %v2563, 16
        %v2743 = vrot.slane %v2741, 4
        %v2744 = vor.u32 %v2740, %v2743
        %v2745 = vsel %vm1128, %v2736, %v2744
        %v2747 = vshrl.u32 %v2564, 16
        %v2749 = vrot.slane %v2747, 3
        %v2750 = vshll.u32 %v2564, 16
        %v2752 = vrot.slane %v2750, 4
        %v2753 = vor.u32 %v2749, %v2752
        %v2755 = vshrl.u32 %v2565, 16
        %v2757 = vrot.slane %v2755, 3
        %v2758 = vshll.u32 %v2565, 16
        %v2760 = vrot.slane %v2758, 4
        %v2761 = vor.u32 %v2757, %v2760
        %v2762 = vsel %vm1128, %v2753, %v2761
        %v2764 = vshrl.u32 %v2566, 16
        %v2766 = vrot.slane %v2764, 3
        %v2767 = vshll.u32 %v2566, 16
        %v2769 = vrot.slane %v2767, 4
        %v2770 = vor.u32 %v2766, %v2769
        %v2772 = vshrl.u32 %v2567, 16
        %v2774 = vrot.slane %v2772, 3
        %v2775 = vshll.u32 %v2567, 16
        %v2777 = vrot.slane %v2775, 4
        %v2778 = vor.u32 %v2774, %v2777
        %v2779 = vsel %vm1128, %v2770, %v2778
        %v2781 = vshrl.u32 %v2568, 16
        %v2783 = vrot.slane %v2781, 3
        %v2784 = vshll.u32 %v2568, 16
        %v2786 = vrot.slane %v2784, 4
        %v2787 = vor.u32 %v2783, %v2786
        %v2789 = vshrl.u32 %v2569, 16
        %v2791 = vrot.slane %v2789, 3
        %v2792 = vshll.u32 %v2569, 16
        %v2794 = vrot.slane %v2792, 4
        %v2795 = vor.u32 %v2791, %v2794
        %v2796 = vsel %vm1128, %v2787, %v2795
        %v2798 = vshrl.u32 %v2570, 16
        %v2800 = vrot.slane %v2798, 3
        %v2801 = vshll.u32 %v2570, 16
        %v2803 = vrot.slane %v2801, 4
        %v2804 = vor.u32 %v2800, %v2803
        %v2806 = vshrl.u32 %v2571, 16
        %v2808 = vrot.slane %v2806, 3
        %v2809 = vshll.u32 %v2571, 16
        %v2811 = vrot.slane %v2809, 4
        %v2812 = vor.u32 %v2808, %v2811
        %v2813 = vsel %vm1128, %v2804, %v2812
        %v2815 = vshrl.u32 %v2572, 16
        %v2817 = vrot.slane %v2815, 3
        %v2818 = vshll.u32 %v2572, 16
        %v2820 = vrot.slane %v2818, 4
        %v2821 = vor.u32 %v2817, %v2820
        %v2823 = vshrl.u32 %v2573, 16
        %v2825 = vrot.slane %v2823, 3
        %v2826 = vshll.u32 %v2573, 16
        %v2828 = vrot.slane %v2826, 4
        %v2829 = vor.u32 %v2825, %v2828
        %v2830 = vsel %vm1128, %v2821, %v2829
        %v2832 = vshrl.u32 %v2574, 16
        %v2834 = vrot.slane %v2832, 3
        %v2835 = vshll.u32 %v2574, 16
        %v2837 = vrot.slane %v2835, 4
        %v2838 = vor.u32 %v2834, %v2837
        %v2840 = vshrl.u32 %v2575, 16
        %v2842 = vrot.slane %v2840, 3
        %v2843 = vshll.u32 %v2575, 16
        %v2845 = vrot.slane %v2843, 4
        %v2846 = vor.u32 %v2842, %v2845
        %v2847 = vsel %vm1128, %v2838, %v2846
        %s2864 = scalar_lea.vmem [#allocation11], 192
        %v2865 = vld [vmem:[%s2864] sm:$0xf]
        %v2866 = vld [vmem:[%s2864 + $0x4] sm:$0xf]
        %v2867 = vld [vmem:[%s2864 + $0x8] sm:$0xf]
        %v2868 = vld [vmem:[%s2864 + $0xc] sm:$0xf]
        %v2869 = vld [vmem:[%s2864 + $0x10] sm:$0xf]
        %v2870 = vld [vmem:[%s2864 + $0x14] sm:$0xf]
        %v2871 = vld [vmem:[%s2864 + $0x18] sm:$0xf]
        %v2872 = vld [vmem:[%s2864 + $0x1c] sm:$0xf]
        %v2873 = vld [vmem:[%s2864 + $0x20] sm:$0xf]
        %v2874 = vld [vmem:[%s2864 + $0x24] sm:$0xf]
        %v2875 = vld [vmem:[%s2864 + $0x28] sm:$0xf]
        %v2876 = vld [vmem:[%s2864 + $0x2c] sm:$0xf]
        %v2877 = vld [vmem:[%s2864 + $0x30] sm:$0xf]
        %v2878 = vld [vmem:[%s2864 + $0x34] sm:$0xf]
        %v2879 = vld [vmem:[%s2864 + $0x38] sm:$0xf]
        %v2880 = vld [vmem:[%s2864 + $0x3c] sm:$0xf]
        %v2897 = vunpack.c.l.b16 %v2865
        %v2898 = vunpack.c.l.b16 %v2866
        %v2899 = vunpack.c.l.b16 %v2867
        %v2900 = vunpack.c.l.b16 %v2868
        %v2901 = vunpack.c.l.b16 %v2869
        %v2902 = vunpack.c.l.b16 %v2870
        %v2903 = vunpack.c.l.b16 %v2871
        %v2904 = vunpack.c.l.b16 %v2872
        %v2905 = vunpack.c.l.b16 %v2873
        %v2906 = vunpack.c.l.b16 %v2874
        %v2907 = vunpack.c.l.b16 %v2875
        %v2908 = vunpack.c.l.b16 %v2876
        %v2909 = vunpack.c.l.b16 %v2877
        %v2910 = vunpack.c.l.b16 %v2878
        %v2911 = vunpack.c.l.b16 %v2879
        %v2912 = vunpack.c.l.b16 %v2880
        %v2913 = vpack.c.b16 %v2898, %v2897
        %v2914 = vpack.c.b16 %v2900, %v2899
        %v2915 = vpack.c.b16 %v2902, %v2901
        %v2916 = vpack.c.b16 %v2904, %v2903
        %v2917 = vpack.c.b16 %v2906, %v2905
        %v2918 = vpack.c.b16 %v2908, %v2907
        %v2919 = vpack.c.b16 %v2910, %v2909
        %v2920 = vpack.c.b16 %v2912, %v2911
        %2929 = vmatprep.subr.bf16.mxu0 0
        %2930 = vmatpush1.bf16.msra.mxu0 %v2913
        %2931 = vmatprep.subr.bf16.mxu0 0
        %2932 = vmatpush1.bf16.msra.mxu0 %v2914
        %2933 = vmatprep.subr.bf16.mxu0 0
        %2934 = vmatpush1.bf16.msra.mxu0 %v2915
        %2935 = vmatprep.subr.bf16.mxu0 0
        %2936 = vmatpush1.bf16.msra.mxu0 %v2916
        %2937 = vmatprep.subr.bf16.mxu0 0
        %2938 = vmatpush1.bf16.msra.mxu0 %v2917
        %2939 = vmatprep.subr.bf16.mxu0 0
        %2940 = vmatpush1.bf16.msra.mxu0 %v2918
        %2941 = vmatprep.subr.bf16.mxu0 0
        %2942 = vmatpush1.bf16.msra.mxu0 %v2919
        %2943 = vmatprep.subr.bf16.mxu0 0
        %2944 = vmatpush1.bf16.msra.mxu0 %v2920
        %2945 = vmatprep.subr.bf16.mxu0 0
        %2946 = vmatpush1.bf16.msra.mxu0 0
        %2947 = vmatprep.subr.bf16.mxu0 0
        %2948 = vmatpush1.bf16.msra.mxu0 0
        %2949 = vmatprep.subr.bf16.mxu0 0
        %2950 = vmatpush1.bf16.msra.mxu0 0
        %2951 = vmatprep.subr.bf16.mxu0 0
        %2952 = vmatpush1.bf16.msra.mxu0 0
        %2953 = vmatprep.subr.bf16.mxu0 0
        %2954 = vmatpush1.bf16.msra.mxu0 0
        %2955 = vmatprep.subr.bf16.mxu0 0
        %2956 = vmatpush1.bf16.msra.mxu0 0
        %2957 = vmatprep.subr.bf16.mxu0 0
        %2958 = vmatpush1.bf16.msra.mxu0 0
        %2959 = vmatprep.subr.bf16.mxu0 0
        %2960 = vmatpush1.bf16.msra.mxu0 0
        %2961 = vmatprep.mubr.bf16.mxu0 0
        %2962 = vmatmul.mubr.bf16.gmra.mrb[0].mxu0 %v2592
        %v2963 = vpop.f32.mrb[0].mxu0
        %v2964 = vadd.f32 0.0, %v2963
        %v2965 = vpop.f32.mrb[0].mxu0
        %v2966 = vpop.f32.mrb[0].mxu0
        %v2967 = vadd.f32 0.0, %v2966
        %v2968 = vpop.f32.mrb[0].mxu0
        %2969 = vmatprep.mubr.bf16.mxu0 0
        %2970 = vmatmul.mubr.bf16.gmra.mrb[0].mxu0 %v2609
        %v2971 = vpop.f32.mrb[0].mxu0
        %v2972 = vadd.f32 0.0, %v2971
        %v2973 = vpop.f32.mrb[0].mxu0
        %v2974 = vpop.f32.mrb[0].mxu0
        %v2975 = vadd.f32 0.0, %v2974
        %v2976 = vpop.f32.mrb[0].mxu0
        %2977 = vmatprep.mubr.bf16.mxu0 0
        %2978 = vmatmul.mubr.bf16.gmra.mrb[0].mxu0 %v2626
        %v2979 = vpop.f32.mrb[0].mxu0
        %v2980 = vadd.f32 0.0, %v2979
        %v2981 = vpop.f32.mrb[0].mxu0
        %v2982 = vpop.f32.mrb[0].mxu0
        %v2983 = vadd.f32 0.0, %v2982
        %v2984 = vpop.f32.mrb[0].mxu0
        %2985 = vmatprep.mubr.bf16.mxu0 0
        %2986 = vmatmul.mubr.bf16.gmra.mrb[0].mxu0 %v2643
        %v2987 = vpop.f32.mrb[0].mxu0
        %v2988 = vadd.f32 0.0, %v2987
        %v2989 = vpop.f32.mrb[0].mxu0
        %v2990 = vpop.f32.mrb[0].mxu0
        %v2991 = vadd.f32 0.0, %v2990
        %v2992 = vpop.f32.mrb[0].mxu0
        %2993 = vmatprep.mubr.bf16.mxu0 0
        %2994 = vmatmul.mubr.bf16.gmra.mrb[0].mxu0 %v2660
        %v2995 = vpop.f32.mrb[0].mxu0
        %v2996 = vadd.f32 0.0, %v2995
        %v2997 = vpop.f32.mrb[0].mxu0
        %v2998 = vpop.f32.mrb[0].mxu0
        %v2999 = vadd.f32 0.0, %v2998
        %v3000 = vpop.f32.mrb[0].mxu0
        %3001 = vmatprep.mubr.bf16.mxu0 0
        %3002 = vmatmul.mubr.bf16.gmra.mrb[0].mxu0 %v2677
        %v3003 = vpop.f32.mrb[0].mxu0
        %v3004 = vadd.f32 0.0, %v3003
        %v3005 = vpop.f32.mrb[0].mxu0
        %v3006 = vpop.f32.mrb[0].mxu0
        %v3007 = vadd.f32 0.0, %v3006
        %v3008 = vpop.f32.mrb[0].mxu0
        %3009 = vmatprep.mubr.bf16.mxu0 0
        %3010 = vmatmul.mubr.bf16.gmra.mrb[0].mxu0 %v2694
        %v3011 = vpop.f32.mrb[0].mxu0
        %v3012 = vadd.f32 0.0, %v3011
        %v3013 = vpop.f32.mrb[0].mxu0
        %v3014 = vpop.f32.mrb[0].mxu0
        %v3015 = vadd.f32 0.0, %v3014
        %v3016 = vpop.f32.mrb[0].mxu0
        %3017 = vmatprep.mubr.bf16.mxu0 0
        %3018 = vmatmul.mubr.bf16.gmra.mrb[0].mxu0 %v2711
        %v3019 = vpop.f32.mrb[0].mxu0
        %v3020 = vadd.f32 0.0, %v3019
        %v3021 = vpop.f32.mrb[0].mxu0
        %v3022 = vpop.f32.mrb[0].mxu0
        %v3023 = vadd.f32 0.0, %v3022
        %v3024 = vpop.f32.mrb[0].mxu0
        %3025 = vmatprep.mubr.bf16.mxu0 0
        %3026 = vmatmul.mubr.bf16.gmra.mrb[0].mxu0 %v2728
        %v3027 = vpop.f32.mrb[0].mxu0
        %v3028 = vadd.f32 0.0, %v3027
        %v3029 = vpop.f32.mrb[0].mxu0
        %v3030 = vpop.f32.mrb[0].mxu0
        %v3031 = vadd.f32 0.0, %v3030
        %v3032 = vpop.f32.mrb[0].mxu0
        %3033 = vmatprep.mubr.bf16.mxu0 0
        %3034 = vmatmul.mubr.bf16.gmra.mrb[0].mxu0 %v2745
        %v3035 = vpop.f32.mrb[0].mxu0
        %v3036 = vadd.f32 0.0, %v3035
        %v3037 = vpop.f32.mrb[0].mxu0
        %v3038 = vpop.f32.mrb[0].mxu0
        %v3039 = vadd.f32 0.0, %v3038
        %v3040 = vpop.f32.mrb[0].mxu0
        %3041 = vmatprep.mubr.bf16.mxu0 0
        %3042 = vmatmul.mubr.bf16.gmra.mrb[0].mxu0 %v2762
        %v3043 = vpop.f32.mrb[0].mxu0
        %v3044 = vadd.f32 0.0, %v3043
        %v3045 = vpop.f32.mrb[0].mxu0
        %v3046 = vpop.f32.mrb[0].mxu0
        %v3047 = vadd.f32 0.0, %v3046
        %v3048 = vpop.f32.mrb[0].mxu0
        %3049 = vmatprep.mubr.bf16.mxu0 0
        %3050 = vmatmul.mubr.bf16.gmra.mrb[0].mxu0 %v2779
        %v3051 = vpop.f32.mrb[0].mxu0
        %v3052 = vadd.f32 0.0, %v3051
        %v3053 = vpop.f32.mrb[0].mxu0
        %v3054 = vpop.f32.mrb[0].mxu0
        %v3055 = vadd.f32 0.0, %v3054
        %v3056 = vpop.f32.mrb[0].mxu0
        %3057 = vmatprep.mubr.bf16.mxu0 0
        %3058 = vmatmul.mubr.bf16.gmra.mrb[0].mxu0 %v2796
        %v3059 = vpop.f32.mrb[0].mxu0
        %v3060 = vadd.f32 0.0, %v3059
        %v3061 = vpop.f32.mrb[0].mxu0
        %v3062 = vpop.f32.mrb[0].mxu0
        %v3063 = vadd.f32 0.0, %v3062
        %v3064 = vpop.f32.mrb[0].mxu0
        %3065 = vmatprep.mubr.bf16.mxu0 0
        %3066 = vmatmul.mubr.bf16.gmra.mrb[0].mxu0 %v2813
        %v3067 = vpop.f32.mrb[0].mxu0
        %v3068 = vadd.f32 0.0, %v3067
        %v3069 = vpop.f32.mrb[0].mxu0
        %v3070 = vpop.f32.mrb[0].mxu0
        %v3071 = vadd.f32 0.0, %v3070
        %v3072 = vpop.f32.mrb[0].mxu0
        %3073 = vmatprep.mubr.bf16.mxu0 0
        %3074 = vmatmul.mubr.bf16.gmra.mrb[0].mxu0 %v2830
        %v3075 = vpop.f32.mrb[0].mxu0
        %v3076 = vadd.f32 0.0, %v3075
        %v3077 = vpop.f32.mrb[0].mxu0
        %v3078 = vpop.f32.mrb[0].mxu0
        %v3079 = vadd.f32 0.0, %v3078
        %v3080 = vpop.f32.mrb[0].mxu0
        %3081 = vmatprep.mubr.bf16.mxu0 0
        %3082 = vmatmul.mubr.bf16.gmra.mrb[0].mxu0 %v2847
        %v3083 = vpop.f32.mrb[0].mxu0
        %v3084 = vadd.f32 0.0, %v3083
        %v3085 = vpop.f32.mrb[0].mxu0
        %v3086 = vpop.f32.mrb[0].mxu0
        %v3087 = vadd.f32 0.0, %v3086
        %v3088 = vpop.f32.mrb[0].mxu0
        %3089 = vdwg.mxu0
        %v3090 = vadd.f32 %v2512, %v2964
        %v3091 = vadd.f32 %v2513, %v2967
        %v3092 = vadd.f32 %v2514, %v2972
        %v3093 = vadd.f32 %v2515, %v2975
        %v3094 = vadd.f32 %v2516, %v2980
        %v3095 = vadd.f32 %v2517, %v2983
        %v3096 = vadd.f32 %v2518, %v2988
        %v3097 = vadd.f32 %v2519, %v2991
        %v3098 = vadd.f32 %v2520, %v2996
        %v3099 = vadd.f32 %v2521, %v2999
        %v3100 = vadd.f32 %v2522, %v3004
        %v3101 = vadd.f32 %v2523, %v3007
        %v3102 = vadd.f32 %v2524, %v3012
        %v3103 = vadd.f32 %v2525, %v3015
        %v3104 = vadd.f32 %v2526, %v3020
        %v3105 = vadd.f32 %v2527, %v3023
        %v3106 = vadd.f32 %v2528, %v3028
        %v3107 = vadd.f32 %v2529, %v3031
        %v3108 = vadd.f32 %v2530, %v3036
        %v3109 = vadd.f32 %v2531, %v3039
        %v3110 = vadd.f32 %v2532, %v3044
        %v3111 = vadd.f32 %v2533, %v3047
        %v3112 = vadd.f32 %v2534, %v3052
        %v3113 = vadd.f32 %v2535, %v3055
        %v3114 = vadd.f32 %v2536, %v3060
        %v3115 = vadd.f32 %v2537, %v3063
        %v3116 = vadd.f32 %v2538, %v3068
        %v3117 = vadd.f32 %v2539, %v3071
        %v3118 = vadd.f32 %v2540, %v3076
        %v3119 = vadd.f32 %v2541, %v3079
        %v3120 = vadd.f32 %v2542, %v3084
        %v3121 = vadd.f32 %v2543, %v3087
        %v3122 = vld [vmem:[%s1004] sm:$0xf0]
        %v3123 = vld [vmem:[%s1004 + $0x10] sm:$0xf0]
        %v3124 = vld [vmem:[%s1004 + $0x20] sm:$0xf0]
        %v3125 = vld [vmem:[%s1004 + $0x30] sm:$0xf0]
        %v3126 = vld [vmem:[%s1004 + $0x40] sm:$0xf0]
        %v3127 = vld [vmem:[%s1004 + $0x50] sm:$0xf0]
        %v3128 = vld [vmem:[%s1004 + $0x60] sm:$0xf0]
        %v3129 = vld [vmem:[%s1004 + $0x70] sm:$0xf0]
        %v3130 = vld [vmem:[%s1004 + $0x80] sm:$0xf0]
        %v3131 = vld [vmem:[%s1004 + $0x90] sm:$0xf0]
        %v3132 = vld [vmem:[%s1004 + $0xa0] sm:$0xf0]
        %v3133 = vld [vmem:[%s1004 + $0xb0] sm:$0xf0]
        %v3134 = vld [vmem:[%s1004 + $0xc0] sm:$0xf0]
        %v3135 = vld [vmem:[%s1004 + $0xd0] sm:$0xf0]
        %v3136 = vld [vmem:[%s1004 + $0xe0] sm:$0xf0]
        %v3137 = vld [vmem:[%s1004 + $0xf0] sm:$0xf0]
        %v3170 = vrot.slane %v3122, 4
        %v3171 = vrot.slane %v2545, 4
        %v3172 = vsel %vm1481, %v3170, %v3171
        %v3173 = vrot.slane %v3123, 4
        %v3174 = vrot.slane %v2547, 4
        %v3175 = vsel %vm1481, %v3173, %v3174
        %v3176 = vrot.slane %v3124, 4
        %v3177 = vrot.slane %v2549, 4
        %v3178 = vsel %vm1481, %v3176, %v3177
        %v3179 = vrot.slane %v3125, 4
        %v3180 = vrot.slane %v2551, 4
        %v3181 = vsel %vm1481, %v3179, %v3180
        %v3182 = vrot.slane %v3126, 4
        %v3183 = vrot.slane %v2553, 4
        %v3184 = vsel %vm1481, %v3182, %v3183
        %v3185 = vrot.slane %v3127, 4
        %v3186 = vrot.slane %v2555, 4
        %v3187 = vsel %vm1481, %v3185, %v3186
        %v3188 = vrot.slane %v3128, 4
        %v3189 = vrot.slane %v2557, 4
        %v3190 = vsel %vm1481, %v3188, %v3189
        %v3191 = vrot.slane %v3129, 4
        %v3192 = vrot.slane %v2559, 4
        %v3193 = vsel %vm1481, %v3191, %v3192
        %v3194 = vrot.slane %v3130, 4
        %v3195 = vrot.slane %v2561, 4
        %v3196 = vsel %vm1481, %v3194, %v3195
        %v3197 = vrot.slane %v3131, 4
        %v3198 = vrot.slane %v2563, 4
        %v3199 = vsel %vm1481, %v3197, %v3198
        %v3200 = vrot.slane %v3132, 4
        %v3201 = vrot.slane %v2565, 4
        %v3202 = vsel %vm1481, %v3200, %v3201
        %v3203 = vrot.slane %v3133, 4
        %v3204 = vrot.slane %v2567, 4
        %v3205 = vsel %vm1481, %v3203, %v3204
        %v3206 = vrot.slane %v3134, 4
        %v3207 = vrot.slane %v2569, 4
        %v3208 = vsel %vm1481, %v3206, %v3207
        %v3209 = vrot.slane %v3135, 4
        %v3210 = vrot.slane %v2571, 4
        %v3211 = vsel %vm1481, %v3209, %v3210
        %v3212 = vrot.slane %v3136, 4
        %v3213 = vrot.slane %v2573, 4
        %v3214 = vsel %vm1481, %v3212, %v3213
        %v3215 = vrot.slane %v3137, 4
        %v3216 = vrot.slane %v2575, 4
        %v3217 = vsel %vm1481, %v3215, %v3216
        %s3234 = scalar_lea.vmem [#allocation11], 256
        %v3235 = vld [vmem:[%s3234] sm:$0xf]
        %v3236 = vld [vmem:[%s3234 + $0x4] sm:$0xf]
        %v3237 = vld [vmem:[%s3234 + $0x8] sm:$0xf]
        %v3238 = vld [vmem:[%s3234 + $0xc] sm:$0xf]
        %v3239 = vld [vmem:[%s3234 + $0x10] sm:$0xf]
        %v3240 = vld [vmem:[%s3234 + $0x14] sm:$0xf]
        %v3241 = vld [vmem:[%s3234 + $0x18] sm:$0xf]
        %v3242 = vld [vmem:[%s3234 + $0x1c] sm:$0xf]
        %v3243 = vld [vmem:[%s3234 + $0x20] sm:$0xf]
        %v3244 = vld [vmem:[%s3234 + $0x24] sm:$0xf]
        %v3245 = vld [vmem:[%s3234 + $0x28] sm:$0xf]
        %v3246 = vld [vmem:[%s3234 + $0x2c] sm:$0xf]
        %v3247 = vld [vmem:[%s3234 + $0x30] sm:$0xf]
        %v3248 = vld [vmem:[%s3234 + $0x34] sm:$0xf]
        %v3249 = vld [vmem:[%s3234 + $0x38] sm:$0xf]
        %v3250 = vld [vmem:[%s3234 + $0x3c] sm:$0xf]
        %v3267 = vunpack.c.l.b16 %v3235
        %v3268 = vunpack.c.l.b16 %v3236
        %v3269 = vunpack.c.l.b16 %v3237
        %v3270 = vunpack.c.l.b16 %v3238
        %v3271 = vunpack.c.l.b16 %v3239
        %v3272 = vunpack.c.l.b16 %v3240
        %v3273 = vunpack.c.l.b16 %v3241
        %v3274 = vunpack.c.l.b16 %v3242
        %v3275 = vunpack.c.l.b16 %v3243
        %v3276 = vunpack.c.l.b16 %v3244
        %v3277 = vunpack.c.l.b16 %v3245
        %v3278 = vunpack.c.l.b16 %v3246
        %v3279 = vunpack.c.l.b16 %v3247
        %v3280 = vunpack.c.l.b16 %v3248
        %v3281 = vunpack.c.l.b16 %v3249
        %v3282 = vunpack.c.l.b16 %v3250
        %v3283 = vpack.c.b16 %v3268, %v3267
        %v3284 = vpack.c.b16 %v3270, %v3269
        %v3285 = vpack.c.b16 %v3272, %v3271
        %v3286 = vpack.c.b16 %v3274, %v3273
        %v3287 = vpack.c.b16 %v3276, %v3275
        %v3288 = vpack.c.b16 %v3278, %v3277
        %v3289 = vpack.c.b16 %v3280, %v3279
        %v3290 = vpack.c.b16 %v3282, %v3281
        %3299 = vmatprep.subr.bf16.mxu0 0
        %3300 = vmatpush1.bf16.msra.mxu0 %v3283
        %3301 = vmatprep.subr.bf16.mxu0 0
        %3302 = vmatpush1.bf16.msra.mxu0 %v3284
        %3303 = vmatprep.subr.bf16.mxu0 0
        %3304 = vmatpush1.bf16.msra.mxu0 %v3285
        %3305 = vmatprep.subr.bf16.mxu0 0
        %3306 = vmatpush1.bf16.msra.mxu0 %v3286
        %3307 = vmatprep.subr.bf16.mxu0 0
        %3308 = vmatpush1.bf16.msra.mxu0 %v3287
        %3309 = vmatprep.subr.bf16.mxu0 0
        %3310 = vmatpush1.bf16.msra.mxu0 %v3288
        %3311 = vmatprep.subr.bf16.mxu0 0
        %3312 = vmatpush1.bf16.msra.mxu0 %v3289
        %3313 = vmatprep.subr.bf16.mxu0 0
        %3314 = vmatpush1.bf16.msra.mxu0 %v3290
        %3315 = vmatprep.subr.bf16.mxu0 0
        %3316 = vmatpush1.bf16.msra.mxu0 0
        %3317 = vmatprep.subr.bf16.mxu0 0
        %3318 = vmatpush1.bf16.msra.mxu0 0
        %3319 = vmatprep.subr.bf16.mxu0 0
        %3320 = vmatpush1.bf16.msra.mxu0 0
        %3321 = vmatprep.subr.bf16.mxu0 0
        %3322 = vmatpush1.bf16.msra.mxu0 0
        %3323 = vmatprep.subr.bf16.mxu0 0
        %3324 = vmatpush1.bf16.msra.mxu0 0
        %3325 = vmatprep.subr.bf16.mxu0 0
        %3326 = vmatpush1.bf16.msra.mxu0 0
        %3327 = vmatprep.subr.bf16.mxu0 0
        %3328 = vmatpush1.bf16.msra.mxu0 0
        %3329 = vmatprep.subr.bf16.mxu0 0
        %3330 = vmatpush1.bf16.msra.mxu0 0
        %3331 = vmatprep.mubr.bf16.mxu0 0
        %3332 = vmatmul.mubr.bf16.gmra.mrb[0].mxu0 %v3172
        %v3333 = vpop.f32.mrb[0].mxu0
        %v3334 = vadd.f32 0.0, %v3333
        %v3335 = vpop.f32.mrb[0].mxu0
        %v3336 = vpop.f32.mrb[0].mxu0
        %v3337 = vadd.f32 0.0, %v3336
        %v3338 = vpop.f32.mrb[0].mxu0
        %3339 = vmatprep.mubr.bf16.mxu0 0
        %3340 = vmatmul.mubr.bf16.gmra.mrb[0].mxu0 %v3175
        %v3341 = vpop.f32.mrb[0].mxu0
        %v3342 = vadd.f32 0.0, %v3341
        %v3343 = vpop.f32.mrb[0].mxu0
        %v3344 = vpop.f32.mrb[0].mxu0
        %v3345 = vadd.f32 0.0, %v3344
        %v3346 = vpop.f32.mrb[0].mxu0
        %3347 = vmatprep.mubr.bf16.mxu0 0
        %3348 = vmatmul.mubr.bf16.gmra.mrb[0].mxu0 %v3178
        %v3349 = vpop.f32.mrb[0].mxu0
        %v3350 = vadd.f32 0.0, %v3349
        %v3351 = vpop.f32.mrb[0].mxu0
        %v3352 = vpop.f32.mrb[0].mxu0
        %v3353 = vadd.f32 0.0, %v3352
        %v3354 = vpop.f32.mrb[0].mxu0
        %3355 = vmatprep.mubr.bf16.mxu0 0
        %3356 = vmatmul.mubr.bf16.gmra.mrb[0].mxu0 %v3181
        %v3357 = vpop.f32.mrb[0].mxu0
        %v3358 = vadd.f32 0.0, %v3357
        %v3359 = vpop.f32.mrb[0].mxu0
        %v3360 = vpop.f32.mrb[0].mxu0
        %v3361 = vadd.f32 0.0, %v3360
        %v3362 = vpop.f32.mrb[0].mxu0
        %3363 = vmatprep.mubr.bf16.mxu0 0
        %3364 = vmatmul.mubr.bf16.gmra.mrb[0].mxu0 %v3184
        %v3365 = vpop.f32.mrb[0].mxu0
        %v3366 = vadd.f32 0.0, %v3365
        %v3367 = vpop.f32.mrb[0].mxu0
        %v3368 = vpop.f32.mrb[0].mxu0
        %v3369 = vadd.f32 0.0, %v3368
        %v3370 = vpop.f32.mrb[0].mxu0
        %3371 = vmatprep.mubr.bf16.mxu0 0
        %3372 = vmatmul.mubr.bf16.gmra.mrb[0].mxu0 %v3187
        %v3373 = vpop.f32.mrb[0].mxu0
        %v3374 = vadd.f32 0.0, %v3373
        %v3375 = vpop.f32.mrb[0].mxu0
        %v3376 = vpop.f32.mrb[0].mxu0
        %v3377 = vadd.f32 0.0, %v3376
        %v3378 = vpop.f32.mrb[0].mxu0
        %3379 = vmatprep.mubr.bf16.mxu0 0
        %3380 = vmatmul.mubr.bf16.gmra.mrb[0].mxu0 %v3190
        %v3381 = vpop.f32.mrb[0].mxu0
        %v3382 = vadd.f32 0.0, %v3381
        %v3383 = vpop.f32.mrb[0].mxu0
        %v3384 = vpop.f32.mrb[0].mxu0
        %v3385 = vadd.f32 0.0, %v3384
        %v3386 = vpop.f32.mrb[0].mxu0
        %3387 = vmatprep.mubr.bf16.mxu0 0
        %3388 = vmatmul.mubr.bf16.gmra.mrb[0].mxu0 %v3193
        %v3389 = vpop.f32.mrb[0].mxu0
        %v3390 = vadd.f32 0.0, %v3389
        %v3391 = vpop.f32.mrb[0].mxu0
        %v3392 = vpop.f32.mrb[0].mxu0
        %v3393 = vadd.f32 0.0, %v3392
        %v3394 = vpop.f32.mrb[0].mxu0
        %3395 = vmatprep.mubr.bf16.mxu0 0
        %3396 = vmatmul.mubr.bf16.gmra.mrb[0].mxu0 %v3196
        %v3397 = vpop.f32.mrb[0].mxu0
        %v3398 = vadd.f32 0.0, %v3397
        %v3399 = vpop.f32.mrb[0].mxu0
        %v3400 = vpop.f32.mrb[0].mxu0
        %v3401 = vadd.f32 0.0, %v3400
        %v3402 = vpop.f32.mrb[0].mxu0
        %3403 = vmatprep.mubr.bf16.mxu0 0
        %3404 = vmatmul.mubr.bf16.gmra.mrb[0].mxu0 %v3199
        %v3405 = vpop.f32.mrb[0].mxu0
        %v3406 = vadd.f32 0.0, %v3405
        %v3407 = vpop.f32.mrb[0].mxu0
        %v3408 = vpop.f32.mrb[0].mxu0
        %v3409 = vadd.f32 0.0, %v3408
        %v3410 = vpop.f32.mrb[0].mxu0
        %3411 = vmatprep.mubr.bf16.mxu0 0
        %3412 = vmatmul.mubr.bf16.gmra.mrb[0].mxu0 %v3202
        %v3413 = vpop.f32.mrb[0].mxu0
        %v3414 = vadd.f32 0.0, %v3413
        %v3415 = vpop.f32.mrb[0].mxu0
        %v3416 = vpop.f32.mrb[0].mxu0
        %v3417 = vadd.f32 0.0, %v3416
        %v3418 = vpop.f32.mrb[0].mxu0
        %3419 = vmatprep.mubr.bf16.mxu0 0
        %3420 = vmatmul.mubr.bf16.gmra.mrb[0].mxu0 %v3205
        %v3421 = vpop.f32.mrb[0].mxu0
        %v3422 = vadd.f32 0.0, %v3421
        %v3423 = vpop.f32.mrb[0].mxu0
        %v3424 = vpop.f32.mrb[0].mxu0
        %v3425 = vadd.f32 0.0, %v3424
        %v3426 = vpop.f32.mrb[0].mxu0
        %3427 = vmatprep.mubr.bf16.mxu0 0
        %3428 = vmatmul.mubr.bf16.gmra.mrb[0].mxu0 %v3208
        %v3429 = vpop.f32.mrb[0].mxu0
        %v3430 = vadd.f32 0.0, %v3429
        %v3431 = vpop.f32.mrb[0].mxu0
        %v3432 = vpop.f32.mrb[0].mxu0
        %v3433 = vadd.f32 0.0, %v3432
        %v3434 = vpop.f32.mrb[0].mxu0
        %3435 = vmatprep.mubr.bf16.mxu0 0
        %3436 = vmatmul.mubr.bf16.gmra.mrb[0].mxu0 %v3211
        %v3437 = vpop.f32.mrb[0].mxu0
        %v3438 = vadd.f32 0.0, %v3437
        %v3439 = vpop.f32.mrb[0].mxu0
        %v3440 = vpop.f32.mrb[0].mxu0
        %v3441 = vadd.f32 0.0, %v3440
        %v3442 = vpop.f32.mrb[0].mxu0
        %3443 = vmatprep.mubr.bf16.mxu0 0
        %3444 = vmatmul.mubr.bf16.gmra.mrb[0].mxu0 %v3214
        %v3445 = vpop.f32.mrb[0].mxu0
        %v3446 = vadd.f32 0.0, %v3445
        %v3447 = vpop.f32.mrb[0].mxu0
        %v3448 = vpop.f32.mrb[0].mxu0
        %v3449 = vadd.f32 0.0, %v3448
        %v3450 = vpop.f32.mrb[0].mxu0
        %3451 = vmatprep.mubr.bf16.mxu0 0
        %3452 = vmatmul.mubr.bf16.gmra.mrb[0].mxu0 %v3217
        %v3453 = vpop.f32.mrb[0].mxu0
        %v3454 = vadd.f32 0.0, %v3453
        %v3455 = vpop.f32.mrb[0].mxu0
        %v3456 = vpop.f32.mrb[0].mxu0
        %v3457 = vadd.f32 0.0, %v3456
        %v3458 = vpop.f32.mrb[0].mxu0
        %3459 = vdwg.mxu0
        %v3460 = vadd.f32 %v3090, %v3334
        %v3461 = vadd.f32 %v3091, %v3337
        %v3462 = vadd.f32 %v3092, %v3342
        %v3463 = vadd.f32 %v3093, %v3345
        %v3464 = vadd.f32 %v3094, %v3350
        %v3465 = vadd.f32 %v3095, %v3353
        %v3466 = vadd.f32 %v3096, %v3358
        %v3467 = vadd.f32 %v3097, %v3361
        %v3468 = vadd.f32 %v3098, %v3366
        %v3469 = vadd.f32 %v3099, %v3369
        %v3470 = vadd.f32 %v3100, %v3374
        %v3471 = vadd.f32 %v3101, %v3377
        %v3472 = vadd.f32 %v3102, %v3382
        %v3473 = vadd.f32 %v3103, %v3385
        %v3474 = vadd.f32 %v3104, %v3390
        %v3475 = vadd.f32 %v3105, %v3393
        %v3476 = vadd.f32 %v3106, %v3398
        %v3477 = vadd.f32 %v3107, %v3401
        %v3478 = vadd.f32 %v3108, %v3406
        %v3479 = vadd.f32 %v3109, %v3409
        %v3480 = vadd.f32 %v3110, %v3414
        %v3481 = vadd.f32 %v3111, %v3417
        %v3482 = vadd.f32 %v3112, %v3422
        %v3483 = vadd.f32 %v3113, %v3425
        %v3484 = vadd.f32 %v3114, %v3430
        %v3485 = vadd.f32 %v3115, %v3433
        %v3486 = vadd.f32 %v3116, %v3438
        %v3487 = vadd.f32 %v3117, %v3441
        %v3488 = vadd.f32 %v3118, %v3446
        %v3489 = vadd.f32 %v3119, %v3449
        %v3490 = vadd.f32 %v3120, %v3454
        %v3491 = vadd.f32 %v3121, %v3457
        %v3492 = vld [vmem:[%s1004 + $0x8] sm:$0x1f]
        %v3493 = vld [vmem:[%s1004 + $0x18] sm:$0x1f]
        %v3494 = vld [vmem:[%s1004 + $0x28] sm:$0x1f]
        %v3495 = vld [vmem:[%s1004 + $0x38] sm:$0x1f]
        %v3496 = vld [vmem:[%s1004 + $0x48] sm:$0x1f]
        %v3497 = vld [vmem:[%s1004 + $0x58] sm:$0x1f]
        %v3498 = vld [vmem:[%s1004 + $0x68] sm:$0x1f]
        %v3499 = vld [vmem:[%s1004 + $0x78] sm:$0x1f]
        %v3500 = vld [vmem:[%s1004 + $0x88] sm:$0x1f]
        %v3501 = vld [vmem:[%s1004 + $0x98] sm:$0x1f]
        %v3502 = vld [vmem:[%s1004 + $0xa8] sm:$0x1f]
        %v3503 = vld [vmem:[%s1004 + $0xb8] sm:$0x1f]
        %v3504 = vld [vmem:[%s1004 + $0xc8] sm:$0x1f]
        %v3505 = vld [vmem:[%s1004 + $0xd8] sm:$0x1f]
        %v3506 = vld [vmem:[%s1004 + $0xe8] sm:$0x1f]
        %v3507 = vld [vmem:[%s1004 + $0xf8] sm:$0x1f]
        %v3509 = vshrl.u32 %v3122, 16
        %v3511 = vrot.slane %v3509, 4
        %v3512 = vshll.u32 %v3122, 16
        %v3514 = vrot.slane %v3512, 5
        %v3515 = vor.u32 %v3511, %v3514
        %v3517 = vshrl.u32 %v3492, 16
        %v3519 = vrot.slane %v3517, 4
        %v3520 = vshll.u32 %v3492, 16
        %v3522 = vrot.slane %v3520, 5
        %v3523 = vor.u32 %v3519, %v3522
        %v3524 = vsel %vm1997, %v3515, %v3523
        %v3526 = vshrl.u32 %v3123, 16
        %v3528 = vrot.slane %v3526, 4
        %v3529 = vshll.u32 %v3123, 16
        %v3531 = vrot.slane %v3529, 5
        %v3532 = vor.u32 %v3528, %v3531
        %v3534 = vshrl.u32 %v3493, 16
        %v3536 = vrot.slane %v3534, 4
        %v3537 = vshll.u32 %v3493, 16
        %v3539 = vrot.slane %v3537, 5
        %v3540 = vor.u32 %v3536, %v3539
        %v3541 = vsel %vm1997, %v3532, %v3540
        %v3543 = vshrl.u32 %v3124, 16
        %v3545 = vrot.slane %v3543, 4
        %v3546 = vshll.u32 %v3124, 16
        %v3548 = vrot.slane %v3546, 5
        %v3549 = vor.u32 %v3545, %v3548
        %v3551 = vshrl.u32 %v3494, 16
        %v3553 = vrot.slane %v3551, 4
        %v3554 = vshll.u32 %v3494, 16
        %v3556 = vrot.slane %v3554, 5
        %v3557 = vor.u32 %v3553, %v3556
        %v3558 = vsel %vm1997, %v3549, %v3557
        %v3560 = vshrl.u32 %v3125, 16
        %v3562 = vrot.slane %v3560, 4
        %v3563 = vshll.u32 %v3125, 16
        %v3565 = vrot.slane %v3563, 5
        %v3566 = vor.u32 %v3562, %v3565
        %v3568 = vshrl.u32 %v3495, 16
        %v3570 = vrot.slane %v3568, 4
        %v3571 = vshll.u32 %v3495, 16
        %v3573 = vrot.slane %v3571, 5
        %v3574 = vor.u32 %v3570, %v3573
        %v3575 = vsel %vm1997, %v3566, %v3574
        %v3577 = vshrl.u32 %v3126, 16
        %v3579 = vrot.slane %v3577, 4
        %v3580 = vshll.u32 %v3126, 16
        %v3582 = vrot.slane %v3580, 5
        %v3583 = vor.u32 %v3579, %v3582
        %v3585 = vshrl.u32 %v3496, 16
        %v3587 = vrot.slane %v3585, 4
        %v3588 = vshll.u32 %v3496, 16
        %v3590 = vrot.slane %v3588, 5
        %v3591 = vor.u32 %v3587, %v3590
        %v3592 = vsel %vm1997, %v3583, %v3591
        %v3594 = vshrl.u32 %v3127, 16
        %v3596 = vrot.slane %v3594, 4
        %v3597 = vshll.u32 %v3127, 16
        %v3599 = vrot.slane %v3597, 5
        %v3600 = vor.u32 %v3596, %v3599
        %v3602 = vshrl.u32 %v3497, 16
        %v3604 = vrot.slane %v3602, 4
        %v3605 = vshll.u32 %v3497, 16
        %v3607 = vrot.slane %v3605, 5
        %v3608 = vor.u32 %v3604, %v3607
        %v3609 = vsel %vm1997, %v3600, %v3608
        %v3611 = vshrl.u32 %v3128, 16
        %v3613 = vrot.slane %v3611, 4
        %v3614 = vshll.u32 %v3128, 16
        %v3616 = vrot.slane %v3614, 5
        %v3617 = vor.u32 %v3613, %v3616
        %v3619 = vshrl.u32 %v3498, 16
        %v3621 = vrot.slane %v3619, 4
        %v3622 = vshll.u32 %v3498, 16
        %v3624 = vrot.slane %v3622, 5
        %v3625 = vor.u32 %v3621, %v3624
        %v3626 = vsel %vm1997, %v3617, %v3625
        %v3628 = vshrl.u32 %v3129, 16
        %v3630 = vrot.slane %v3628, 4
        %v3631 = vshll.u32 %v3129, 16
        %v3633 = vrot.slane %v3631, 5
        %v3634 = vor.u32 %v3630, %v3633
        %v3636 = vshrl.u32 %v3499, 16
        %v3638 = vrot.slane %v3636, 4
        %v3639 = vshll.u32 %v3499, 16
        %v3641 = vrot.slane %v3639, 5
        %v3642 = vor.u32 %v3638, %v3641
        %v3643 = vsel %vm1997, %v3634, %v3642
        %v3645 = vshrl.u32 %v3130, 16
        %v3647 = vrot.slane %v3645, 4
        %v3648 = vshll.u32 %v3130, 16
        %v3650 = vrot.slane %v3648, 5
        %v3651 = vor.u32 %v3647, %v3650
        %v3653 = vshrl.u32 %v3500, 16
        %v3655 = vrot.slane %v3653, 4
        %v3656 = vshll.u32 %v3500, 16
        %v3658 = vrot.slane %v3656, 5
        %v3659 = vor.u32 %v3655, %v3658
        %v3660 = vsel %vm1997, %v3651, %v3659
        %v3662 = vshrl.u32 %v3131, 16
        %v3664 = vrot.slane %v3662, 4
        %v3665 = vshll.u32 %v3131, 16
        %v3667 = vrot.slane %v3665, 5
        %v3668 = vor.u32 %v3664, %v3667
        %v3670 = vshrl.u32 %v3501, 16
        %v3672 = vrot.slane %v3670, 4
        %v3673 = vshll.u32 %v3501, 16
        %v3675 = vrot.slane %v3673, 5
        %v3676 = vor.u32 %v3672, %v3675
        %v3677 = vsel %vm1997, %v3668, %v3676
        %v3679 = vshrl.u32 %v3132, 16
        %v3681 = vrot.slane %v3679, 4
        %v3682 = vshll.u32 %v3132, 16
        %v3684 = vrot.slane %v3682, 5
        %v3685 = vor.u32 %v3681, %v3684
        %v3687 = vshrl.u32 %v3502, 16
        %v3689 = vrot.slane %v3687, 4
        %v3690 = vshll.u32 %v3502, 16
        %v3692 = vrot.slane %v3690, 5
        %v3693 = vor.u32 %v3689, %v3692
        %v3694 = vsel %vm1997, %v3685, %v3693
        %v3696 = vshrl.u32 %v3133, 16
        %v3698 = vrot.slane %v3696, 4
        %v3699 = vshll.u32 %v3133, 16
        %v3701 = vrot.slane %v3699, 5
        %v3702 = vor.u32 %v3698, %v3701
        %v3704 = vshrl.u32 %v3503, 16
        %v3706 = vrot.slane %v3704, 4
        %v3707 = vshll.u32 %v3503, 16
        %v3709 = vrot.slane %v3707, 5
        %v3710 = vor.u32 %v3706, %v3709
        %v3711 = vsel %vm1997, %v3702, %v3710
        %v3713 = vshrl.u32 %v3134, 16
        %v3715 = vrot.slane %v3713, 4
        %v3716 = vshll.u32 %v3134, 16
        %v3718 = vrot.slane %v3716, 5
        %v3719 = vor.u32 %v3715, %v3718
        %v3721 = vshrl.u32 %v3504, 16
        %v3723 = vrot.slane %v3721, 4
        %v3724 = vshll.u32 %v3504, 16
        %v3726 = vrot.slane %v3724, 5
        %v3727 = vor.u32 %v3723, %v3726
        %v3728 = vsel %vm1997, %v3719, %v3727
        %v3730 = vshrl.u32 %v3135, 16
        %v3732 = vrot.slane %v3730, 4
        %v3733 = vshll.u32 %v3135, 16
        %v3735 = vrot.slane %v3733, 5
        %v3736 = vor.u32 %v3732, %v3735
        %v3738 = vshrl.u32 %v3505, 16
        %v3740 = vrot.slane %v3738, 4
        %v3741 = vshll.u32 %v3505, 16
        %v3743 = vrot.slane %v3741, 5
        %v3744 = vor.u32 %v3740, %v3743
        %v3745 = vsel %vm1997, %v3736, %v3744
        %v3747 = vshrl.u32 %v3136, 16
        %v3749 = vrot.slane %v3747, 4
        %v3750 = vshll.u32 %v3136, 16
        %v3752 = vrot.slane %v3750, 5
        %v3753 = vor.u32 %v3749, %v3752
        %v3755 = vshrl.u32 %v3506, 16
        %v3757 = vrot.slane %v3755, 4
        %v3758 = vshll.u32 %v3506, 16
        %v3760 = vrot.slane %v3758, 5
        %v3761 = vor.u32 %v3757, %v3760
        %v3762 = vsel %vm1997, %v3753, %v3761
        %v3764 = vshrl.u32 %v3137, 16
        %v3766 = vrot.slane %v3764, 4
        %v3767 = vshll.u32 %v3137, 16
        %v3769 = vrot.slane %v3767, 5
        %v3770 = vor.u32 %v3766, %v3769
        %v3772 = vshrl.u32 %v3507, 16
        %v3774 = vrot.slane %v3772, 4
        %v3775 = vshll.u32 %v3507, 16
        %v3777 = vrot.slane %v3775, 5
        %v3778 = vor.u32 %v3774, %v3777
        %v3779 = vsel %vm1997, %v3770, %v3778
        %s3796 = scalar_lea.vmem [#allocation11], 320
        %v3797 = vld [vmem:[%s3796] sm:$0xf]
        %v3798 = vld [vmem:[%s3796 + $0x4] sm:$0xf]
        %v3799 = vld [vmem:[%s3796 + $0x8] sm:$0xf]
        %v3800 = vld [vmem:[%s3796 + $0xc] sm:$0xf]
        %v3801 = vld [vmem:[%s3796 + $0x10] sm:$0xf]
        %v3802 = vld [vmem:[%s3796 + $0x14] sm:$0xf]
        %v3803 = vld [vmem:[%s3796 + $0x18] sm:$0xf]
        %v3804 = vld [vmem:[%s3796 + $0x1c] sm:$0xf]
        %v3805 = vld [vmem:[%s3796 + $0x20] sm:$0xf]
        %v3806 = vld [vmem:[%s3796 + $0x24] sm:$0xf]
        %v3807 = vld [vmem:[%s3796 + $0x28] sm:$0xf]
        %v3808 = vld [vmem:[%s3796 + $0x2c] sm:$0xf]
        %v3809 = vld [vmem:[%s3796 + $0x30] sm:$0xf]
        %v3810 = vld [vmem:[%s3796 + $0x34] sm:$0xf]
        %v3811 = vld [vmem:[%s3796 + $0x38] sm:$0xf]
        %v3812 = vld [vmem:[%s3796 + $0x3c] sm:$0xf]
        %v3829 = vunpack.c.l.b16 %v3797
        %v3830 = vunpack.c.l.b16 %v3798
        %v3831 = vunpack.c.l.b16 %v3799
        %v3832 = vunpack.c.l.b16 %v3800
        %v3833 = vunpack.c.l.b16 %v3801
        %v3834 = vunpack.c.l.b16 %v3802
        %v3835 = vunpack.c.l.b16 %v3803
        %v3836 = vunpack.c.l.b16 %v3804
        %v3837 = vunpack.c.l.b16 %v3805
        %v3838 = vunpack.c.l.b16 %v3806
        %v3839 = vunpack.c.l.b16 %v3807
        %v3840 = vunpack.c.l.b16 %v3808
        %v3841 = vunpack.c.l.b16 %v3809
        %v3842 = vunpack.c.l.b16 %v3810
        %v3843 = vunpack.c.l.b16 %v3811
        %v3844 = vunpack.c.l.b16 %v3812
        %v3845 = vpack.c.b16 %v3830, %v3829
        %v3846 = vpack.c.b16 %v3832, %v3831
        %v3847 = vpack.c.b16 %v3834, %v3833
        %v3848 = vpack.c.b16 %v3836, %v3835
        %v3849 = vpack.c.b16 %v3838, %v3837
        %v3850 = vpack.c.b16 %v3840, %v3839
        %v3851 = vpack.c.b16 %v3842, %v3841
        %v3852 = vpack.c.b16 %v3844, %v3843
        %3861 = vmatprep.subr.bf16.mxu0 0
        %3862 = vmatpush1.bf16.msra.mxu0 %v3845
        %3863 = vmatprep.subr.bf16.mxu0 0
        %3864 = vmatpush1.bf16.msra.mxu0 %v3846
        %3865 = vmatprep.subr.bf16.mxu0 0
        %3866 = vmatpush1.bf16.msra.mxu0 %v3847
        %3867 = vmatprep.subr.bf16.mxu0 0
        %3868 = vmatpush1.bf16.msra.mxu0 %v3848
        %3869 = vmatprep.subr.bf16.mxu0 0
        %3870 = vmatpush1.bf16.msra.mxu0 %v3849
        %3871 = vmatprep.subr.bf16.mxu0 0
        %3872 = vmatpush1.bf16.msra.mxu0 %v3850
        %3873 = vmatprep.subr.bf16.mxu0 0
        %3874 = vmatpush1.bf16.msra.mxu0 %v3851
        %3875 = vmatprep.subr.bf16.mxu0 0
        %3876 = vmatpush1.bf16.msra.mxu0 %v3852
        %3877 = vmatprep.subr.bf16.mxu0 0
        %3878 = vmatpush1.bf16.msra.mxu0 0
        %3879 = vmatprep.subr.bf16.mxu0 0
        %3880 = vmatpush1.bf16.msra.mxu0 0
        %3881 = vmatprep.subr.bf16.mxu0 0
        %3882 = vmatpush1.bf16.msra.mxu0 0
        %3883 = vmatprep.subr.bf16.mxu0 0
        %3884 = vmatpush1.bf16.msra.mxu0 0
        %3885 = vmatprep.subr.bf16.mxu0 0
        %3886 = vmatpush1.bf16.msra.mxu0 0
        %3887 = vmatprep.subr.bf16.mxu0 0
        %3888 = vmatpush1.bf16.msra.mxu0 0
        %3889 = vmatprep.subr.bf16.mxu0 0
        %3890 = vmatpush1.bf16.msra.mxu0 0
        %3891 = vmatprep.subr.bf16.mxu0 0
        %3892 = vmatpush1.bf16.msra.mxu0 0
        %3893 = vmatprep.mubr.bf16.mxu0 0
        %3894 = vmatmul.mubr.bf16.gmra.mrb[0].mxu0 %v3524
        %v3895 = vpop.f32.mrb[0].mxu0
        %v3896 = vadd.f32 0.0, %v3895
        %v3897 = vpop.f32.mrb[0].mxu0
        %v3898 = vpop.f32.mrb[0].mxu0
        %v3899 = vadd.f32 0.0, %v3898
        %v3900 = vpop.f32.mrb[0].mxu0
        %3901 = vmatprep.mubr.bf16.mxu0 0
        %3902 = vmatmul.mubr.bf16.gmra.mrb[0].mxu0 %v3541
        %v3903 = vpop.f32.mrb[0].mxu0
        %v3904 = vadd.f32 0.0, %v3903
        %v3905 = vpop.f32.mrb[0].mxu0
        %v3906 = vpop.f32.mrb[0].mxu0
        %v3907 = vadd.f32 0.0, %v3906
        %v3908 = vpop.f32.mrb[0].mxu0
        %3909 = vmatprep.mubr.bf16.mxu0 0
        %3910 = vmatmul.mubr.bf16.gmra.mrb[0].mxu0 %v3558
        %v3911 = vpop.f32.mrb[0].mxu0
        %v3912 = vadd.f32 0.0, %v3911
        %v3913 = vpop.f32.mrb[0].mxu0
        %v3914 = vpop.f32.mrb[0].mxu0
        %v3915 = vadd.f32 0.0, %v3914
        %v3916 = vpop.f32.mrb[0].mxu0
        %3917 = vmatprep.mubr.bf16.mxu0 0
        %3918 = vmatmul.mubr.bf16.gmra.mrb[0].mxu0 %v3575
        %v3919 = vpop.f32.mrb[0].mxu0
        %v3920 = vadd.f32 0.0, %v3919
        %v3921 = vpop.f32.mrb[0].mxu0
        %v3922 = vpop.f32.mrb[0].mxu0
        %v3923 = vadd.f32 0.0, %v3922
        %v3924 = vpop.f32.mrb[0].mxu0
        %3925 = vmatprep.mubr.bf16.mxu0 0
        %3926 = vmatmul.mubr.bf16.gmra.mrb[0].mxu0 %v3592
        %v3927 = vpop.f32.mrb[0].mxu0
        %v3928 = vadd.f32 0.0, %v3927
        %v3929 = vpop.f32.mrb[0].mxu0
        %v3930 = vpop.f32.mrb[0].mxu0
        %v3931 = vadd.f32 0.0, %v3930
        %v3932 = vpop.f32.mrb[0].mxu0
        %3933 = vmatprep.mubr.bf16.mxu0 0
        %3934 = vmatmul.mubr.bf16.gmra.mrb[0].mxu0 %v3609
        %v3935 = vpop.f32.mrb[0].mxu0
        %v3936 = vadd.f32 0.0, %v3935
        %v3937 = vpop.f32.mrb[0].mxu0
        %v3938 = vpop.f32.mrb[0].mxu0
        %v3939 = vadd.f32 0.0, %v3938
        %v3940 = vpop.f32.mrb[0].mxu0
        %3941 = vmatprep.mubr.bf16.mxu0 0
        %3942 = vmatmul.mubr.bf16.gmra.mrb[0].mxu0 %v3626
        %v3943 = vpop.f32.mrb[0].mxu0
        %v3944 = vadd.f32 0.0, %v3943
        %v3945 = vpop.f32.mrb[0].mxu0
        %v3946 = vpop.f32.mrb[0].mxu0
        %v3947 = vadd.f32 0.0, %v3946
        %v3948 = vpop.f32.mrb[0].mxu0
        %3949 = vmatprep.mubr.bf16.mxu0 0
        %3950 = vmatmul.mubr.bf16.gmra.mrb[0].mxu0 %v3643
        %v3951 = vpop.f32.mrb[0].mxu0
        %v3952 = vadd.f32 0.0, %v3951
        %v3953 = vpop.f32.mrb[0].mxu0
        %v3954 = vpop.f32.mrb[0].mxu0
        %v3955 = vadd.f32 0.0, %v3954
        %v3956 = vpop.f32.mrb[0].mxu0
        %3957 = vmatprep.mubr.bf16.mxu0 0
        %3958 = vmatmul.mubr.bf16.gmra.mrb[0].mxu0 %v3660
        %v3959 = vpop.f32.mrb[0].mxu0
        %v3960 = vadd.f32 0.0, %v3959
        %v3961 = vpop.f32.mrb[0].mxu0
        %v3962 = vpop.f32.mrb[0].mxu0
        %v3963 = vadd.f32 0.0, %v3962
        %v3964 = vpop.f32.mrb[0].mxu0
        %3965 = vmatprep.mubr.bf16.mxu0 0
        %3966 = vmatmul.mubr.bf16.gmra.mrb[0].mxu0 %v3677
        %v3967 = vpop.f32.mrb[0].mxu0
        %v3968 = vadd.f32 0.0, %v3967
        %v3969 = vpop.f32.mrb[0].mxu0
        %v3970 = vpop.f32.mrb[0].mxu0
        %v3971 = vadd.f32 0.0, %v3970
        %v3972 = vpop.f32.mrb[0].mxu0
        %3973 = vmatprep.mubr.bf16.mxu0 0
        %3974 = vmatmul.mubr.bf16.gmra.mrb[0].mxu0 %v3694
        %v3975 = vpop.f32.mrb[0].mxu0
        %v3976 = vadd.f32 0.0, %v3975
        %v3977 = vpop.f32.mrb[0].mxu0
        %v3978 = vpop.f32.mrb[0].mxu0
        %v3979 = vadd.f32 0.0, %v3978
        %v3980 = vpop.f32.mrb[0].mxu0
        %3981 = vmatprep.mubr.bf16.mxu0 0
        %3982 = vmatmul.mubr.bf16.gmra.mrb[0].mxu0 %v3711
        %v3983 = vpop.f32.mrb[0].mxu0
        %v3984 = vadd.f32 0.0, %v3983
        %v3985 = vpop.f32.mrb[0].mxu0
        %v3986 = vpop.f32.mrb[0].mxu0
        %v3987 = vadd.f32 0.0, %v3986
        %v3988 = vpop.f32.mrb[0].mxu0
        %3989 = vmatprep.mubr.bf16.mxu0 0
        %3990 = vmatmul.mubr.bf16.gmra.mrb[0].mxu0 %v3728
        %v3991 = vpop.f32.mrb[0].mxu0
        %v3992 = vadd.f32 0.0, %v3991
        %v3993 = vpop.f32.mrb[0].mxu0
        %v3994 = vpop.f32.mrb[0].mxu0
        %v3995 = vadd.f32 0.0, %v3994
        %v3996 = vpop.f32.mrb[0].mxu0
        %3997 = vmatprep.mubr.bf16.mxu0 0
        %3998 = vmatmul.mubr.bf16.gmra.mrb[0].mxu0 %v3745
        %v3999 = vpop.f32.mrb[0].mxu0
        %v4000 = vadd.f32 0.0, %v3999
        %v4001 = vpop.f32.mrb[0].mxu0
        %v4002 = vpop.f32.mrb[0].mxu0
        %v4003 = vadd.f32 0.0, %v4002
        %v4004 = vpop.f32.mrb[0].mxu0
        %4005 = vmatprep.mubr.bf16.mxu0 0
        %4006 = vmatmul.mubr.bf16.gmra.mrb[0].mxu0 %v3762
        %v4007 = vpop.f32.mrb[0].mxu0
        %v4008 = vadd.f32 0.0, %v4007
        %v4009 = vpop.f32.mrb[0].mxu0
        %v4010 = vpop.f32.mrb[0].mxu0
        %v4011 = vadd.f32 0.0, %v4010
        %v4012 = vpop.f32.mrb[0].mxu0
        %4013 = vmatprep.mubr.bf16.mxu0 0
        %4014 = vmatmul.mubr.bf16.gmra.mrb[0].mxu0 %v3779
        %v4015 = vpop.f32.mrb[0].mxu0
        %v4016 = vadd.f32 0.0, %v4015
        %v4017 = vpop.f32.mrb[0].mxu0
        %v4018 = vpop.f32.mrb[0].mxu0
        %v4019 = vadd.f32 0.0, %v4018
        %v4020 = vpop.f32.mrb[0].mxu0
        %4021 = vdwg.mxu0
        %v4022 = vadd.f32 %v3460, %v3896
        %v4023 = vadd.f32 %v3461, %v3899
        %v4024 = vadd.f32 %v3462, %v3904
        %v4025 = vadd.f32 %v3463, %v3907
        %v4026 = vadd.f32 %v3464, %v3912
        %v4027 = vadd.f32 %v3465, %v3915
        %v4028 = vadd.f32 %v3466, %v3920
        %v4029 = vadd.f32 %v3467, %v3923
        %v4030 = vadd.f32 %v3468, %v3928
        %v4031 = vadd.f32 %v3469, %v3931
        %v4032 = vadd.f32 %v3470, %v3936
        %v4033 = vadd.f32 %v3471, %v3939
        %v4034 = vadd.f32 %v3472, %v3944
        %v4035 = vadd.f32 %v3473, %v3947
        %v4036 = vadd.f32 %v3474, %v3952
        %v4037 = vadd.f32 %v3475, %v3955
        %v4038 = vadd.f32 %v3476, %v3960
        %v4039 = vadd.f32 %v3477, %v3963
        %v4040 = vadd.f32 %v3478, %v3968
        %v4041 = vadd.f32 %v3479, %v3971
        %v4042 = vadd.f32 %v3480, %v3976
        %v4043 = vadd.f32 %v3481, %v3979
        %v4044 = vadd.f32 %v3482, %v3984
        %v4045 = vadd.f32 %v3483, %v3987
        %v4046 = vadd.f32 %v3484, %v3992
        %v4047 = vadd.f32 %v3485, %v3995
        %v4048 = vadd.f32 %v3486, %v4000
        %v4049 = vadd.f32 %v3487, %v4003
        %v4050 = vadd.f32 %v3488, %v4008
        %v4051 = vadd.f32 %v3489, %v4011
        %v4052 = vadd.f32 %v3490, %v4016
        %v4053 = vadd.f32 %v3491, %v4019
        %s4054 = scalar_lea.vmem [#allocation2], 32
        %v4055 = vld [vmem:[%s4054] sm:$0xf8]
        %v4056 = vld [vmem:[%s4054 + $0x8] sm:$0xf]
        %v4057 = vld [vmem:[%s4054 + $0x10] sm:$0xf8]
        %v4058 = vld [vmem:[%s4054 + $0x18] sm:$0xf]
        %v4059 = vld [vmem:[%s4054 + $0x20] sm:$0xf8]
        %v4060 = vld [vmem:[%s4054 + $0x28] sm:$0xf]
        %v4061 = vld [vmem:[%s4054 + $0x30] sm:$0xf8]
        %v4062 = vld [vmem:[%s4054 + $0x38] sm:$0xf]
        %v4063 = vld [vmem:[%s4054 + $0x40] sm:$0xf8]
        %v4064 = vld [vmem:[%s4054 + $0x48] sm:$0xf]
        %v4065 = vld [vmem:[%s4054 + $0x50] sm:$0xf8]
        %v4066 = vld [vmem:[%s4054 + $0x58] sm:$0xf]
        %v4067 = vld [vmem:[%s4054 + $0x60] sm:$0xf8]
        %v4068 = vld [vmem:[%s4054 + $0x68] sm:$0xf]
        %v4069 = vld [vmem:[%s4054 + $0x70] sm:$0xf8]
        %v4070 = vld [vmem:[%s4054 + $0x78] sm:$0xf]
        %v4071 = vld [vmem:[%s4054 + $0x80] sm:$0xf8]
        %v4072 = vld [vmem:[%s4054 + $0x88] sm:$0xf]
        %v4073 = vld [vmem:[%s4054 + $0x90] sm:$0xf8]
        %v4074 = vld [vmem:[%s4054 + $0x98] sm:$0xf]
        %v4075 = vld [vmem:[%s4054 + $0xa0] sm:$0xf8]
        %v4076 = vld [vmem:[%s4054 + $0xa8] sm:$0xf]
        %v4077 = vld [vmem:[%s4054 + $0xb0] sm:$0xf8]
        %v4078 = vld [vmem:[%s4054 + $0xb8] sm:$0xf]
        %v4079 = vld [vmem:[%s4054 + $0xc0] sm:$0xf8]
        %v4080 = vld [vmem:[%s4054 + $0xc8] sm:$0xf]
        %v4081 = vld [vmem:[%s4054 + $0xd0] sm:$0xf8]
        %v4082 = vld [vmem:[%s4054 + $0xd8] sm:$0xf]
        %v4083 = vld [vmem:[%s4054 + $0xe0] sm:$0xf8]
        %v4084 = vld [vmem:[%s4054 + $0xe8] sm:$0xf]
        %v4085 = vld [vmem:[%s4054 + $0xf0] sm:$0xf8]
        %v4086 = vld [vmem:[%s4054 + $0xf8] sm:$0xf]
        %v4088 = vshrl.u32 %v4055, 16
        %v4090 = vrot.slane %v4088, 3
        %v4091 = vshll.u32 %v4055, 16
        %v4093 = vrot.slane %v4091, 4
        %v4094 = vor.u32 %v4090, %v4093
        %v4096 = vshrl.u32 %v4056, 16
        %v4098 = vrot.slane %v4096, 3
        %v4099 = vshll.u32 %v4056, 16
        %v4101 = vrot.slane %v4099, 4
        %v4102 = vor.u32 %v4098, %v4101
        %v4103 = vsel %vm1128, %v4094, %v4102
        %v4105 = vshrl.u32 %v4057, 16
        %v4107 = vrot.slane %v4105, 3
        %v4108 = vshll.u32 %v4057, 16
        %v4110 = vrot.slane %v4108, 4
        %v4111 = vor.u32 %v4107, %v4110
        %v4113 = vshrl.u32 %v4058, 16
        %v4115 = vrot.slane %v4113, 3
        %v4116 = vshll.u32 %v4058, 16
        %v4118 = vrot.slane %v4116, 4
        %v4119 = vor.u32 %v4115, %v4118
        %v4120 = vsel %vm1128, %v4111, %v4119
        %v4122 = vshrl.u32 %v4059, 16
        %v4124 = vrot.slane %v4122, 3
        %v4125 = vshll.u32 %v4059, 16
        %v4127 = vrot.slane %v4125, 4
        %v4128 = vor.u32 %v4124, %v4127
        %v4130 = vshrl.u32 %v4060, 16
        %v4132 = vrot.slane %v4130, 3
        %v4133 = vshll.u32 %v4060, 16
        %v4135 = vrot.slane %v4133, 4
        %v4136 = vor.u32 %v4132, %v4135
        %v4137 = vsel %vm1128, %v4128, %v4136
        %v4139 = vshrl.u32 %v4061, 16
        %v4141 = vrot.slane %v4139, 3
        %v4142 = vshll.u32 %v4061, 16
        %v4144 = vrot.slane %v4142, 4
        %v4145 = vor.u32 %v4141, %v4144
        %v4147 = vshrl.u32 %v4062, 16
        %v4149 = vrot.slane %v4147, 3
        %v4150 = vshll.u32 %v4062, 16
        %v4152 = vrot.slane %v4150, 4
        %v4153 = vor.u32 %v4149, %v4152
        %v4154 = vsel %vm1128, %v4145, %v4153
        %v4156 = vshrl.u32 %v4063, 16
        %v4158 = vrot.slane %v4156, 3
        %v4159 = vshll.u32 %v4063, 16
        %v4161 = vrot.slane %v4159, 4
        %v4162 = vor.u32 %v4158, %v4161
        %v4164 = vshrl.u32 %v4064, 16
        %v4166 = vrot.slane %v4164, 3
        %v4167 = vshll.u32 %v4064, 16
        %v4169 = vrot.slane %v4167, 4
        %v4170 = vor.u32 %v4166, %v4169
        %v4171 = vsel %vm1128, %v4162, %v4170
        %v4173 = vshrl.u32 %v4065, 16
        %v4175 = vrot.slane %v4173, 3
        %v4176 = vshll.u32 %v4065, 16
        %v4178 = vrot.slane %v4176, 4
        %v4179 = vor.u32 %v4175, %v4178
        %v4181 = vshrl.u32 %v4066, 16
        %v4183 = vrot.slane %v4181, 3
        %v4184 = vshll.u32 %v4066, 16
        %v4186 = vrot.slane %v4184, 4
        %v4187 = vor.u32 %v4183, %v4186
        %v4188 = vsel %vm1128, %v4179, %v4187
        %v4190 = vshrl.u32 %v4067, 16
        %v4192 = vrot.slane %v4190, 3
        %v4193 = vshll.u32 %v4067, 16
        %v4195 = vrot.slane %v4193, 4
        %v4196 = vor.u32 %v4192, %v4195
        %v4198 = vshrl.u32 %v4068, 16
        %v4200 = vrot.slane %v4198, 3
        %v4201 = vshll.u32 %v4068, 16
        %v4203 = vrot.slane %v4201, 4
        %v4204 = vor.u32 %v4200, %v4203
        %v4205 = vsel %vm1128, %v4196, %v4204
        %v4207 = vshrl.u32 %v4069, 16
        %v4209 = vrot.slane %v4207, 3
        %v4210 = vshll.u32 %v4069, 16
        %v4212 = vrot.slane %v4210, 4
        %v4213 = vor.u32 %v4209, %v4212
        %v4215 = vshrl.u32 %v4070, 16
        %v4217 = vrot.slane %v4215, 3
        %v4218 = vshll.u32 %v4070, 16
        %v4220 = vrot.slane %v4218, 4
        %v4221 = vor.u32 %v4217, %v4220
        %v4222 = vsel %vm1128, %v4213, %v4221
        %v4224 = vshrl.u32 %v4071, 16
        %v4226 = vrot.slane %v4224, 3
        %v4227 = vshll.u32 %v4071, 16
        %v4229 = vrot.slane %v4227, 4
        %v4230 = vor.u32 %v4226, %v4229
        %v4232 = vshrl.u32 %v4072, 16
        %v4234 = vrot.slane %v4232, 3
        %v4235 = vshll.u32 %v4072, 16
        %v4237 = vrot.slane %v4235, 4
        %v4238 = vor.u32 %v4234, %v4237
        %v4239 = vsel %vm1128, %v4230, %v4238
        %v4241 = vshrl.u32 %v4073, 16
        %v4243 = vrot.slane %v4241, 3
        %v4244 = vshll.u32 %v4073, 16
        %v4246 = vrot.slane %v4244, 4
        %v4247 = vor.u32 %v4243, %v4246
        %v4249 = vshrl.u32 %v4074, 16
        %v4251 = vrot.slane %v4249, 3
        %v4252 = vshll.u32 %v4074, 16
        %v4254 = vrot.slane %v4252, 4
        %v4255 = vor.u32 %v4251, %v4254
        %v4256 = vsel %vm1128, %v4247, %v4255
        %v4258 = vshrl.u32 %v4075, 16
        %v4260 = vrot.slane %v4258, 3
        %v4261 = vshll.u32 %v4075, 16
        %v4263 = vrot.slane %v4261, 4
        %v4264 = vor.u32 %v4260, %v4263
        %v4266 = vshrl.u32 %v4076, 16
        %v4268 = vrot.slane %v4266, 3
        %v4269 = vshll.u32 %v4076, 16
        %v4271 = vrot.slane %v4269, 4
        %v4272 = vor.u32 %v4268, %v4271
        %v4273 = vsel %vm1128, %v4264, %v4272
        %v4275 = vshrl.u32 %v4077, 16
        %v4277 = vrot.slane %v4275, 3
        %v4278 = vshll.u32 %v4077, 16
        %v4280 = vrot.slane %v4278, 4
        %v4281 = vor.u32 %v4277, %v4280
        %v4283 = vshrl.u32 %v4078, 16
        %v4285 = vrot.slane %v4283, 3
        %v4286 = vshll.u32 %v4078, 16
        %v4288 = vrot.slane %v4286, 4
        %v4289 = vor.u32 %v4285, %v4288
        %v4290 = vsel %vm1128, %v4281, %v4289
        %v4292 = vshrl.u32 %v4079, 16
        %v4294 = vrot.slane %v4292, 3
        %v4295 = vshll.u32 %v4079, 16
        %v4297 = vrot.slane %v4295, 4
        %v4298 = vor.u32 %v4294, %v4297
        %v4300 = vshrl.u32 %v4080, 16
        %v4302 = vrot.slane %v4300, 3
        %v4303 = vshll.u32 %v4080, 16
        %v4305 = vrot.slane %v4303, 4
        %v4306 = vor.u32 %v4302, %v4305
        %v4307 = vsel %vm1128, %v4298, %v4306
        %v4309 = vshrl.u32 %v4081, 16
        %v4311 = vrot.slane %v4309, 3
        %v4312 = vshll.u32 %v4081, 16
        %v4314 = vrot.slane %v4312, 4
        %v4315 = vor.u32 %v4311, %v4314
        %v4317 = vshrl.u32 %v4082, 16
        %v4319 = vrot.slane %v4317, 3
        %v4320 = vshll.u32 %v4082, 16
        %v4322 = vrot.slane %v4320, 4
        %v4323 = vor.u32 %v4319, %v4322
        %v4324 = vsel %vm1128, %v4315, %v4323
        %v4326 = vshrl.u32 %v4083, 16
        %v4328 = vrot.slane %v4326, 3
        %v4329 = vshll.u32 %v4083, 16
        %v4331 = vrot.slane %v4329, 4
        %v4332 = vor.u32 %v4328, %v4331
        %v4334 = vshrl.u32 %v4084, 16
        %v4336 = vrot.slane %v4334, 3
        %v4337 = vshll.u32 %v4084, 16
        %v4339 = vrot.slane %v4337, 4
        %v4340 = vor.u32 %v4336, %v4339
        %v4341 = vsel %vm1128, %v4332, %v4340
        %v4343 = vshrl.u32 %v4085, 16
        %v4345 = vrot.slane %v4343, 3
        %v4346 = vshll.u32 %v4085, 16
        %v4348 = vrot.slane %v4346, 4
        %v4349 = vor.u32 %v4345, %v4348
        %v4351 = vshrl.u32 %v4086, 16
        %v4353 = vrot.slane %v4351, 3
        %v4354 = vshll.u32 %v4086, 16
        %v4356 = vrot.slane %v4354, 4
        %v4357 = vor.u32 %v4353, %v4356
        %v4358 = vsel %vm1128, %v4349, %v4357
        %s4375 = scalar_lea.vmem [#allocation11], 384
        %v4376 = vld [vmem:[%s4375] sm:$0xf]
        %v4377 = vld [vmem:[%s4375 + $0x4] sm:$0xf]
        %v4378 = vld [vmem:[%s4375 + $0x8] sm:$0xf]
        %v4379 = vld [vmem:[%s4375 + $0xc] sm:$0xf]
        %v4380 = vld [vmem:[%s4375 + $0x10] sm:$0xf]
        %v4381 = vld [vmem:[%s4375 + $0x14] sm:$0xf]
        %v4382 = vld [vmem:[%s4375 + $0x18] sm:$0xf]
        %v4383 = vld [vmem:[%s4375 + $0x1c] sm:$0xf]
        %v4384 = vld [vmem:[%s4375 + $0x20] sm:$0xf]
        %v4385 = vld [vmem:[%s4375 + $0x24] sm:$0xf]
        %v4386 = vld [vmem:[%s4375 + $0x28] sm:$0xf]
        %v4387 = vld [vmem:[%s4375 + $0x2c] sm:$0xf]
        %v4388 = vld [vmem:[%s4375 + $0x30] sm:$0xf]
        %v4389 = vld [vmem:[%s4375 + $0x34] sm:$0xf]
        %v4390 = vld [vmem:[%s4375 + $0x38] sm:$0xf]
        %v4391 = vld [vmem:[%s4375 + $0x3c] sm:$0xf]
        %v4408 = vunpack.c.l.b16 %v4376
        %v4409 = vunpack.c.l.b16 %v4377
        %v4410 = vunpack.c.l.b16 %v4378
        %v4411 = vunpack.c.l.b16 %v4379
        %v4412 = vunpack.c.l.b16 %v4380
        %v4413 = vunpack.c.l.b16 %v4381
        %v4414 = vunpack.c.l.b16 %v4382
        %v4415 = vunpack.c.l.b16 %v4383
        %v4416 = vunpack.c.l.b16 %v4384
        %v4417 = vunpack.c.l.b16 %v4385
        %v4418 = vunpack.c.l.b16 %v4386
        %v4419 = vunpack.c.l.b16 %v4387
        %v4420 = vunpack.c.l.b16 %v4388
        %v4421 = vunpack.c.l.b16 %v4389
        %v4422 = vunpack.c.l.b16 %v4390
        %v4423 = vunpack.c.l.b16 %v4391
        %v4424 = vpack.c.b16 %v4409, %v4408
        %v4425 = vpack.c.b16 %v4411, %v4410
        %v4426 = vpack.c.b16 %v4413, %v4412
        %v4427 = vpack.c.b16 %v4415, %v4414
        %v4428 = vpack.c.b16 %v4417, %v4416
        %v4429 = vpack.c.b16 %v4419, %v4418
        %v4430 = vpack.c.b16 %v4421, %v4420
        %v4431 = vpack.c.b16 %v4423, %v4422
        %4440 = vmatprep.subr.bf16.mxu0 0
        %4441 = vmatpush1.bf16.msra.mxu0 %v4424
        %4442 = vmatprep.subr.bf16.mxu0 0
        %4443 = vmatpush1.bf16.msra.mxu0 %v4425
        %4444 = vmatprep.subr.bf16.mxu0 0
        %4445 = vmatpush1.bf16.msra.mxu0 %v4426
        %4446 = vmatprep.subr.bf16.mxu0 0
        %4447 = vmatpush1.bf16.msra.mxu0 %v4427
        %4448 = vmatprep.subr.bf16.mxu0 0
        %4449 = vmatpush1.bf16.msra.mxu0 %v4428
        %4450 = vmatprep.subr.bf16.mxu0 0
        %4451 = vmatpush1.bf16.msra.mxu0 %v4429
        %4452 = vmatprep.subr.bf16.mxu0 0
        %4453 = vmatpush1.bf16.msra.mxu0 %v4430
        %4454 = vmatprep.subr.bf16.mxu0 0
        %4455 = vmatpush1.bf16.msra.mxu0 %v4431
        %4456 = vmatprep.subr.bf16.mxu0 0
        %4457 = vmatpush1.bf16.msra.mxu0 0
        %4458 = vmatprep.subr.bf16.mxu0 0
        %4459 = vmatpush1.bf16.msra.mxu0 0
        %4460 = vmatprep.subr.bf16.mxu0 0
        %4461 = vmatpush1.bf16.msra.mxu0 0
        %4462 = vmatprep.subr.bf16.mxu0 0
        %4463 = vmatpush1.bf16.msra.mxu0 0
        %4464 = vmatprep.subr.bf16.mxu0 0
        %4465 = vmatpush1.bf16.msra.mxu0 0
        %4466 = vmatprep.subr.bf16.mxu0 0
        %4467 = vmatpush1.bf16.msra.mxu0 0
        %4468 = vmatprep.subr.bf16.mxu0 0
        %4469 = vmatpush1.bf16.msra.mxu0 0
        %4470 = vmatprep.subr.bf16.mxu0 0
        %4471 = vmatpush1.bf16.msra.mxu0 0
        %4472 = vmatprep.mubr.bf16.mxu0 0
        %4473 = vmatmul.mubr.bf16.gmra.mrb[0].mxu0 %v4103
        %v4474 = vpop.f32.mrb[0].mxu0
        %v4475 = vadd.f32 0.0, %v4474
        %v4476 = vpop.f32.mrb[0].mxu0
        %v4477 = vpop.f32.mrb[0].mxu0
        %v4478 = vadd.f32 0.0, %v4477
        %v4479 = vpop.f32.mrb[0].mxu0
        %4480 = vmatprep.mubr.bf16.mxu0 0
        %4481 = vmatmul.mubr.bf16.gmra.mrb[0].mxu0 %v4120
        %v4482 = vpop.f32.mrb[0].mxu0
        %v4483 = vadd.f32 0.0, %v4482
        %v4484 = vpop.f32.mrb[0].mxu0
        %v4485 = vpop.f32.mrb[0].mxu0
        %v4486 = vadd.f32 0.0, %v4485
        %v4487 = vpop.f32.mrb[0].mxu0
        %4488 = vmatprep.mubr.bf16.mxu0 0
        %4489 = vmatmul.mubr.bf16.gmra.mrb[0].mxu0 %v4137
        %v4490 = vpop.f32.mrb[0].mxu0
        %v4491 = vadd.f32 0.0, %v4490
        %v4492 = vpop.f32.mrb[0].mxu0
        %v4493 = vpop.f32.mrb[0].mxu0
        %v4494 = vadd.f32 0.0, %v4493
        %v4495 = vpop.f32.mrb[0].mxu0
        %4496 = vmatprep.mubr.bf16.mxu0 0
        %4497 = vmatmul.mubr.bf16.gmra.mrb[0].mxu0 %v4154
        %v4498 = vpop.f32.mrb[0].mxu0
        %v4499 = vadd.f32 0.0, %v4498
        %v4500 = vpop.f32.mrb[0].mxu0
        %v4501 = vpop.f32.mrb[0].mxu0
        %v4502 = vadd.f32 0.0, %v4501
        %v4503 = vpop.f32.mrb[0].mxu0
        %4504 = vmatprep.mubr.bf16.mxu0 0
        %4505 = vmatmul.mubr.bf16.gmra.mrb[0].mxu0 %v4171
        %v4506 = vpop.f32.mrb[0].mxu0
        %v4507 = vadd.f32 0.0, %v4506
        %v4508 = vpop.f32.mrb[0].mxu0
        %v4509 = vpop.f32.mrb[0].mxu0
        %v4510 = vadd.f32 0.0, %v4509
        %v4511 = vpop.f32.mrb[0].mxu0
        %4512 = vmatprep.mubr.bf16.mxu0 0
        %4513 = vmatmul.mubr.bf16.gmra.mrb[0].mxu0 %v4188
        %v4514 = vpop.f32.mrb[0].mxu0
        %v4515 = vadd.f32 0.0, %v4514
        %v4516 = vpop.f32.mrb[0].mxu0
        %v4517 = vpop.f32.mrb[0].mxu0
        %v4518 = vadd.f32 0.0, %v4517
        %v4519 = vpop.f32.mrb[0].mxu0
        %4520 = vmatprep.mubr.bf16.mxu0 0
        %4521 = vmatmul.mubr.bf16.gmra.mrb[0].mxu0 %v4205
        %v4522 = vpop.f32.mrb[0].mxu0
        %v4523 = vadd.f32 0.0, %v4522
        %v4524 = vpop.f32.mrb[0].mxu0
        %v4525 = vpop.f32.mrb[0].mxu0
        %v4526 = vadd.f32 0.0, %v4525
        %v4527 = vpop.f32.mrb[0].mxu0
        %4528 = vmatprep.mubr.bf16.mxu0 0
        %4529 = vmatmul.mubr.bf16.gmra.mrb[0].mxu0 %v4222
        %v4530 = vpop.f32.mrb[0].mxu0
        %v4531 = vadd.f32 0.0, %v4530
        %v4532 = vpop.f32.mrb[0].mxu0
        %v4533 = vpop.f32.mrb[0].mxu0
        %v4534 = vadd.f32 0.0, %v4533
        %v4535 = vpop.f32.mrb[0].mxu0
        %4536 = vmatprep.mubr.bf16.mxu0 0
        %4537 = vmatmul.mubr.bf16.gmra.mrb[0].mxu0 %v4239
        %v4538 = vpop.f32.mrb[0].mxu0
        %v4539 = vadd.f32 0.0, %v4538
        %v4540 = vpop.f32.mrb[0].mxu0
        %v4541 = vpop.f32.mrb[0].mxu0
        %v4542 = vadd.f32 0.0, %v4541
        %v4543 = vpop.f32.mrb[0].mxu0
        %4544 = vmatprep.mubr.bf16.mxu0 0
        %4545 = vmatmul.mubr.bf16.gmra.mrb[0].mxu0 %v4256
        %v4546 = vpop.f32.mrb[0].mxu0
        %v4547 = vadd.f32 0.0, %v4546
        %v4548 = vpop.f32.mrb[0].mxu0
        %v4549 = vpop.f32.mrb[0].mxu0
        %v4550 = vadd.f32 0.0, %v4549
        %v4551 = vpop.f32.mrb[0].mxu0
        %4552 = vmatprep.mubr.bf16.mxu0 0
        %4553 = vmatmul.mubr.bf16.gmra.mrb[0].mxu0 %v4273
        %v4554 = vpop.f32.mrb[0].mxu0
        %v4555 = vadd.f32 0.0, %v4554
        %v4556 = vpop.f32.mrb[0].mxu0
        %v4557 = vpop.f32.mrb[0].mxu0
        %v4558 = vadd.f32 0.0, %v4557
        %v4559 = vpop.f32.mrb[0].mxu0
        %4560 = vmatprep.mubr.bf16.mxu0 0
        %4561 = vmatmul.mubr.bf16.gmra.mrb[0].mxu0 %v4290
        %v4562 = vpop.f32.mrb[0].mxu0
        %v4563 = vadd.f32 0.0, %v4562
        %v4564 = vpop.f32.mrb[0].mxu0
        %v4565 = vpop.f32.mrb[0].mxu0
        %v4566 = vadd.f32 0.0, %v4565
        %v4567 = vpop.f32.mrb[0].mxu0
        %4568 = vmatprep.mubr.bf16.mxu0 0
        %4569 = vmatmul.mubr.bf16.gmra.mrb[0].mxu0 %v4307
        %v4570 = vpop.f32.mrb[0].mxu0
        %v4571 = vadd.f32 0.0, %v4570
        %v4572 = vpop.f32.mrb[0].mxu0
        %v4573 = vpop.f32.mrb[0].mxu0
        %v4574 = vadd.f32 0.0, %v4573
        %v4575 = vpop.f32.mrb[0].mxu0
        %4576 = vmatprep.mubr.bf16.mxu0 0
        %4577 = vmatmul.mubr.bf16.gmra.mrb[0].mxu0 %v4324
        %v4578 = vpop.f32.mrb[0].mxu0
        %v4579 = vadd.f32 0.0, %v4578
        %v4580 = vpop.f32.mrb[0].mxu0
        %v4581 = vpop.f32.mrb[0].mxu0
        %v4582 = vadd.f32 0.0, %v4581
        %v4583 = vpop.f32.mrb[0].mxu0
        %4584 = vmatprep.mubr.bf16.mxu0 0
        %4585 = vmatmul.mubr.bf16.gmra.mrb[0].mxu0 %v4341
        %v4586 = vpop.f32.mrb[0].mxu0
        %v4587 = vadd.f32 0.0, %v4586
        %v4588 = vpop.f32.mrb[0].mxu0
        %v4589 = vpop.f32.mrb[0].mxu0
        %v4590 = vadd.f32 0.0, %v4589
        %v4591 = vpop.f32.mrb[0].mxu0
        %4592 = vmatprep.mubr.bf16.mxu0 0
        %4593 = vmatmul.mubr.bf16.gmra.mrb[0].mxu0 %v4358
        %v4594 = vpop.f32.mrb[0].mxu0
        %v4595 = vadd.f32 0.0, %v4594
        %v4596 = vpop.f32.mrb[0].mxu0
        %v4597 = vpop.f32.mrb[0].mxu0
        %v4598 = vadd.f32 0.0, %v4597
        %v4599 = vpop.f32.mrb[0].mxu0
        %4600 = vdwg.mxu0
        %v4601 = vadd.f32 %v4022, %v4475
        %v4602 = vadd.f32 %v4023, %v4478
        %v4603 = vadd.f32 %v4024, %v4483
        %v4604 = vadd.f32 %v4025, %v4486
        %v4605 = vadd.f32 %v4026, %v4491
        %v4606 = vadd.f32 %v4027, %v4494
        %v4607 = vadd.f32 %v4028, %v4499
        %v4608 = vadd.f32 %v4029, %v4502
        %v4609 = vadd.f32 %v4030, %v4507
        %v4610 = vadd.f32 %v4031, %v4510
        %v4611 = vadd.f32 %v4032, %v4515
        %v4612 = vadd.f32 %v4033, %v4518
        %v4613 = vadd.f32 %v4034, %v4523
        %v4614 = vadd.f32 %v4035, %v4526
        %v4615 = vadd.f32 %v4036, %v4531
        %v4616 = vadd.f32 %v4037, %v4534
        %v4617 = vadd.f32 %v4038, %v4539
        %v4618 = vadd.f32 %v4039, %v4542
        %v4619 = vadd.f32 %v4040, %v4547
        %v4620 = vadd.f32 %v4041, %v4550
        %v4621 = vadd.f32 %v4042, %v4555
        %v4622 = vadd.f32 %v4043, %v4558
        %v4623 = vadd.f32 %v4044, %v4563
        %v4624 = vadd.f32 %v4045, %v4566
        %v4625 = vadd.f32 %v4046, %v4571
        %v4626 = vadd.f32 %v4047, %v4574
        %v4627 = vadd.f32 %v4048, %v4579
        %v4628 = vadd.f32 %v4049, %v4582
        %v4629 = vadd.f32 %v4050, %v4587
        %v4630 = vadd.f32 %v4051, %v4590
        %v4631 = vadd.f32 %v4052, %v4595
        %v4632 = vadd.f32 %v4053, %v4598
        %v4633 = vld [vmem:[%s4054] sm:$0xf0]
        %v4634 = vld [vmem:[%s4054 + $0x10] sm:$0xf0]
        %v4635 = vld [vmem:[%s4054 + $0x20] sm:$0xf0]
        %v4636 = vld [vmem:[%s4054 + $0x30] sm:$0xf0]
        %v4637 = vld [vmem:[%s4054 + $0x40] sm:$0xf0]
        %v4638 = vld [vmem:[%s4054 + $0x50] sm:$0xf0]
        %v4639 = vld [vmem:[%s4054 + $0x60] sm:$0xf0]
        %v4640 = vld [vmem:[%s4054 + $0x70] sm:$0xf0]
        %v4641 = vld [vmem:[%s4054 + $0x80] sm:$0xf0]
        %v4642 = vld [vmem:[%s4054 + $0x90] sm:$0xf0]
        %v4643 = vld [vmem:[%s4054 + $0xa0] sm:$0xf0]
        %v4644 = vld [vmem:[%s4054 + $0xb0] sm:$0xf0]
        %v4645 = vld [vmem:[%s4054 + $0xc0] sm:$0xf0]
        %v4646 = vld [vmem:[%s4054 + $0xd0] sm:$0xf0]
        %v4647 = vld [vmem:[%s4054 + $0xe0] sm:$0xf0]
        %v4648 = vld [vmem:[%s4054 + $0xf0] sm:$0xf0]
        %v4681 = vrot.slane %v4633, 4
        %v4682 = vrot.slane %v4056, 4
        %v4683 = vsel %vm1481, %v4681, %v4682
        %v4684 = vrot.slane %v4634, 4
        %v4685 = vrot.slane %v4058, 4
        %v4686 = vsel %vm1481, %v4684, %v4685
        %v4687 = vrot.slane %v4635, 4
        %v4688 = vrot.slane %v4060, 4
        %v4689 = vsel %vm1481, %v4687, %v4688
        %v4690 = vrot.slane %v4636, 4
        %v4691 = vrot.slane %v4062, 4
        %v4692 = vsel %vm1481, %v4690, %v4691
        %v4693 = vrot.slane %v4637, 4
        %v4694 = vrot.slane %v4064, 4
        %v4695 = vsel %vm1481, %v4693, %v4694
        %v4696 = vrot.slane %v4638, 4
        %v4697 = vrot.slane %v4066, 4
        %v4698 = vsel %vm1481, %v4696, %v4697
        %v4699 = vrot.slane %v4639, 4
        %v4700 = vrot.slane %v4068, 4
        %v4701 = vsel %vm1481, %v4699, %v4700
        %v4702 = vrot.slane %v4640, 4
        %v4703 = vrot.slane %v4070, 4
        %v4704 = vsel %vm1481, %v4702, %v4703
        %v4705 = vrot.slane %v4641, 4
        %v4706 = vrot.slane %v4072, 4
        %v4707 = vsel %vm1481, %v4705, %v4706
        %v4708 = vrot.slane %v4642, 4
        %v4709 = vrot.slane %v4074, 4
        %v4710 = vsel %vm1481, %v4708, %v4709
        %v4711 = vrot.slane %v4643, 4
        %v4712 = vrot.slane %v4076, 4
        %v4713 = vsel %vm1481, %v4711, %v4712
        %v4714 = vrot.slane %v4644, 4
        %v4715 = vrot.slane %v4078, 4
        %v4716 = vsel %vm1481, %v4714, %v4715
        %v4717 = vrot.slane %v4645, 4
        %v4718 = vrot.slane %v4080, 4
        %v4719 = vsel %vm1481, %v4717, %v4718
        %v4720 = vrot.slane %v4646, 4
        %v4721 = vrot.slane %v4082, 4
        %v4722 = vsel %vm1481, %v4720, %v4721
        %v4723 = vrot.slane %v4647, 4
        %v4724 = vrot.slane %v4084, 4
        %v4725 = vsel %vm1481, %v4723, %v4724
        %v4726 = vrot.slane %v4648, 4
        %v4727 = vrot.slane %v4086, 4
        %v4728 = vsel %vm1481, %v4726, %v4727
        %s4745 = scalar_lea.vmem [#allocation11], 448
        %v4746 = vld [vmem:[%s4745] sm:$0xf]
        %v4747 = vld [vmem:[%s4745 + $0x4] sm:$0xf]
        %v4748 = vld [vmem:[%s4745 + $0x8] sm:$0xf]
        %v4749 = vld [vmem:[%s4745 + $0xc] sm:$0xf]
        %v4750 = vld [vmem:[%s4745 + $0x10] sm:$0xf]
        %v4751 = vld [vmem:[%s4745 + $0x14] sm:$0xf]
        %v4752 = vld [vmem:[%s4745 + $0x18] sm:$0xf]
        %v4753 = vld [vmem:[%s4745 + $0x1c] sm:$0xf]
        %v4754 = vld [vmem:[%s4745 + $0x20] sm:$0xf]
        %v4755 = vld [vmem:[%s4745 + $0x24] sm:$0xf]
        %v4756 = vld [vmem:[%s4745 + $0x28] sm:$0xf]
        %v4757 = vld [vmem:[%s4745 + $0x2c] sm:$0xf]
        %v4758 = vld [vmem:[%s4745 + $0x30] sm:$0xf]
        %v4759 = vld [vmem:[%s4745 + $0x34] sm:$0xf]
        %v4760 = vld [vmem:[%s4745 + $0x38] sm:$0xf]
        %v4761 = vld [vmem:[%s4745 + $0x3c] sm:$0xf]
        %v4778 = vunpack.c.l.b16 %v4746
        %v4779 = vunpack.c.l.b16 %v4747
        %v4780 = vunpack.c.l.b16 %v4748
        %v4781 = vunpack.c.l.b16 %v4749
        %v4782 = vunpack.c.l.b16 %v4750
        %v4783 = vunpack.c.l.b16 %v4751
        %v4784 = vunpack.c.l.b16 %v4752
        %v4785 = vunpack.c.l.b16 %v4753
        %v4786 = vunpack.c.l.b16 %v4754
        %v4787 = vunpack.c.l.b16 %v4755
        %v4788 = vunpack.c.l.b16 %v4756
        %v4789 = vunpack.c.l.b16 %v4757
        %v4790 = vunpack.c.l.b16 %v4758
        %v4791 = vunpack.c.l.b16 %v4759
        %v4792 = vunpack.c.l.b16 %v4760
        %v4793 = vunpack.c.l.b16 %v4761
        %v4794 = vpack.c.b16 %v4779, %v4778
        %v4795 = vpack.c.b16 %v4781, %v4780
        %v4796 = vpack.c.b16 %v4783, %v4782
        %v4797 = vpack.c.b16 %v4785, %v4784
        %v4798 = vpack.c.b16 %v4787, %v4786
        %v4799 = vpack.c.b16 %v4789, %v4788
        %v4800 = vpack.c.b16 %v4791, %v4790
        %v4801 = vpack.c.b16 %v4793, %v4792
        %4810 = vmatprep.subr.bf16.mxu0 0
        %4811 = vmatpush1.bf16.msra.mxu0 %v4794
        %4812 = vmatprep.subr.bf16.mxu0 0
        %4813 = vmatpush1.bf16.msra.mxu0 %v4795
        %4814 = vmatprep.subr.bf16.mxu0 0
        %4815 = vmatpush1.bf16.msra.mxu0 %v4796
        %4816 = vmatprep.subr.bf16.mxu0 0
        %4817 = vmatpush1.bf16.msra.mxu0 %v4797
        %4818 = vmatprep.subr.bf16.mxu0 0
        %4819 = vmatpush1.bf16.msra.mxu0 %v4798
        %4820 = vmatprep.subr.bf16.mxu0 0
        %4821 = vmatpush1.bf16.msra.mxu0 %v4799
        %4822 = vmatprep.subr.bf16.mxu0 0
        %4823 = vmatpush1.bf16.msra.mxu0 %v4800
        %4824 = vmatprep.subr.bf16.mxu0 0
        %4825 = vmatpush1.bf16.msra.mxu0 %v4801
        %4826 = vmatprep.subr.bf16.mxu0 0
        %4827 = vmatpush1.bf16.msra.mxu0 0
        %4828 = vmatprep.subr.bf16.mxu0 0
        %4829 = vmatpush1.bf16.msra.mxu0 0
        %4830 = vmatprep.subr.bf16.mxu0 0
        %4831 = vmatpush1.bf16.msra.mxu0 0
        %4832 = vmatprep.subr.bf16.mxu0 0
        %4833 = vmatpush1.bf16.msra.mxu0 0
        %4834 = vmatprep.subr.bf16.mxu0 0
        %4835 = vmatpush1.bf16.msra.mxu0 0
        %4836 = vmatprep.subr.bf16.mxu0 0
        %4837 = vmatpush1.bf16.msra.mxu0 0
        %4838 = vmatprep.subr.bf16.mxu0 0
        %4839 = vmatpush1.bf16.msra.mxu0 0
        %4840 = vmatprep.subr.bf16.mxu0 0
        %4841 = vmatpush1.bf16.msra.mxu0 0
        %4842 = vmatprep.mubr.bf16.mxu0 0
        %4843 = vmatmul.mubr.bf16.gmra.mrb[0].mxu0 %v4683
        %v4844 = vpop.f32.mrb[0].mxu0
        %v4845 = vadd.f32 0.0, %v4844
        %v4846 = vpop.f32.mrb[0].mxu0
        %v4847 = vpop.f32.mrb[0].mxu0
        %v4848 = vadd.f32 0.0, %v4847
        %v4849 = vpop.f32.mrb[0].mxu0
        %4850 = vmatprep.mubr.bf16.mxu0 0
        %4851 = vmatmul.mubr.bf16.gmra.mrb[0].mxu0 %v4686
        %v4852 = vpop.f32.mrb[0].mxu0
        %v4853 = vadd.f32 0.0, %v4852
        %v4854 = vpop.f32.mrb[0].mxu0
        %v4855 = vpop.f32.mrb[0].mxu0
        %v4856 = vadd.f32 0.0, %v4855
        %v4857 = vpop.f32.mrb[0].mxu0
        %4858 = vmatprep.mubr.bf16.mxu0 0
        %4859 = vmatmul.mubr.bf16.gmra.mrb[0].mxu0 %v4689
        %v4860 = vpop.f32.mrb[0].mxu0
        %v4861 = vadd.f32 0.0, %v4860
        %v4862 = vpop.f32.mrb[0].mxu0
        %v4863 = vpop.f32.mrb[0].mxu0
        %v4864 = vadd.f32 0.0, %v4863
        %v4865 = vpop.f32.mrb[0].mxu0
        %4866 = vmatprep.mubr.bf16.mxu0 0
        %4867 = vmatmul.mubr.bf16.gmra.mrb[0].mxu0 %v4692
        %v4868 = vpop.f32.mrb[0].mxu0
        %v4869 = vadd.f32 0.0, %v4868
        %v4870 = vpop.f32.mrb[0].mxu0
        %v4871 = vpop.f32.mrb[0].mxu0
        %v4872 = vadd.f32 0.0, %v4871
        %v4873 = vpop.f32.mrb[0].mxu0
        %4874 = vmatprep.mubr.bf16.mxu0 0
        %4875 = vmatmul.mubr.bf16.gmra.mrb[0].mxu0 %v4695
        %v4876 = vpop.f32.mrb[0].mxu0
        %v4877 = vadd.f32 0.0, %v4876
        %v4878 = vpop.f32.mrb[0].mxu0
        %v4879 = vpop.f32.mrb[0].mxu0
        %v4880 = vadd.f32 0.0, %v4879
        %v4881 = vpop.f32.mrb[0].mxu0
        %4882 = vmatprep.mubr.bf16.mxu0 0
        %4883 = vmatmul.mubr.bf16.gmra.mrb[0].mxu0 %v4698
        %v4884 = vpop.f32.mrb[0].mxu0
        %v4885 = vadd.f32 0.0, %v4884
        %v4886 = vpop.f32.mrb[0].mxu0
        %v4887 = vpop.f32.mrb[0].mxu0
        %v4888 = vadd.f32 0.0, %v4887
        %v4889 = vpop.f32.mrb[0].mxu0
        %4890 = vmatprep.mubr.bf16.mxu0 0
        %4891 = vmatmul.mubr.bf16.gmra.mrb[0].mxu0 %v4701
        %v4892 = vpop.f32.mrb[0].mxu0
        %v4893 = vadd.f32 0.0, %v4892
        %v4894 = vpop.f32.mrb[0].mxu0
        %v4895 = vpop.f32.mrb[0].mxu0
        %v4896 = vadd.f32 0.0, %v4895
        %v4897 = vpop.f32.mrb[0].mxu0
        %4898 = vmatprep.mubr.bf16.mxu0 0
        %4899 = vmatmul.mubr.bf16.gmra.mrb[0].mxu0 %v4704
        %v4900 = vpop.f32.mrb[0].mxu0
        %v4901 = vadd.f32 0.0, %v4900
        %v4902 = vpop.f32.mrb[0].mxu0
        %v4903 = vpop.f32.mrb[0].mxu0
        %v4904 = vadd.f32 0.0, %v4903
        %v4905 = vpop.f32.mrb[0].mxu0
        %4906 = vmatprep.mubr.bf16.mxu0 0
        %4907 = vmatmul.mubr.bf16.gmra.mrb[0].mxu0 %v4707
        %v4908 = vpop.f32.mrb[0].mxu0
        %v4909 = vadd.f32 0.0, %v4908
        %v4910 = vpop.f32.mrb[0].mxu0
        %v4911 = vpop.f32.mrb[0].mxu0
        %v4912 = vadd.f32 0.0, %v4911
        %v4913 = vpop.f32.mrb[0].mxu0
        %4914 = vmatprep.mubr.bf16.mxu0 0
        %4915 = vmatmul.mubr.bf16.gmra.mrb[0].mxu0 %v4710
        %v4916 = vpop.f32.mrb[0].mxu0
        %v4917 = vadd.f32 0.0, %v4916
        %v4918 = vpop.f32.mrb[0].mxu0
        %v4919 = vpop.f32.mrb[0].mxu0
        %v4920 = vadd.f32 0.0, %v4919
        %v4921 = vpop.f32.mrb[0].mxu0
        %4922 = vmatprep.mubr.bf16.mxu0 0
        %4923 = vmatmul.mubr.bf16.gmra.mrb[0].mxu0 %v4713
        %v4924 = vpop.f32.mrb[0].mxu0
        %v4925 = vadd.f32 0.0, %v4924
        %v4926 = vpop.f32.mrb[0].mxu0
        %v4927 = vpop.f32.mrb[0].mxu0
        %v4928 = vadd.f32 0.0, %v4927
        %v4929 = vpop.f32.mrb[0].mxu0
        %4930 = vmatprep.mubr.bf16.mxu0 0
        %4931 = vmatmul.mubr.bf16.gmra.mrb[0].mxu0 %v4716
        %v4932 = vpop.f32.mrb[0].mxu0
        %v4933 = vadd.f32 0.0, %v4932
        %v4934 = vpop.f32.mrb[0].mxu0
        %v4935 = vpop.f32.mrb[0].mxu0
        %v4936 = vadd.f32 0.0, %v4935
        %v4937 = vpop.f32.mrb[0].mxu0
        %4938 = vmatprep.mubr.bf16.mxu0 0
        %4939 = vmatmul.mubr.bf16.gmra.mrb[0].mxu0 %v4719
        %v4940 = vpop.f32.mrb[0].mxu0
        %v4941 = vadd.f32 0.0, %v4940
        %v4942 = vpop.f32.mrb[0].mxu0
        %v4943 = vpop.f32.mrb[0].mxu0
        %v4944 = vadd.f32 0.0, %v4943
        %v4945 = vpop.f32.mrb[0].mxu0
        %4946 = vmatprep.mubr.bf16.mxu0 0
        %4947 = vmatmul.mubr.bf16.gmra.mrb[0].mxu0 %v4722
        %v4948 = vpop.f32.mrb[0].mxu0
        %v4949 = vadd.f32 0.0, %v4948
        %v4950 = vpop.f32.mrb[0].mxu0
        %v4951 = vpop.f32.mrb[0].mxu0
        %v4952 = vadd.f32 0.0, %v4951
        %v4953 = vpop.f32.mrb[0].mxu0
        %4954 = vmatprep.mubr.bf16.mxu0 0
        %4955 = vmatmul.mubr.bf16.gmra.mrb[0].mxu0 %v4725
        %v4956 = vpop.f32.mrb[0].mxu0
        %v4957 = vadd.f32 0.0, %v4956
        %v4958 = vpop.f32.mrb[0].mxu0
        %v4959 = vpop.f32.mrb[0].mxu0
        %v4960 = vadd.f32 0.0, %v4959
        %v4961 = vpop.f32.mrb[0].mxu0
        %4962 = vmatprep.mubr.bf16.mxu0 0
        %4963 = vmatmul.mubr.bf16.gmra.mrb[0].mxu0 %v4728
        %v4964 = vpop.f32.mrb[0].mxu0
        %v4965 = vadd.f32 0.0, %v4964
        %v4966 = vpop.f32.mrb[0].mxu0
        %v4967 = vpop.f32.mrb[0].mxu0
        %v4968 = vadd.f32 0.0, %v4967
        %v4969 = vpop.f32.mrb[0].mxu0
        %4970 = vdwg.mxu0
        %v4971 = vadd.f32 %v4601, %v4845
        %v4972 = vadd.f32 %v4602, %v4848
        %v4973 = vadd.f32 %v4603, %v4853
        %v4974 = vadd.f32 %v4604, %v4856
        %v4975 = vadd.f32 %v4605, %v4861
        %v4976 = vadd.f32 %v4606, %v4864
        %v4977 = vadd.f32 %v4607, %v4869
        %v4978 = vadd.f32 %v4608, %v4872
        %v4979 = vadd.f32 %v4609, %v4877
        %v4980 = vadd.f32 %v4610, %v4880
        %v4981 = vadd.f32 %v4611, %v4885
        %v4982 = vadd.f32 %v4612, %v4888
        %v4983 = vadd.f32 %v4613, %v4893
        %v4984 = vadd.f32 %v4614, %v4896
        %v4985 = vadd.f32 %v4615, %v4901
        %v4986 = vadd.f32 %v4616, %v4904
        %v4987 = vadd.f32 %v4617, %v4909
        %v4988 = vadd.f32 %v4618, %v4912
        %v4989 = vadd.f32 %v4619, %v4917
        %v4990 = vadd.f32 %v4620, %v4920
        %v4991 = vadd.f32 %v4621, %v4925
        %v4992 = vadd.f32 %v4622, %v4928
        %v4993 = vadd.f32 %v4623, %v4933
        %v4994 = vadd.f32 %v4624, %v4936
        %v4995 = vadd.f32 %v4625, %v4941
        %v4996 = vadd.f32 %v4626, %v4944
        %v4997 = vadd.f32 %v4627, %v4949
        %v4998 = vadd.f32 %v4628, %v4952
        %v4999 = vadd.f32 %v4629, %v4957
        %v5000 = vadd.f32 %v4630, %v4960
        %v5001 = vadd.f32 %v4631, %v4965
        %v5002 = vadd.f32 %v4632, %v4968
        %v5003 = vld [vmem:[%s4054 + $0x8] sm:$0x1f]
        %v5004 = vld [vmem:[%s4054 + $0x18] sm:$0x1f]
        %v5005 = vld [vmem:[%s4054 + $0x28] sm:$0x1f]
        %v5006 = vld [vmem:[%s4054 + $0x38] sm:$0x1f]
        %v5007 = vld [vmem:[%s4054 + $0x48] sm:$0x1f]
        %v5008 = vld [vmem:[%s4054 + $0x58] sm:$0x1f]
        %v5009 = vld [vmem:[%s4054 + $0x68] sm:$0x1f]
        %v5010 = vld [vmem:[%s4054 + $0x78] sm:$0x1f]
        %v5011 = vld [vmem:[%s4054 + $0x88] sm:$0x1f]
        %v5012 = vld [vmem:[%s4054 + $0x98] sm:$0x1f]
        %v5013 = vld [vmem:[%s4054 + $0xa8] sm:$0x1f]
        %v5014 = vld [vmem:[%s4054 + $0xb8] sm:$0x1f]
        %v5015 = vld [vmem:[%s4054 + $0xc8] sm:$0x1f]
        %v5016 = vld [vmem:[%s4054 + $0xd8] sm:$0x1f]
        %v5017 = vld [vmem:[%s4054 + $0xe8] sm:$0x1f]
        %v5018 = vld [vmem:[%s4054 + $0xf8] sm:$0x1f]
        %v5020 = vshrl.u32 %v4633, 16
        %v5022 = vrot.slane %v5020, 4
        %v5023 = vshll.u32 %v4633, 16
        %v5025 = vrot.slane %v5023, 5
        %v5026 = vor.u32 %v5022, %v5025
        %v5028 = vshrl.u32 %v5003, 16
        %v5030 = vrot.slane %v5028, 4
        %v5031 = vshll.u32 %v5003, 16
        %v5033 = vrot.slane %v5031, 5
        %v5034 = vor.u32 %v5030, %v5033
        %v5035 = vsel %vm1997, %v5026, %v5034
        %v5037 = vshrl.u32 %v4634, 16
        %v5039 = vrot.slane %v5037, 4
        %v5040 = vshll.u32 %v4634, 16
        %v5042 = vrot.slane %v5040, 5
        %v5043 = vor.u32 %v5039, %v5042
        %v5045 = vshrl.u32 %v5004, 16
        %v5047 = vrot.slane %v5045, 4
        %v5048 = vshll.u32 %v5004, 16
        %v5050 = vrot.slane %v5048, 5
        %v5051 = vor.u32 %v5047, %v5050
        %v5052 = vsel %vm1997, %v5043, %v5051
        %v5054 = vshrl.u32 %v4635, 16
        %v5056 = vrot.slane %v5054, 4
        %v5057 = vshll.u32 %v4635, 16
        %v5059 = vrot.slane %v5057, 5
        %v5060 = vor.u32 %v5056, %v5059
        %v5062 = vshrl.u32 %v5005, 16
        %v5064 = vrot.slane %v5062, 4
        %v5065 = vshll.u32 %v5005, 16
        %v5067 = vrot.slane %v5065, 5
        %v5068 = vor.u32 %v5064, %v5067
        %v5069 = vsel %vm1997, %v5060, %v5068
        %v5071 = vshrl.u32 %v4636, 16
        %v5073 = vrot.slane %v5071, 4
        %v5074 = vshll.u32 %v4636, 16
        %v5076 = vrot.slane %v5074, 5
        %v5077 = vor.u32 %v5073, %v5076
        %v5079 = vshrl.u32 %v5006, 16
        %v5081 = vrot.slane %v5079, 4
        %v5082 = vshll.u32 %v5006, 16
        %v5084 = vrot.slane %v5082, 5
        %v5085 = vor.u32 %v5081, %v5084
        %v5086 = vsel %vm1997, %v5077, %v5085
        %v5088 = vshrl.u32 %v4637, 16
        %v5090 = vrot.slane %v5088, 4
        %v5091 = vshll.u32 %v4637, 16
        %v5093 = vrot.slane %v5091, 5
        %v5094 = vor.u32 %v5090, %v5093
        %v5096 = vshrl.u32 %v5007, 16
        %v5098 = vrot.slane %v5096, 4
        %v5099 = vshll.u32 %v5007, 16
        %v5101 = vrot.slane %v5099, 5
        %v5102 = vor.u32 %v5098, %v5101
        %v5103 = vsel %vm1997, %v5094, %v5102
        %v5105 = vshrl.u32 %v4638, 16
        %v5107 = vrot.slane %v5105, 4
        %v5108 = vshll.u32 %v4638, 16
        %v5110 = vrot.slane %v5108, 5
        %v5111 = vor.u32 %v5107, %v5110
        %v5113 = vshrl.u32 %v5008, 16
        %v5115 = vrot.slane %v5113, 4
        %v5116 = vshll.u32 %v5008, 16
        %v5118 = vrot.slane %v5116, 5
        %v5119 = vor.u32 %v5115, %v5118
        %v5120 = vsel %vm1997, %v5111, %v5119
        %v5122 = vshrl.u32 %v4639, 16
        %v5124 = vrot.slane %v5122, 4
        %v5125 = vshll.u32 %v4639, 16
        %v5127 = vrot.slane %v5125, 5
        %v5128 = vor.u32 %v5124, %v5127
        %v5130 = vshrl.u32 %v5009, 16
        %v5132 = vrot.slane %v5130, 4
        %v5133 = vshll.u32 %v5009, 16
        %v5135 = vrot.slane %v5133, 5
        %v5136 = vor.u32 %v5132, %v5135
        %v5137 = vsel %vm1997, %v5128, %v5136
        %v5139 = vshrl.u32 %v4640, 16
        %v5141 = vrot.slane %v5139, 4
        %v5142 = vshll.u32 %v4640, 16
        %v5144 = vrot.slane %v5142, 5
        %v5145 = vor.u32 %v5141, %v5144
        %v5147 = vshrl.u32 %v5010, 16
        %v5149 = vrot.slane %v5147, 4
        %v5150 = vshll.u32 %v5010, 16
        %v5152 = vrot.slane %v5150, 5
        %v5153 = vor.u32 %v5149, %v5152
        %v5154 = vsel %vm1997, %v5145, %v5153
        %v5156 = vshrl.u32 %v4641, 16
        %v5158 = vrot.slane %v5156, 4
        %v5159 = vshll.u32 %v4641, 16
        %v5161 = vrot.slane %v5159, 5
        %v5162 = vor.u32 %v5158, %v5161
        %v5164 = vshrl.u32 %v5011, 16
        %v5166 = vrot.slane %v5164, 4
        %v5167 = vshll.u32 %v5011, 16
        %v5169 = vrot.slane %v5167, 5
        %v5170 = vor.u32 %v5166, %v5169
        %v5171 = vsel %vm1997, %v5162, %v5170
        %v5173 = vshrl.u32 %v4642, 16
        %v5175 = vrot.slane %v5173, 4
        %v5176 = vshll.u32 %v4642, 16
        %v5178 = vrot.slane %v5176, 5
        %v5179 = vor.u32 %v5175, %v5178
        %v5181 = vshrl.u32 %v5012, 16
        %v5183 = vrot.slane %v5181, 4
        %v5184 = vshll.u32 %v5012, 16
        %v5186 = vrot.slane %v5184, 5
        %v5187 = vor.u32 %v5183, %v5186
        %v5188 = vsel %vm1997, %v5179, %v5187
        %v5190 = vshrl.u32 %v4643, 16
        %v5192 = vrot.slane %v5190, 4
        %v5193 = vshll.u32 %v4643, 16
        %v5195 = vrot.slane %v5193, 5
        %v5196 = vor.u32 %v5192, %v5195
        %v5198 = vshrl.u32 %v5013, 16
        %v5200 = vrot.slane %v5198, 4
        %v5201 = vshll.u32 %v5013, 16
        %v5203 = vrot.slane %v5201, 5
        %v5204 = vor.u32 %v5200, %v5203
        %v5205 = vsel %vm1997, %v5196, %v5204
        %v5207 = vshrl.u32 %v4644, 16
        %v5209 = vrot.slane %v5207, 4
        %v5210 = vshll.u32 %v4644, 16
        %v5212 = vrot.slane %v5210, 5
        %v5213 = vor.u32 %v5209, %v5212
        %v5215 = vshrl.u32 %v5014, 16
        %v5217 = vrot.slane %v5215, 4
        %v5218 = vshll.u32 %v5014, 16
        %v5220 = vrot.slane %v5218, 5
        %v5221 = vor.u32 %v5217, %v5220
        %v5222 = vsel %vm1997, %v5213, %v5221
        %v5224 = vshrl.u32 %v4645, 16
        %v5226 = vrot.slane %v5224, 4
        %v5227 = vshll.u32 %v4645, 16
        %v5229 = vrot.slane %v5227, 5
        %v5230 = vor.u32 %v5226, %v5229
        %v5232 = vshrl.u32 %v5015, 16
        %v5234 = vrot.slane %v5232, 4
        %v5235 = vshll.u32 %v5015, 16
        %v5237 = vrot.slane %v5235, 5
        %v5238 = vor.u32 %v5234, %v5237
        %v5239 = vsel %vm1997, %v5230, %v5238
        %v5241 = vshrl.u32 %v4646, 16
        %v5243 = vrot.slane %v5241, 4
        %v5244 = vshll.u32 %v4646, 16
        %v5246 = vrot.slane %v5244, 5
        %v5247 = vor.u32 %v5243, %v5246
        %v5249 = vshrl.u32 %v5016, 16
        %v5251 = vrot.slane %v5249, 4
        %v5252 = vshll.u32 %v5016, 16
        %v5254 = vrot.slane %v5252, 5
        %v5255 = vor.u32 %v5251, %v5254
        %v5256 = vsel %vm1997, %v5247, %v5255
        %v5258 = vshrl.u32 %v4647, 16
        %v5260 = vrot.slane %v5258, 4
        %v5261 = vshll.u32 %v4647, 16
        %v5263 = vrot.slane %v5261, 5
        %v5264 = vor.u32 %v5260, %v5263
        %v5266 = vshrl.u32 %v5017, 16
        %v5268 = vrot.slane %v5266, 4
        %v5269 = vshll.u32 %v5017, 16
        %v5271 = vrot.slane %v5269, 5
        %v5272 = vor.u32 %v5268, %v5271
        %v5273 = vsel %vm1997, %v5264, %v5272
        %v5275 = vshrl.u32 %v4648, 16
        %v5277 = vrot.slane %v5275, 4
        %v5278 = vshll.u32 %v4648, 16
        %v5280 = vrot.slane %v5278, 5
        %v5281 = vor.u32 %v5277, %v5280
        %v5283 = vshrl.u32 %v5018, 16
        %v5285 = vrot.slane %v5283, 4
        %v5286 = vshll.u32 %v5018, 16
        %v5288 = vrot.slane %v5286, 5
        %v5289 = vor.u32 %v5285, %v5288
        %v5290 = vsel %vm1997, %v5281, %v5289
        %s5307 = scalar_lea.vmem [#allocation11], 512
        %v5308 = vld [vmem:[%s5307] sm:$0xf]
        %v5309 = vld [vmem:[%s5307 + $0x4] sm:$0xf]
        %v5310 = vld [vmem:[%s5307 + $0x8] sm:$0xf]
        %v5311 = vld [vmem:[%s5307 + $0xc] sm:$0xf]
        %v5312 = vld [vmem:[%s5307 + $0x10] sm:$0xf]
        %v5313 = vld [vmem:[%s5307 + $0x14] sm:$0xf]
        %v5314 = vld [vmem:[%s5307 + $0x18] sm:$0xf]
        %v5315 = vld [vmem:[%s5307 + $0x1c] sm:$0xf]
        %v5316 = vld [vmem:[%s5307 + $0x20] sm:$0xf]
        %v5317 = vld [vmem:[%s5307 + $0x24] sm:$0xf]
        %v5318 = vld [vmem:[%s5307 + $0x28] sm:$0xf]
        %v5319 = vld [vmem:[%s5307 + $0x2c] sm:$0xf]
        %v5320 = vld [vmem:[%s5307 + $0x30] sm:$0xf]
        %v5321 = vld [vmem:[%s5307 + $0x34] sm:$0xf]
        %v5322 = vld [vmem:[%s5307 + $0x38] sm:$0xf]
        %v5323 = vld [vmem:[%s5307 + $0x3c] sm:$0xf]
        %v5340 = vunpack.c.l.b16 %v5308
        %v5341 = vunpack.c.l.b16 %v5309
        %v5342 = vunpack.c.l.b16 %v5310
        %v5343 = vunpack.c.l.b16 %v5311
        %v5344 = vunpack.c.l.b16 %v5312
        %v5345 = vunpack.c.l.b16 %v5313
        %v5346 = vunpack.c.l.b16 %v5314
        %v5347 = vunpack.c.l.b16 %v5315
        %v5348 = vunpack.c.l.b16 %v5316
        %v5349 = vunpack.c.l.b16 %v5317
        %v5350 = vunpack.c.l.b16 %v5318
        %v5351 = vunpack.c.l.b16 %v5319
        %v5352 = vunpack.c.l.b16 %v5320
        %v5353 = vunpack.c.l.b16 %v5321
        %v5354 = vunpack.c.l.b16 %v5322
        %v5355 = vunpack.c.l.b16 %v5323
        %v5356 = vpack.c.b16 %v5341, %v5340
        %v5357 = vpack.c.b16 %v5343, %v5342
        %v5358 = vpack.c.b16 %v5345, %v5344
        %v5359 = vpack.c.b16 %v5347, %v5346
        %v5360 = vpack.c.b16 %v5349, %v5348
        %v5361 = vpack.c.b16 %v5351, %v5350
        %v5362 = vpack.c.b16 %v5353, %v5352
        %v5363 = vpack.c.b16 %v5355, %v5354
        %5372 = vmatprep.subr.bf16.mxu0 0
        %5373 = vmatpush1.bf16.msra.mxu0 %v5356
        %5374 = vmatprep.subr.bf16.mxu0 0
        %5375 = vmatpush1.bf16.msra.mxu0 %v5357
        %5376 = vmatprep.subr.bf16.mxu0 0
        %5377 = vmatpush1.bf16.msra.mxu0 %v5358
        %5378 = vmatprep.subr.bf16.mxu0 0
        %5379 = vmatpush1.bf16.msra.mxu0 %v5359
        %5380 = vmatprep.subr.bf16.mxu0 0
        %5381 = vmatpush1.bf16.msra.mxu0 %v5360
        %5382 = vmatprep.subr.bf16.mxu0 0
        %5383 = vmatpush1.bf16.msra.mxu0 %v5361
        %5384 = vmatprep.subr.bf16.mxu0 0
        %5385 = vmatpush1.bf16.msra.mxu0 %v5362
        %5386 = vmatprep.subr.bf16.mxu0 0
        %5387 = vmatpush1.bf16.msra.mxu0 %v5363
        %5388 = vmatprep.subr.bf16.mxu0 0
        %5389 = vmatpush1.bf16.msra.mxu0 0
        %5390 = vmatprep.subr.bf16.mxu0 0
        %5391 = vmatpush1.bf16.msra.mxu0 0
        %5392 = vmatprep.subr.bf16.mxu0 0
        %5393 = vmatpush1.bf16.msra.mxu0 0
        %5394 = vmatprep.subr.bf16.mxu0 0
        %5395 = vmatpush1.bf16.msra.mxu0 0
        %5396 = vmatprep.subr.bf16.mxu0 0
        %5397 = vmatpush1.bf16.msra.mxu0 0
        %5398 = vmatprep.subr.bf16.mxu0 0
        %5399 = vmatpush1.bf16.msra.mxu0 0
        %5400 = vmatprep.subr.bf16.mxu0 0
        %5401 = vmatpush1.bf16.msra.mxu0 0
        %5402 = vmatprep.subr.bf16.mxu0 0
        %5403 = vmatpush1.bf16.msra.mxu0 0
        %5404 = vmatprep.mubr.bf16.mxu0 0
        %5405 = vmatmul.mubr.bf16.gmra.mrb[0].mxu0 %v5035
        %v5406 = vpop.f32.mrb[0].mxu0
        %v5407 = vadd.f32 0.0, %v5406
        %v5408 = vpop.f32.mrb[0].mxu0
        %v5409 = vpop.f32.mrb[0].mxu0
        %v5410 = vadd.f32 0.0, %v5409
        %v5411 = vpop.f32.mrb[0].mxu0
        %5412 = vmatprep.mubr.bf16.mxu0 0
        %5413 = vmatmul.mubr.bf16.gmra.mrb[0].mxu0 %v5052
        %v5414 = vpop.f32.mrb[0].mxu0
        %v5415 = vadd.f32 0.0, %v5414
        %v5416 = vpop.f32.mrb[0].mxu0
        %v5417 = vpop.f32.mrb[0].mxu0
        %v5418 = vadd.f32 0.0, %v5417
        %v5419 = vpop.f32.mrb[0].mxu0
        %5420 = vmatprep.mubr.bf16.mxu0 0
        %5421 = vmatmul.mubr.bf16.gmra.mrb[0].mxu0 %v5069
        %v5422 = vpop.f32.mrb[0].mxu0
        %v5423 = vadd.f32 0.0, %v5422
        %v5424 = vpop.f32.mrb[0].mxu0
        %v5425 = vpop.f32.mrb[0].mxu0
        %v5426 = vadd.f32 0.0, %v5425
        %v5427 = vpop.f32.mrb[0].mxu0
        %5428 = vmatprep.mubr.bf16.mxu0 0
        %5429 = vmatmul.mubr.bf16.gmra.mrb[0].mxu0 %v5086
        %v5430 = vpop.f32.mrb[0].mxu0
        %v5431 = vadd.f32 0.0, %v5430
        %v5432 = vpop.f32.mrb[0].mxu0
        %v5433 = vpop.f32.mrb[0].mxu0
        %v5434 = vadd.f32 0.0, %v5433
        %v5435 = vpop.f32.mrb[0].mxu0
        %5436 = vmatprep.mubr.bf16.mxu0 0
        %5437 = vmatmul.mubr.bf16.gmra.mrb[0].mxu0 %v5103
        %v5438 = vpop.f32.mrb[0].mxu0
        %v5439 = vadd.f32 0.0, %v5438
        %v5440 = vpop.f32.mrb[0].mxu0
        %v5441 = vpop.f32.mrb[0].mxu0
        %v5442 = vadd.f32 0.0, %v5441
        %v5443 = vpop.f32.mrb[0].mxu0
        %5444 = vmatprep.mubr.bf16.mxu0 0
        %5445 = vmatmul.mubr.bf16.gmra.mrb[0].mxu0 %v5120
        %v5446 = vpop.f32.mrb[0].mxu0
        %v5447 = vadd.f32 0.0, %v5446
        %v5448 = vpop.f32.mrb[0].mxu0
        %v5449 = vpop.f32.mrb[0].mxu0
        %v5450 = vadd.f32 0.0, %v5449
        %v5451 = vpop.f32.mrb[0].mxu0
        %5452 = vmatprep.mubr.bf16.mxu0 0
        %5453 = vmatmul.mubr.bf16.gmra.mrb[0].mxu0 %v5137
        %v5454 = vpop.f32.mrb[0].mxu0
        %v5455 = vadd.f32 0.0, %v5454
        %v5456 = vpop.f32.mrb[0].mxu0
        %v5457 = vpop.f32.mrb[0].mxu0
        %v5458 = vadd.f32 0.0, %v5457
        %v5459 = vpop.f32.mrb[0].mxu0
        %5460 = vmatprep.mubr.bf16.mxu0 0
        %5461 = vmatmul.mubr.bf16.gmra.mrb[0].mxu0 %v5154
        %v5462 = vpop.f32.mrb[0].mxu0
        %v5463 = vadd.f32 0.0, %v5462
        %v5464 = vpop.f32.mrb[0].mxu0
        %v5465 = vpop.f32.mrb[0].mxu0
        %v5466 = vadd.f32 0.0, %v5465
        %v5467 = vpop.f32.mrb[0].mxu0
        %5468 = vmatprep.mubr.bf16.mxu0 0
        %5469 = vmatmul.mubr.bf16.gmra.mrb[0].mxu0 %v5171
        %v5470 = vpop.f32.mrb[0].mxu0
        %v5471 = vadd.f32 0.0, %v5470
        %v5472 = vpop.f32.mrb[0].mxu0
        %v5473 = vpop.f32.mrb[0].mxu0
        %v5474 = vadd.f32 0.0, %v5473
        %v5475 = vpop.f32.mrb[0].mxu0
        %5476 = vmatprep.mubr.bf16.mxu0 0
        %5477 = vmatmul.mubr.bf16.gmra.mrb[0].mxu0 %v5188
        %v5478 = vpop.f32.mrb[0].mxu0
        %v5479 = vadd.f32 0.0, %v5478
        %v5480 = vpop.f32.mrb[0].mxu0
        %v5481 = vpop.f32.mrb[0].mxu0
        %v5482 = vadd.f32 0.0, %v5481
        %v5483 = vpop.f32.mrb[0].mxu0
        %5484 = vmatprep.mubr.bf16.mxu0 0
        %5485 = vmatmul.mubr.bf16.gmra.mrb[0].mxu0 %v5205
        %v5486 = vpop.f32.mrb[0].mxu0
        %v5487 = vadd.f32 0.0, %v5486
        %v5488 = vpop.f32.mrb[0].mxu0
        %v5489 = vpop.f32.mrb[0].mxu0
        %v5490 = vadd.f32 0.0, %v5489
        %v5491 = vpop.f32.mrb[0].mxu0
        %5492 = vmatprep.mubr.bf16.mxu0 0
        %5493 = vmatmul.mubr.bf16.gmra.mrb[0].mxu0 %v5222
        %v5494 = vpop.f32.mrb[0].mxu0
        %v5495 = vadd.f32 0.0, %v5494
        %v5496 = vpop.f32.mrb[0].mxu0
        %v5497 = vpop.f32.mrb[0].mxu0
        %v5498 = vadd.f32 0.0, %v5497
        %v5499 = vpop.f32.mrb[0].mxu0
        %5500 = vmatprep.mubr.bf16.mxu0 0
        %5501 = vmatmul.mubr.bf16.gmra.mrb[0].mxu0 %v5239
        %v5502 = vpop.f32.mrb[0].mxu0
        %v5503 = vadd.f32 0.0, %v5502
        %v5504 = vpop.f32.mrb[0].mxu0
        %v5505 = vpop.f32.mrb[0].mxu0
        %v5506 = vadd.f32 0.0, %v5505
        %v5507 = vpop.f32.mrb[0].mxu0
        %5508 = vmatprep.mubr.bf16.mxu0 0
        %5509 = vmatmul.mubr.bf16.gmra.mrb[0].mxu0 %v5256
        %v5510 = vpop.f32.mrb[0].mxu0
        %v5511 = vadd.f32 0.0, %v5510
        %v5512 = vpop.f32.mrb[0].mxu0
        %v5513 = vpop.f32.mrb[0].mxu0
        %v5514 = vadd.f32 0.0, %v5513
        %v5515 = vpop.f32.mrb[0].mxu0
        %5516 = vmatprep.mubr.bf16.mxu0 0
        %5517 = vmatmul.mubr.bf16.gmra.mrb[0].mxu0 %v5273
        %v5518 = vpop.f32.mrb[0].mxu0
        %v5519 = vadd.f32 0.0, %v5518
        %v5520 = vpop.f32.mrb[0].mxu0
        %v5521 = vpop.f32.mrb[0].mxu0
        %v5522 = vadd.f32 0.0, %v5521
        %v5523 = vpop.f32.mrb[0].mxu0
        %5524 = vmatprep.mubr.bf16.mxu0 0
        %5525 = vmatmul.mubr.bf16.gmra.mrb[0].mxu0 %v5290
        %v5526 = vpop.f32.mrb[0].mxu0
        %v5527 = vadd.f32 0.0, %v5526
        %v5528 = vpop.f32.mrb[0].mxu0
        %v5529 = vpop.f32.mrb[0].mxu0
        %v5530 = vadd.f32 0.0, %v5529
        %v5531 = vpop.f32.mrb[0].mxu0
        %5532 = vdwg.mxu0
        %v5533 = vadd.f32 %v4971, %v5407
        %v5534 = vadd.f32 %v4972, %v5410
        %v5535 = vadd.f32 %v4973, %v5415
        %v5536 = vadd.f32 %v4974, %v5418
        %v5537 = vadd.f32 %v4975, %v5423
        %v5538 = vadd.f32 %v4976, %v5426
        %v5539 = vadd.f32 %v4977, %v5431
        %v5540 = vadd.f32 %v4978, %v5434
        %v5541 = vadd.f32 %v4979, %v5439
        %v5542 = vadd.f32 %v4980, %v5442
        %v5543 = vadd.f32 %v4981, %v5447
        %v5544 = vadd.f32 %v4982, %v5450
        %v5545 = vadd.f32 %v4983, %v5455
        %v5546 = vadd.f32 %v4984, %v5458
        %v5547 = vadd.f32 %v4985, %v5463
        %v5548 = vadd.f32 %v4986, %v5466
        %v5549 = vadd.f32 %v4987, %v5471
        %v5550 = vadd.f32 %v4988, %v5474
        %v5551 = vadd.f32 %v4989, %v5479
        %v5552 = vadd.f32 %v4990, %v5482
        %v5553 = vadd.f32 %v4991, %v5487
        %v5554 = vadd.f32 %v4992, %v5490
        %v5555 = vadd.f32 %v4993, %v5495
        %v5556 = vadd.f32 %v4994, %v5498
        %v5557 = vadd.f32 %v4995, %v5503
        %v5558 = vadd.f32 %v4996, %v5506
        %v5559 = vadd.f32 %v4997, %v5511
        %v5560 = vadd.f32 %v4998, %v5514
        %v5561 = vadd.f32 %v4999, %v5519
        %v5562 = vadd.f32 %v5000, %v5522
        %v5563 = vadd.f32 %v5001, %v5527
        %v5564 = vadd.f32 %v5002, %v5530
        %v5565 = vpack.c.bf16 %v5534, %v5533
        %v5566 = vpack.c.bf16 %v5536, %v5535
        %v5567 = vpack.c.bf16 %v5538, %v5537
        %v5568 = vpack.c.bf16 %v5540, %v5539
        %v5569 = vpack.c.bf16 %v5542, %v5541
        %v5570 = vpack.c.bf16 %v5544, %v5543
        %v5571 = vpack.c.bf16 %v5546, %v5545
        %v5572 = vpack.c.bf16 %v5548, %v5547
        %v5573 = vpack.c.bf16 %v5550, %v5549
        %v5574 = vpack.c.bf16 %v5552, %v5551
        %v5575 = vpack.c.bf16 %v5554, %v5553
        %v5576 = vpack.c.bf16 %v5556, %v5555
        %v5577 = vpack.c.bf16 %v5558, %v5557
        %v5578 = vpack.c.bf16 %v5560, %v5559
        %v5579 = vpack.c.bf16 %v5562, %v5561
        %v5580 = vpack.c.bf16 %v5564, %v5563
        %v5581 = vld [vmem:[#allocation12] sm:$0xf]
        %v5582 = vld [vmem:[#allocation12 + $0x4] sm:$0xf]
        %v5583 = vld [vmem:[#allocation12 + $0x8] sm:$0xf]
        %v5584 = vld [vmem:[#allocation12 + $0xc] sm:$0xf]
        %v5585 = vld [vmem:[#allocation12 + $0x10] sm:$0xf]
        %v5586 = vld [vmem:[#allocation12 + $0x14] sm:$0xf]
        %v5587 = vld [vmem:[#allocation12 + $0x18] sm:$0xf]
        %v5588 = vld [vmem:[#allocation12 + $0x1c] sm:$0xf]
        %v5589 = vld [vmem:[#allocation12 + $0x20] sm:$0xf]
        %v5590 = vld [vmem:[#allocation12 + $0x24] sm:$0xf]
        %v5591 = vld [vmem:[#allocation12 + $0x28] sm:$0xf]
        %v5592 = vld [vmem:[#allocation12 + $0x2c] sm:$0xf]
        %v5593 = vld [vmem:[#allocation12 + $0x30] sm:$0xf]
        %v5594 = vld [vmem:[#allocation12 + $0x34] sm:$0xf]
        %v5595 = vld [vmem:[#allocation12 + $0x38] sm:$0xf]
        %v5596 = vld [vmem:[#allocation12 + $0x3c] sm:$0xf]
        %v5597 = vld [vmem:[%s7] sm:$0x1]
        %v5599 = vlaneseq
        %v5600 = vshrl.u32 %v5599, 7
        %v5601 = vsub.s32 0, %v5600
        %v5602 = vrot.slane %v5597, %v5601
        %v5620 = vunpack.c.l.b16 %v5581
        %v5621 = vunpack.c.l.b16 %v5582
        %v5622 = vunpack.c.l.b16 %v5583
        %v5623 = vunpack.c.l.b16 %v5584
        %v5624 = vunpack.c.l.b16 %v5585
        %v5625 = vunpack.c.l.b16 %v5586
        %v5626 = vunpack.c.l.b16 %v5587
        %v5627 = vunpack.c.l.b16 %v5588
        %v5628 = vunpack.c.l.b16 %v5589
        %v5629 = vunpack.c.l.b16 %v5590
        %v5630 = vunpack.c.l.b16 %v5591
        %v5631 = vunpack.c.l.b16 %v5592
        %v5632 = vunpack.c.l.b16 %v5593
        %v5633 = vunpack.c.l.b16 %v5594
        %v5634 = vunpack.c.l.b16 %v5595
        %v5635 = vunpack.c.l.b16 %v5596
        %v5636 = vpack.c.b16 %v5621, %v5620
        %v5637 = vpack.c.b16 %v5623, %v5622
        %v5638 = vpack.c.b16 %v5625, %v5624
        %v5639 = vpack.c.b16 %v5627, %v5626
        %v5640 = vpack.c.b16 %v5629, %v5628
        %v5641 = vpack.c.b16 %v5631, %v5630
        %v5642 = vpack.c.b16 %v5633, %v5632
        %v5643 = vpack.c.b16 %v5635, %v5634
        %5652 = vmatprep.subr.bf16.mxu0 0
        %5653 = vmatpush1.bf16.msra.mxu0 %v5636
        %5654 = vmatprep.subr.bf16.mxu0 0
        %5655 = vmatpush1.bf16.msra.mxu0 %v5637
        %5656 = vmatprep.subr.bf16.mxu0 0
        %5657 = vmatpush1.bf16.msra.mxu0 %v5638
        %5658 = vmatprep.subr.bf16.mxu0 0
        %5659 = vmatpush1.bf16.msra.mxu0 %v5639
        %5660 = vmatprep.subr.bf16.mxu0 0
        %5661 = vmatpush1.bf16.msra.mxu0 %v5640
        %5662 = vmatprep.subr.bf16.mxu0 0
        %5663 = vmatpush1.bf16.msra.mxu0 %v5641
        %5664 = vmatprep.subr.bf16.mxu0 0
        %5665 = vmatpush1.bf16.msra.mxu0 %v5642
        %5666 = vmatprep.subr.bf16.mxu0 0
        %5667 = vmatpush1.bf16.msra.mxu0 %v5643
        %5668 = vmatprep.subr.bf16.mxu0 0
        %5669 = vmatpush1.bf16.msra.mxu0 0
        %5670 = vmatprep.subr.bf16.mxu0 0
        %5671 = vmatpush1.bf16.msra.mxu0 0
        %5672 = vmatprep.subr.bf16.mxu0 0
        %5673 = vmatpush1.bf16.msra.mxu0 0
        %5674 = vmatprep.subr.bf16.mxu0 0
        %5675 = vmatpush1.bf16.msra.mxu0 0
        %5676 = vmatprep.subr.bf16.mxu0 0
        %5677 = vmatpush1.bf16.msra.mxu0 0
        %5678 = vmatprep.subr.bf16.mxu0 0
        %5679 = vmatpush1.bf16.msra.mxu0 0
        %5680 = vmatprep.subr.bf16.mxu0 0
        %5681 = vmatpush1.bf16.msra.mxu0 0
        %5682 = vmatprep.subr.bf16.mxu0 0
        %5683 = vmatpush1.bf16.msra.mxu0 0
        %5684 = vmatprep.mubr.bf16.mxu0 0
        %5685 = vmatmul.mubr.bf16.gmra.mrb[0].mxu0 %v5565
        %v5686 = vpop.f32.mrb[0].mxu0
        %v5687 = vadd.f32 %v5602, %v5686
        %v5688 = vpop.f32.mrb[0].mxu0
        %v5689 = vpop.f32.mrb[0].mxu0
        %v5690 = vadd.f32 %v5602, %v5689
        %v5691 = vpop.f32.mrb[0].mxu0
        %5692 = vmatprep.mubr.bf16.mxu0 0
        %5693 = vmatmul.mubr.bf16.gmra.mrb[0].mxu0 %v5566
        %v5694 = vpop.f32.mrb[0].mxu0
        %v5695 = vadd.f32 %v5602, %v5694
        %v5696 = vpop.f32.mrb[0].mxu0
        %v5697 = vpop.f32.mrb[0].mxu0
        %v5698 = vadd.f32 %v5602, %v5697
        %v5699 = vpop.f32.mrb[0].mxu0
        %5700 = vmatprep.mubr.bf16.mxu0 0
        %5701 = vmatmul.mubr.bf16.gmra.mrb[0].mxu0 %v5567
        %v5702 = vpop.f32.mrb[0].mxu0
        %v5703 = vadd.f32 %v5602, %v5702
        %v5704 = vpop.f32.mrb[0].mxu0
        %v5705 = vpop.f32.mrb[0].mxu0
        %v5706 = vadd.f32 %v5602, %v5705
        %v5707 = vpop.f32.mrb[0].mxu0
        %5708 = vmatprep.mubr.bf16.mxu0 0
        %5709 = vmatmul.mubr.bf16.gmra.mrb[0].mxu0 %v5568
        %v5710 = vpop.f32.mrb[0].mxu0
        %v5711 = vadd.f32 %v5602, %v5710
        %v5712 = vpop.f32.mrb[0].mxu0
        %v5713 = vpop.f32.mrb[0].mxu0
        %v5714 = vadd.f32 %v5602, %v5713
        %v5715 = vpop.f32.mrb[0].mxu0
        %5716 = vmatprep.mubr.bf16.mxu0 0
        %5717 = vmatmul.mubr.bf16.gmra.mrb[0].mxu0 %v5569
        %v5718 = vpop.f32.mrb[0].mxu0
        %v5719 = vadd.f32 %v5602, %v5718
        %v5720 = vpop.f32.mrb[0].mxu0
        %v5721 = vpop.f32.mrb[0].mxu0
        %v5722 = vadd.f32 %v5602, %v5721
        %v5723 = vpop.f32.mrb[0].mxu0
        %5724 = vmatprep.mubr.bf16.mxu0 0
        %5725 = vmatmul.mubr.bf16.gmra.mrb[0].mxu0 %v5570
        %v5726 = vpop.f32.mrb[0].mxu0
        %v5727 = vadd.f32 %v5602, %v5726
        %v5728 = vpop.f32.mrb[0].mxu0
        %v5729 = vpop.f32.mrb[0].mxu0
        %v5730 = vadd.f32 %v5602, %v5729
        %v5731 = vpop.f32.mrb[0].mxu0
        %5732 = vmatprep.mubr.bf16.mxu0 0
        %5733 = vmatmul.mubr.bf16.gmra.mrb[0].mxu0 %v5571
        %v5734 = vpop.f32.mrb[0].mxu0
        %v5735 = vadd.f32 %v5602, %v5734
        %v5736 = vpop.f32.mrb[0].mxu0
        %v5737 = vpop.f32.mrb[0].mxu0
        %v5738 = vadd.f32 %v5602, %v5737
        %v5739 = vpop.f32.mrb[0].mxu0
        %5740 = vmatprep.mubr.bf16.mxu0 0
        %5741 = vmatmul.mubr.bf16.gmra.mrb[0].mxu0 %v5572
        %v5742 = vpop.f32.mrb[0].mxu0
        %v5743 = vadd.f32 %v5602, %v5742
        %v5744 = vpop.f32.mrb[0].mxu0
        %v5745 = vpop.f32.mrb[0].mxu0
        %v5746 = vadd.f32 %v5602, %v5745
        %v5747 = vpop.f32.mrb[0].mxu0
        %5748 = vmatprep.mubr.bf16.mxu0 0
        %5749 = vmatmul.mubr.bf16.gmra.mrb[0].mxu0 %v5573
        %v5750 = vpop.f32.mrb[0].mxu0
        %v5751 = vadd.f32 %v5602, %v5750
        %v5752 = vpop.f32.mrb[0].mxu0
        %v5753 = vpop.f32.mrb[0].mxu0
        %v5754 = vadd.f32 %v5602, %v5753
        %v5755 = vpop.f32.mrb[0].mxu0
        %5756 = vmatprep.mubr.bf16.mxu0 0
        %5757 = vmatmul.mubr.bf16.gmra.mrb[0].mxu0 %v5574
        %v5758 = vpop.f32.mrb[0].mxu0
        %v5759 = vadd.f32 %v5602, %v5758
        %v5760 = vpop.f32.mrb[0].mxu0
        %v5761 = vpop.f32.mrb[0].mxu0
        %v5762 = vadd.f32 %v5602, %v5761
        %v5763 = vpop.f32.mrb[0].mxu0
        %5764 = vmatprep.mubr.bf16.mxu0 0
        %5765 = vmatmul.mubr.bf16.gmra.mrb[0].mxu0 %v5575
        %v5766 = vpop.f32.mrb[0].mxu0
        %v5767 = vadd.f32 %v5602, %v5766
        %v5768 = vpop.f32.mrb[0].mxu0
        %v5769 = vpop.f32.mrb[0].mxu0
        %v5770 = vadd.f32 %v5602, %v5769
        %v5771 = vpop.f32.mrb[0].mxu0
        %5772 = vmatprep.mubr.bf16.mxu0 0
        %5773 = vmatmul.mubr.bf16.gmra.mrb[0].mxu0 %v5576
        %v5774 = vpop.f32.mrb[0].mxu0
        %v5775 = vadd.f32 %v5602, %v5774
        %v5776 = vpop.f32.mrb[0].mxu0
        %v5777 = vpop.f32.mrb[0].mxu0
        %v5778 = vadd.f32 %v5602, %v5777
        %v5779 = vpop.f32.mrb[0].mxu0
        %5780 = vmatprep.mubr.bf16.mxu0 0
        %5781 = vmatmul.mubr.bf16.gmra.mrb[0].mxu0 %v5577
        %v5782 = vpop.f32.mrb[0].mxu0
        %v5783 = vadd.f32 %v5602, %v5782
        %v5784 = vpop.f32.mrb[0].mxu0
        %v5785 = vpop.f32.mrb[0].mxu0
        %v5786 = vadd.f32 %v5602, %v5785
        %v5787 = vpop.f32.mrb[0].mxu0
        %5788 = vmatprep.mubr.bf16.mxu0 0
        %5789 = vmatmul.mubr.bf16.gmra.mrb[0].mxu0 %v5578
        %v5790 = vpop.f32.mrb[0].mxu0
        %v5791 = vadd.f32 %v5602, %v5790
        %v5792 = vpop.f32.mrb[0].mxu0
        %v5793 = vpop.f32.mrb[0].mxu0
        %v5794 = vadd.f32 %v5602, %v5793
        %v5795 = vpop.f32.mrb[0].mxu0
        %5796 = vmatprep.mubr.bf16.mxu0 0
        %5797 = vmatmul.mubr.bf16.gmra.mrb[0].mxu0 %v5579
        %v5798 = vpop.f32.mrb[0].mxu0
        %v5799 = vadd.f32 %v5602, %v5798
        %v5800 = vpop.f32.mrb[0].mxu0
        %v5801 = vpop.f32.mrb[0].mxu0
        %v5802 = vadd.f32 %v5602, %v5801
        %v5803 = vpop.f32.mrb[0].mxu0
        %5804 = vmatprep.mubr.bf16.mxu0 0
        %5805 = vmatmul.mubr.bf16.gmra.mrb[0].mxu0 %v5580
        %v5806 = vpop.f32.mrb[0].mxu0
        %v5807 = vadd.f32 %v5602, %v5806
        %v5808 = vpop.f32.mrb[0].mxu0
        %v5809 = vpop.f32.mrb[0].mxu0
        %v5810 = vadd.f32 %v5602, %v5809
        %v5811 = vpop.f32.mrb[0].mxu0
        %5812 = vdwg.mxu0
        %v5813 = vunpack.c.l.bf16 %v651
        %v5814 = vunpack.c.l.bf16 %v652
        %v5815 = vunpack.c.l.bf16 %v653
        %v5816 = vunpack.c.l.bf16 %v654
        %v5817 = vunpack.c.l.bf16 %v655
        %v5818 = vunpack.c.l.bf16 %v656
        %v5819 = vunpack.c.l.bf16 %v657
        %v5820 = vunpack.c.l.bf16 %v658
        %v5821 = vunpack.c.l.bf16 %v659
        %v5822 = vunpack.c.l.bf16 %v660
        %v5823 = vunpack.c.l.bf16 %v661
        %v5824 = vunpack.c.l.bf16 %v662
        %v5825 = vunpack.c.l.bf16 %v663
        %v5826 = vunpack.c.l.bf16 %v664
        %v5827 = vunpack.c.l.bf16 %v665
        %v5828 = vunpack.c.l.bf16 %v666
        %v5829 = vunpack.c.l.bf16 %v667
        %v5830 = vunpack.c.l.bf16 %v668
        %v5831 = vunpack.c.l.bf16 %v669
        %v5832 = vunpack.c.l.bf16 %v670
        %v5833 = vunpack.c.l.bf16 %v671
        %v5834 = vunpack.c.l.bf16 %v672
        %v5835 = vunpack.c.l.bf16 %v673
        %v5836 = vunpack.c.l.bf16 %v674
        %v5837 = vunpack.c.l.bf16 %v675
        %v5838 = vunpack.c.l.bf16 %v676
        %v5839 = vunpack.c.l.bf16 %v677
        %v5840 = vunpack.c.l.bf16 %v678
        %v5841 = vunpack.c.l.bf16 %v679
        %v5842 = vunpack.c.l.bf16 %v680
        %v5843 = vunpack.c.l.bf16 %v681
        %v5844 = vunpack.c.l.bf16 %v682
        %v5845 = vadd.f32 %v5813, %v5687
        %v5846 = vadd.f32 %v5814, %v5690
        %v5847 = vadd.f32 %v5815, %v5695
        %v5848 = vadd.f32 %v5816, %v5698
        %v5849 = vadd.f32 %v5817, %v5703
        %v5850 = vadd.f32 %v5818, %v5706
        %v5851 = vadd.f32 %v5819, %v5711
        %v5852 = vadd.f32 %v5820, %v5714
        %v5853 = vadd.f32 %v5821, %v5719
        %v5854 = vadd.f32 %v5822, %v5722
        %v5855 = vadd.f32 %v5823, %v5727
        %v5856 = vadd.f32 %v5824, %v5730
        %v5857 = vadd.f32 %v5825, %v5735
        %v5858 = vadd.f32 %v5826, %v5738
        %v5859 = vadd.f32 %v5827, %v5743
        %v5860 = vadd.f32 %v5828, %v5746
        %v5861 = vadd.f32 %v5829, %v5751
        %v5862 = vadd.f32 %v5830, %v5754
        %v5863 = vadd.f32 %v5831, %v5759
        %v5864 = vadd.f32 %v5832, %v5762
        %v5865 = vadd.f32 %v5833, %v5767
        %v5866 = vadd.f32 %v5834, %v5770
        %v5867 = vadd.f32 %v5835, %v5775
        %v5868 = vadd.f32 %v5836, %v5778
        %v5869 = vadd.f32 %v5837, %v5783
        %v5870 = vadd.f32 %v5838, %v5786
        %v5871 = vadd.f32 %v5839, %v5791
        %v5872 = vadd.f32 %v5840, %v5794
        %v5873 = vadd.f32 %v5841, %v5799
        %v5874 = vadd.f32 %v5842, %v5802
        %v5875 = vadd.f32 %v5843, %v5807
        %v5876 = vadd.f32 %v5844, %v5810
        %5877 = vst [vmem:[%s471] sm:$0xff] %v5845
        %5878 = vst [vmem:[%s471 + $0x8] sm:$0xff] %v5846
        %5879 = vst [vmem:[%s471 + $0x10] sm:$0xff] %v5847
        %5880 = vst [vmem:[%s471 + $0x18] sm:$0xff] %v5848
        %5881 = vst [vmem:[%s471 + $0x20] sm:$0xff] %v5849
        %5882 = vst [vmem:[%s471 + $0x28] sm:$0xff] %v5850
        %5883 = vst [vmem:[%s471 + $0x30] sm:$0xff] %v5851
        %5884 = vst [vmem:[%s471 + $0x38] sm:$0xff] %v5852
        %5885 = vst [vmem:[%s471 + $0x40] sm:$0xff] %v5853
        %5886 = vst [vmem:[%s471 + $0x48] sm:$0xff] %v5854
        %5887 = vst [vmem:[%s471 + $0x50] sm:$0xff] %v5855
        %5888 = vst [vmem:[%s471 + $0x58] sm:$0xff] %v5856
        %5889 = vst [vmem:[%s471 + $0x60] sm:$0xff] %v5857
        %5890 = vst [vmem:[%s471 + $0x68] sm:$0xff] %v5858
        %5891 = vst [vmem:[%s471 + $0x70] sm:$0xff] %v5859
        %5892 = vst [vmem:[%s471 + $0x78] sm:$0xff] %v5860
        %5893 = vst [vmem:[%s471 + $0x80] sm:$0xff] %v5861
        %5894 = vst [vmem:[%s471 + $0x88] sm:$0xff] %v5862
        %5895 = vst [vmem:[%s471 + $0x90] sm:$0xff] %v5863
        %5896 = vst [vmem:[%s471 + $0x98] sm:$0xff] %v5864
        %5897 = vst [vmem:[%s471 + $0xa0] sm:$0xff] %v5865
        %5898 = vst [vmem:[%s471 + $0xa8] sm:$0xff] %v5866
        %5899 = vst [vmem:[%s471 + $0xb0] sm:$0xff] %v5867
        %5900 = vst [vmem:[%s471 + $0xb8] sm:$0xff] %v5868
        %5901 = vst [vmem:[%s471 + $0xc0] sm:$0xff] %v5869
        %5902 = vst [vmem:[%s471 + $0xc8] sm:$0xff] %v5870
        %5903 = vst [vmem:[%s471 + $0xd0] sm:$0xff] %v5871
        %5904 = vst [vmem:[%s471 + $0xd8] sm:$0xff] %v5872
        %5905 = vst [vmem:[%s471 + $0xe0] sm:$0xff] %v5873
        %5906 = vst [vmem:[%s471 + $0xe8] sm:$0xff] %v5874
        %5907 = vst [vmem:[%s471 + $0xf0] sm:$0xff] %v5875
        %5908 = vst [vmem:[%s471 + $0xf8] sm:$0xff] %v5876
        %s5909 = sand.u32 %s241, 1
        %s5910 = scalar_lea.sflag [#allocation5], %s5909
        %s5911 = sand.u32 %s241, 1
        %s5912 = smul.addr %s5911, 256
        %s5913 = scalar_lea.vmem [#allocation14], %s5912
        // Predicated region
        $region81: #{tpu_custom_call.1} parent=51 // pred_check
          %p5914 = pneg %p251
        $region82: #{tpu_custom_call.1} parent=51 // pred_check_branch
          %5916 = sbr.rel (%p5914) target = $region84
        $region83: #{tpu_custom_call.1} parent=51 // pred_region
          %s5917 = smul.u32 16, %s35
          %s5919 = ssub.s32 4096, 4096
          %5920 = vsyncadd %s5910, %s5919
          %s5921 = smul.addr %s5917, 2
          %s5922 = smul.addr %s34, 32
          %s5923 = sadd.s32 %s5921, %s5922
          %s5924 = smul.addr %s5923, 128
          %s5925 = scalar_lea.hbm %s8, %s5924
          %s5926 = sshll.u32 %s5913, 4
          %s5927 = int_to_ptr.vmem [resolvable:$true] %s5926
          %5932 = dma.vmem_to_hbm [thread:$0]  %s5927, 4096, %s5925, %s5910, 128, 128, 8
        $region84: #{tpu_custom_call.1} parent=51 // pred_fallthru
          _
      $region52: #{tpu_custom_call.1} parent=5 // pred_fallthru
        _
      %p5933 = scmp.le.s32.totalorder 2, %s25
      // Predicated region
      $region85: #{tpu_custom_call.1} parent=5 // pred_check
        %p5934 = pneg %p5933
      $region86: #{tpu_custom_call.1} parent=5 // pred_check_branch
        %5936 = sbr.rel (%p5934) target = $region88
      $region87: #{tpu_custom_call.1} parent=5 // pred_region
        %s5937 = ssub.s32 %s25, 2
        // Predicated region
        $region89: #{tpu_custom_call.1} parent=87 // pred_check
          %p5938 = pneg %p257
        $region90: #{tpu_custom_call.1} parent=87 // pred_check_branch
          %5940 = sbr.rel (%p5938) target = $region92
        $region91: #{tpu_custom_call.1} parent=87 // pred_region
          %s5941 = sand.u32 %s242, 1
          %s5942 = scalar_lea.sflag [#allocation5], %s5941
          %s5943 = sand.u32 %s242, 1
          %s5944 = smul.addr %s5943, 256
          %s5945 = scalar_lea.vmem [#allocation14], %s5944
          %5946 = dma.done %s5942, 4096
        $region92: #{tpu_custom_call.1} parent=87 // pred_fallthru
          _
      $region88: #{tpu_custom_call.1} parent=5 // pred_fallthru
        _
    $region6: #{tpu_custom_call.1} parent=1 // loop_footer
      %s29 = sadd.s32 1, %s25
    $region7: #{tpu_custom_call.1} parent=1 // loop_footer_branch
      %24 = sbr.rel target = $region3
    $region8: #{tpu_custom_call.1} parent=1 // loop_exit
      _
    %5947 = vsyncpa [#allocation4], 1
    %s5948 = scalar_lea.sflag [#allocation4], 1
    %5949 = vsyncpa %s5948, 1
    %5950 = vsyncpa [#allocation7], 1
    %s5951 = scalar_lea.sflag [#allocation7], 1
    %5952 = vsyncpa %s5951, 1
    %5953 = vsyncpa [#allocation10], 1
    %5954 = vsyncpa [#allocation13], 1
    %5955 = vsyncpa [#allocation5], 1
    %s5956 = scalar_lea.sflag [#allocation5], 1
    %5957 = vsyncpa %s5956, 1

</llo_original>
